<compile_context>
chip_gen: v7x
topology: tpu7x:2x2x1
jax: 0.10.0
libtpu: 0.0.40
codegen_flags: <defaults>
</compile_context>

<pallas_src>
import functools

import jax
import jax.numpy as jnp
import numpy as np
from jax.experimental import pallas as pl
from jax.experimental.pallas import tpu as pltpu

K0 = 5      # conv0 temporal kernel length
F0 = 32     # conv0 out channels
F1 = 64     # conv1 out channels
NCLS = 4    # dense_n_neurons
BN_EPS = 1e-5


def _elu(v):
    # ELU(alpha=1). exp(v)-1 instead of expm1 (guaranteed Mosaic lowering);
    # the positive branch of exp is discarded by the select, so no clamp needed.
    return jnp.where(v > 0.0, v, jnp.exp(v) - 1.0)


def resnet_kernel(x_ref, w0e_ref, a0_ref, c0_ref, w1f_ref, a1_ref, c1_ref,
                  wd3_ref, bd_ref, o_ref, *, T, C, Bb):
    """One batch-block (Bb samples) per grid step; rows are time-major (t*Bb + b)."""
    T0 = T - (K0 - 1)   # after conv0 (valid)
    T1 = T0 // 2        # after pool0
    T2 = T1 // 2        # after pool1
    CF0 = C * F0
    R0 = Bb * T0

    x = x_ref[...]                                        # (T, Bb, C)

    # ---- conv0: K0 accumulated MXU matmuls with block-diagonal weights ----
    # h0[t*Bb+b, c*F0+f] = sum_k x[t+k, b, c] * w0[k, f]
    h0 = jnp.dot(x[0:T0].reshape(R0, C), w0e_ref[0],
                 preferred_element_type=jnp.float32)      # (Bb*T0, C*F0)
    for k in range(1, K0):
        xk = x[k:k + T0].reshape(R0, C)                   # (Bb*T0, C)
        h0 = h0 + jnp.dot(xk, w0e_ref[k],
                          preferred_element_type=jnp.float32)
    # BatchNorm (inference affine, conv bias folded into shift) + ELU
    h0 = _elu(h0 * a0_ref[...] + c0_ref[...])
    # maxpool (2,1) over time: paired time rows are exactly Bb rows apart.
    p0 = jnp.max(h0.reshape(T1, 2, Bb, CF0), axis=1).reshape(T1 * Bb, CF0)
    # TODO(synk): dropout is identity here (inference); training-mode mask not implemented.

    # ---- conv1: (1,C) kernel, 32 -> 64 == ONE (rows,256)x(256,64) matmul ----
    h1 = jnp.dot(p0, w1f_ref[...], preferred_element_type=jnp.float32)
    h1 = _elu(h1 * a1_ref[...] + c1_ref[...])
    p1 = jnp.max(h1.reshape(T2, 2, Bb, F1), axis=1)       # (T2, Bb, F1)

    # ---- flatten + dense(T2*F1 -> 4): batched matmul over T2, then sum ----
    part = jax.lax.dot_general(
        p1, wd3_ref[...],
        dimension_numbers=(((2,), (1,)), ((0,), (0,))),
        preferred_element_type=jnp.float32)               # (T2, Bb, NCLS)
    logits = jnp.sum(part, axis=0) + bd_ref[...]          # (Bb, NCLS)

    # log_softmax
    m = jnp.max(logits, axis=-1, keepdims=True)
    z = logits - m
    lse = jnp.log(jnp.sum(jnp.exp(z), axis=-1, keepdims=True))
    o_ref[...] = z - lse                                  # (Bb, NCLS)


def _fold_params(params, C):
    """Wrapper-side folding: expanded conv0 weight, fused BN affines, flat weights."""
    w0 = params["w0"].astype(jnp.float32)                 # (K0, F0)
    b0 = params["b0"].reshape(F0)
    s0 = params["scale0"].reshape(F0)
    sh0 = params["shift0"].reshape(F0)
    w1 = params["w1"].astype(jnp.float32)                 # (C, F0, F1)
    b1 = params["b1"].reshape(F1)
    s1 = params["scale1"].reshape(F1)
    sh1 = params["shift1"].reshape(F1)

    eye = jnp.eye(C, dtype=jnp.float32)
    # w0e[k, c, d*F0 + f] = w0[k, f] if c == d else 0   (block-diagonal expansion)
    w0e = jnp.einsum("cd,kf->kcdf", eye, w0).reshape(K0, C, C * F0)
    a0 = jnp.tile(s0, C).reshape(1, C * F0)               # BN scale, c-major lanes
    c0 = jnp.tile(sh0 + b0 * s0, C).reshape(1, C * F0)    # BN shift + folded conv bias
    w1f = w1.reshape(C * F0, F1)                          # matches c-major lane order
    a1 = s1.reshape(1, F1)
    c1 = (sh1 + b1 * s1).reshape(1, F1)
    wd3 = params["wd"].astype(jnp.float32)                # (T2, F1, NCLS)
    bd = params["bd"].reshape(1, NCLS)
    return [w0e, a0, c0, w1f, a1, c1, wd3, bd]


def resnet_forward(x, params):
    """x: (B, T, C, 1) float32 -> (B, 4) log-probabilities."""
    B, T, C, fin = x.shape
    assert fin == 1
    T0 = T - (K0 - 1)
    assert T0 % 2 == 0 and (T0 // 2) % 2 == 0, "choose T so both maxpools are even"

    # Batch-block size: multiple of 8 (sublane aligned), grown up to 64 while
    # keeping >= 2 grid blocks so both v7x TensorCores get work.
    Bb = 8
    while Bb * 2 <= 64 and B >= Bb * 4:
        Bb *= 2
    nb = -(-B // Bb)
    B_pad = nb * Bb

    x3 = x[..., 0].astype(jnp.float32)                    # (B, T, C)
    if B_pad != B:
        x3 = jnp.concatenate(
            [x3, jnp.zeros((B_pad - B, T, C), jnp.float32)], axis=0)
    x_tm = jnp.transpose(x3, (1, 0, 2))                   # (T, B_pad, C) time-major

    weights = _fold_params(params, C)
    kernel = functools.partial(resnet_kernel, T=T, C=C, Bb=Bb)

    def const_spec(a):
        return pl.BlockSpec(a.shape, lambda i, _n=a.ndim: (0,) * _n)

    out = pl.pallas_call(
        kernel,
        out_shape=jax.ShapeDtypeStruct((B_pad, NCLS), jnp.float32),
        grid_spec=pltpu.PrefetchScalarGridSpec(
            num_scalar_prefetch=0,
            grid=(nb,),
            in_specs=[pl.BlockSpec((T, Bb, C), lambda i: (0, i, 0))]
                     + [const_spec(a) for a in weights],
            out_specs=pl.BlockSpec((Bb, NCLS), lambda i: (i, 0)),
        ),
        compiler_params=pltpu.CompilerParams(
            dimension_semantics=("parallel",)),
    )(x_tm, *weights)
    return out[:B]


def make_params(key, T, C):
    """Deterministic synthetic parameters matching the module's shapes."""
    T0 = T - (K0 - 1)
    T1 = T0 // 2
    T2 = T1 // 2
    ks = jax.random.split(key, 16)

    def rnd(k, shape, scale=0.1):
        return (scale * jax.random.normal(k, shape)).astype(jnp.float32)

    def bn_affine(kg, kb, km, kv, n):
        gamma = 1.0 + rnd(kg, (1, n))
        beta = rnd(kb, (1, n))
        mean = rnd(km, (1, n))
        var = 1.0 + 0.1 * jax.random.uniform(kv, (1, n), dtype=jnp.float32)
        scale = gamma / jnp.sqrt(var + BN_EPS)
        shift = beta - mean * scale
        return scale.astype(jnp.float32), shift.astype(jnp.float32)

    p = {}
    p["w0"] = rnd(ks[0], (K0, F0))                 # conv0 weight (5x1, 1->32)
    p["b0"] = rnd(ks[1], (1, F0))
    p["scale0"], p["shift0"] = bn_affine(ks[2], ks[3], ks[4], ks[5], F0)
    p["w1"] = rnd(ks[6], (C, F0, F1))              # conv1 weight (1xC, 32->64)
    p["b1"] = rnd(ks[7], (1, F1))
    p["scale1"], p["shift1"] = bn_affine(ks[8], ks[9], ks[10], ks[11], F1)
    p["wd"] = rnd(ks[12], (T2, F1, NCLS), scale=0.05)   # dense (T2*64 -> 4)
    p["bd"] = rnd(ks[13], (1, NCLS))
    return p


def reference_forward(x, p):
    """Pure-JAX reference mirroring the PyTorch forward (inference)."""
    B, T, C, _ = x.shape
    T0 = T - (K0 - 1)
    T1 = T0 // 2
    T2 = T1 // 2
    x3 = x[..., 0]
    h0 = jnp.zeros((B, T0, C, F0), jnp.float32)
    for k in range(K0):
        h0 = h0 + x3[:, k:k + T0, :, None] * p["w0"][k][None, None, None, :]
    h0 = h0 + p["b0"].reshape(1, 1, 1, F0)
    h0 = h0 * p["scale0"].reshape(1, 1, 1, F0) + p["shift0"].reshape(1, 1, 1, F0)
    h0 = jnp.where(h0 > 0, h0, jnp.expm1(h0))
    p0 = h0.reshape(B, T1, 2, C, F0).max(axis=2)
    h1 = jnp.einsum("btcf,cfo->bto", p0, p["w1"]) + p["b1"].reshape(1, 1, F1)
    h1 = h1 * p["scale1"].reshape(1, 1, F1) + p["shift1"].reshape(1, 1, F1)
    h1 = jnp.where(h1 > 0, h1, jnp.expm1(h1))
    p1 = h1.reshape(B, T2, 2, F1).max(axis=2)
    logits = jnp.einsum("btf,tfo->bo", p1, p["wd"]) + p["bd"]
    return jax.nn.log_softmax(logits, axis=-1)


if __name__ == "__main__":
    B, T, C = 16, 36, 8          # (batch, time, EEG channel); feat channel = 1
    key = jax.random.PRNGKey(0)
    kx, kp = jax.random.split(key)
    x = jax.random.normal(kx, (B, T, C, 1), dtype=jnp.float32)
    params = make_params(kp, T, C)

    out = resnet_forward(x, params)
    out = jax.block_until_ready(out)

    ref = reference_forward(x, params)
    assert out.shape == (B, NCLS)
    np.testing.assert_allclose(np.asarray(out), np.asarray(ref),
                               atol=5e-4, rtol=5e-4)
    print("KERNEL_OK")
</pallas_src>

<mosaic_0001>
module attributes {stable_mosaic.version = 11 : i64} {
  func.func @resnet_kernel(%arg0: i32, %arg1: memref<36x8x8xf32, #tpu.memory_space<vmem>>, %arg2: memref<5x8x256xf32, #tpu.memory_space<vmem>>, %arg3: memref<1x256xf32, #tpu.memory_space<vmem>>, %arg4: memref<1x256xf32, #tpu.memory_space<vmem>>, %arg5: memref<256x64xf32, #tpu.memory_space<vmem>>, %arg6: memref<1x64xf32, #tpu.memory_space<vmem>>, %arg7: memref<1x64xf32, #tpu.memory_space<vmem>>, %arg8: memref<8x64x4xf32, #tpu.memory_space<vmem>>, %arg9: memref<1x4xf32, #tpu.memory_space<vmem>>, %arg10: memref<8x4xf32, #tpu.memory_space<vmem>>) attributes {dimension_semantics = [#tpu.dimension_semantics<parallel>], iteration_bounds = array<i64: 2>, scalar_prefetch = 0 : i64, scratch_operands = 0 : i64, tpu.core_type = #tpu.core_type<tc>, window_params = [{transform_indices = @transform_0, window_bounds = array<i64: 36, 8, 8>}, {pipeline_mode = #tpu.pipeline_mode<synchronous>, transform_indices = @transform_1, window_bounds = array<i64: 5, 8, 256>}, {pipeline_mode = #tpu.pipeline_mode<synchronous>, transform_indices = @transform_2, window_bounds = array<i64: 1, 256>}, {pipeline_mode = #tpu.pipeline_mode<synchronous>, transform_indices = @transform_3, window_bounds = array<i64: 1, 256>}, {pipeline_mode = #tpu.pipeline_mode<synchronous>, transform_indices = @transform_4, window_bounds = array<i64: 256, 64>}, {pipeline_mode = #tpu.pipeline_mode<synchronous>, transform_indices = @transform_5, window_bounds = array<i64: 1, 64>}, {pipeline_mode = #tpu.pipeline_mode<synchronous>, transform_indices = @transform_6, window_bounds = array<i64: 1, 64>}, {pipeline_mode = #tpu.pipeline_mode<synchronous>, transform_indices = @transform_7, window_bounds = array<i64: 8, 64, 4>}, {pipeline_mode = #tpu.pipeline_mode<synchronous>, transform_indices = @transform_8, window_bounds = array<i64: 1, 4>}, {transform_indices = @transform_9, window_bounds = array<i64: 8, 4>}]} {
    %c0 = arith.constant 0 : index
    %c0_0 = arith.constant 0 : index
    %c0_1 = arith.constant 0 : index
    %0 = vector.load %arg1[%c0, %c0_0, %c0_1] : memref<36x8x8xf32, #tpu.memory_space<vmem>>, vector<36x8x8xf32>
    %1 = vector.extract_strided_slice %0 {offsets = [0, 0, 0], sizes = [32, 8, 8], strides = [1, 1, 1]} : vector<36x8x8xf32> to vector<32x8x8xf32>
    %2 = vector.shape_cast %1 : vector<32x8x8xf32> to vector<256x8xf32>
    %c0_2 = arith.constant 0 : index
    %c0_3 = arith.constant 0 : index
    %c0_4 = arith.constant 0 : index
    %3 = vector.load %arg2[%c0_2, %c0_3, %c0_4] : memref<5x8x256xf32, #tpu.memory_space<vmem>>, vector<1x8x256xf32>
    %4 = vector.shape_cast %3 : vector<1x8x256xf32> to vector<8x256xf32>
    %cst = arith.constant dense<0.000000e+00> : vector<256x256xf32>
    %5 = tpu.matmul %2, %4, %cst {dimension_numbers = #tpu.dot_dimension_numbers<[1], [0], [0], [1], [0, 0, 1, 1], [], []>} : vector<256x8xf32>, vector<8x256xf32>, vector<256x256xf32> -> vector<256x256xf32>
    %6 = vector.extract_strided_slice %0 {offsets = [1, 0, 0], sizes = [32, 8, 8], strides = [1, 1, 1]} : vector<36x8x8xf32> to vector<32x8x8xf32>
    %7 = vector.shape_cast %6 : vector<32x8x8xf32> to vector<256x8xf32>
    %c1 = arith.constant 1 : index
    %c0_5 = arith.constant 0 : index
    %c0_6 = arith.constant 0 : index
    %8 = vector.load %arg2[%c1, %c0_5, %c0_6] : memref<5x8x256xf32, #tpu.memory_space<vmem>>, vector<1x8x256xf32>
    %9 = vector.shape_cast %8 : vector<1x8x256xf32> to vector<8x256xf32>
    %cst_7 = arith.constant dense<0.000000e+00> : vector<256x256xf32>
    %10 = tpu.matmul %7, %9, %cst_7 {dimension_numbers = #tpu.dot_dimension_numbers<[1], [0], [0], [1], [0, 0, 1, 1], [], []>} : vector<256x8xf32>, vector<8x256xf32>, vector<256x256xf32> -> vector<256x256xf32>
    %11 = arith.addf %5, %10 : vector<256x256xf32>
    %12 = vector.extract_strided_slice %0 {offsets = [2, 0, 0], sizes = [32, 8, 8], strides = [1, 1, 1]} : vector<36x8x8xf32> to vector<32x8x8xf32>
    %13 = vector.shape_cast %12 : vector<32x8x8xf32> to vector<256x8xf32>
    %c2 = arith.constant 2 : index
    %c0_8 = arith.constant 0 : index
    %c0_9 = arith.constant 0 : index
    %14 = vector.load %arg2[%c2, %c0_8, %c0_9] : memref<5x8x256xf32, #tpu.memory_space<vmem>>, vector<1x8x256xf32>
    %15 = vector.shape_cast %14 : vector<1x8x256xf32> to vector<8x256xf32>
    %cst_10 = arith.constant dense<0.000000e+00> : vector<256x256xf32>
    %16 = tpu.matmul %13, %15, %cst_10 {dimension_numbers = #tpu.dot_dimension_numbers<[1], [0], [0], [1], [0, 0, 1, 1], [], []>} : vector<256x8xf32>, vector<8x256xf32>, vector<256x256xf32> -> vector<256x256xf32>
    %17 = arith.addf %11, %16 : vector<256x256xf32>
    %18 = vector.extract_strided_slice %0 {offsets = [3, 0, 0], sizes = [32, 8, 8], strides = [1, 1, 1]} : vector<36x8x8xf32> to vector<32x8x8xf32>
    %19 = vector.shape_cast %18 : vector<32x8x8xf32> to vector<256x8xf32>
    %c3 = arith.constant 3 : index
    %c0_11 = arith.constant 0 : index
    %c0_12 = arith.constant 0 : index
    %20 = vector.load %arg2[%c3, %c0_11, %c0_12] : memref<5x8x256xf32, #tpu.memory_space<vmem>>, vector<1x8x256xf32>
    %21 = vector.shape_cast %20 : vector<1x8x256xf32> to vector<8x256xf32>
    %cst_13 = arith.constant dense<0.000000e+00> : vector<256x256xf32>
    %22 = tpu.matmul %19, %21, %cst_13 {dimension_numbers = #tpu.dot_dimension_numbers<[1], [0], [0], [1], [0, 0, 1, 1], [], []>} : vector<256x8xf32>, vector<8x256xf32>, vector<256x256xf32> -> vector<256x256xf32>
    %23 = arith.addf %17, %22 : vector<256x256xf32>
    %24 = vector.extract_strided_slice %0 {offsets = [4, 0, 0], sizes = [32, 8, 8], strides = [1, 1, 1]} : vector<36x8x8xf32> to vector<32x8x8xf32>
    %25 = vector.shape_cast %24 : vector<32x8x8xf32> to vector<256x8xf32>
    %c4 = arith.constant 4 : index
    %c0_14 = arith.constant 0 : index
    %c0_15 = arith.constant 0 : index
    %26 = vector.load %arg2[%c4, %c0_14, %c0_15] : memref<5x8x256xf32, #tpu.memory_space<vmem>>, vector<1x8x256xf32>
    %27 = vector.shape_cast %26 : vector<1x8x256xf32> to vector<8x256xf32>
    %cst_16 = arith.constant dense<0.000000e+00> : vector<256x256xf32>
    %28 = tpu.matmul %25, %27, %cst_16 {dimension_numbers = #tpu.dot_dimension_numbers<[1], [0], [0], [1], [0, 0, 1, 1], [], []>} : vector<256x8xf32>, vector<8x256xf32>, vector<256x256xf32> -> vector<256x256xf32>
    %29 = arith.addf %23, %28 : vector<256x256xf32>
    %c0_17 = arith.constant 0 : index
    %c0_18 = arith.constant 0 : index
    %30 = vector.load %arg3[%c0_17, %c0_18] : memref<1x256xf32, #tpu.memory_space<vmem>>, vector<1x256xf32>
    %31 = vector.broadcast %30 : vector<1x256xf32> to vector<256x256xf32>
    %32 = arith.mulf %29, %31 : vector<256x256xf32>
    %c0_19 = arith.constant 0 : index
    %c0_20 = arith.constant 0 : index
    %33 = vector.load %arg4[%c0_19, %c0_20] : memref<1x256xf32, #tpu.memory_space<vmem>>, vector<1x256xf32>
    %34 = vector.broadcast %33 : vector<1x256xf32> to vector<256x256xf32>
    %35 = arith.addf %32, %34 : vector<256x256xf32>
    %cst_21 = arith.constant 0.000000e+00 : f32
    %36 = vector.broadcast %cst_21 : f32 to vector<256x256xf32>
    %37 = arith.cmpf ogt, %35, %36 : vector<256x256xf32>
    %38 = math.exp %35 : vector<256x256xf32>
    %cst_22 = arith.constant 1.000000e+00 : f32
    %39 = vector.broadcast %cst_22 : f32 to vector<256x256xf32>
    %40 = arith.subf %38, %39 : vector<256x256xf32>
    %41 = arith.select %37, %35, %40 : vector<256x256xi1>, vector<256x256xf32>
    %42 = vector.shape_cast %41 : vector<256x256xf32> to vector<16x2x8x256xf32>
    %cst_23 = arith.constant dense<0xFF800000> : vector<16x8x256xf32>
    %43 = vector.multi_reduction <maximumf>, %42, %cst_23 [1] : vector<16x2x8x256xf32> to vector<16x8x256xf32>
    %44 = vector.shape_cast %43 : vector<16x8x256xf32> to vector<128x256xf32>
    %c0_24 = arith.constant 0 : index
    %c0_25 = arith.constant 0 : index
    %45 = vector.load %arg5[%c0_24, %c0_25] : memref<256x64xf32, #tpu.memory_space<vmem>>, vector<256x64xf32>
    %cst_26 = arith.constant dense<0.000000e+00> : vector<128x64xf32>
    %46 = tpu.matmul %44, %45, %cst_26 {dimension_numbers = #tpu.dot_dimension_numbers<[1], [0], [0], [1], [0, 0, 1, 1], [], []>} : vector<128x256xf32>, vector<256x64xf32>, vector<128x64xf32> -> vector<128x64xf32>
    %c0_27 = arith.constant 0 : index
    %c0_28 = arith.constant 0 : index
    %47 = vector.load %arg6[%c0_27, %c0_28] : memref<1x64xf32, #tpu.memory_space<vmem>>, vector<1x64xf32>
    %48 = vector.broadcast %47 : vector<1x64xf32> to vector<128x64xf32>
    %49 = arith.mulf %46, %48 : vector<128x64xf32>
    %c0_29 = arith.constant 0 : index
    %c0_30 = arith.constant 0 : index
    %50 = vector.load %arg7[%c0_29, %c0_30] : memref<1x64xf32, #tpu.memory_space<vmem>>, vector<1x64xf32>
    %51 = vector.broadcast %50 : vector<1x64xf32> to vector<128x64xf32>
    %52 = arith.addf %49, %51 : vector<128x64xf32>
    %cst_31 = arith.constant 0.000000e+00 : f32
    %53 = vector.broadcast %cst_31 : f32 to vector<128x64xf32>
    %54 = arith.cmpf ogt, %52, %53 : vector<128x64xf32>
    %55 = math.exp %52 : vector<128x64xf32>
    %cst_32 = arith.constant 1.000000e+00 : f32
    %56 = vector.broadcast %cst_32 : f32 to vector<128x64xf32>
    %57 = arith.subf %55, %56 : vector<128x64xf32>
    %58 = arith.select %54, %52, %57 : vector<128x64xi1>, vector<128x64xf32>
    %59 = vector.shape_cast %58 : vector<128x64xf32> to vector<8x2x8x64xf32>
    %cst_33 = arith.constant dense<0xFF800000> : vector<8x8x64xf32>
    %60 = vector.multi_reduction <maximumf>, %59, %cst_33 [1] : vector<8x2x8x64xf32> to vector<8x8x64xf32>
    %c0_34 = arith.constant 0 : index
    %c0_35 = arith.constant 0 : index
    %c0_36 = arith.constant 0 : index
    %61 = vector.load %arg8[%c0_34, %c0_35, %c0_36] : memref<8x64x4xf32, #tpu.memory_space<vmem>>, vector<8x64x4xf32>
    %cst_37 = arith.constant dense<0.000000e+00> : vector<8x8x4xf32>
    %62 = tpu.matmul %60, %61, %cst_37 {dimension_numbers = #tpu.dot_dimension_numbers<[2], [1], [1], [2], [0, 0, 0, 1, 1, 2], [0], [0]>} : vector<8x8x64xf32>, vector<8x64x4xf32>, vector<8x8x4xf32> -> vector<8x8x4xf32>
    %cst_38 = arith.constant dense<0.000000e+00> : vector<8x4xf32>
    %63 = vector.multi_reduction <add>, %62, %cst_38 [0] : vector<8x8x4xf32> to vector<8x4xf32>
    %c0_39 = arith.constant 0 : index
    %c0_40 = arith.constant 0 : index
    %64 = vector.load %arg9[%c0_39, %c0_40] : memref<1x4xf32, #tpu.memory_space<vmem>>, vector<1x4xf32>
    %65 = vector.broadcast %64 : vector<1x4xf32> to vector<8x4xf32>
    %66 = arith.addf %63, %65 : vector<8x4xf32>
    %cst_41 = arith.constant dense<0xFF800000> : vector<8xf32>
    %67 = vector.multi_reduction <maximumf>, %66, %cst_41 [1] : vector<8x4xf32> to vector<8xf32>
    %68 = vector.shape_cast %67 : vector<8xf32> to vector<8x1xf32>
    %69 = vector.broadcast %68 : vector<8x1xf32> to vector<8x4xf32>
    %70 = arith.subf %66, %69 : vector<8x4xf32>
    %71 = math.exp %70 : vector<8x4xf32>
    %cst_42 = arith.constant dense<0.000000e+00> : vector<8xf32>
    %72 = vector.multi_reduction <add>, %71, %cst_42 [1] : vector<8x4xf32> to vector<8xf32>
    %73 = vector.shape_cast %72 : vector<8xf32> to vector<8x1xf32>
    %74 = math.log %73 : vector<8x1xf32>
    %75 = vector.broadcast %74 : vector<8x1xf32> to vector<8x4xf32>
    %76 = arith.subf %70, %75 : vector<8x4xf32>
    %c0_43 = arith.constant 0 : index
    %c0_44 = arith.constant 0 : index
    %77 = vector.load %arg10[%c0_43, %c0_44] : memref<8x4xf32, #tpu.memory_space<vmem>>, vector<8x4xf32>
    tpu.vector_store %arg10[%c0_43, %c0_44], %76 {strides = array<i32>} : memref<8x4xf32, #tpu.memory_space<vmem>>, vector<8x4xf32>,
    return
  }
  func.func @transform_0(%arg0: i32) -> (i32, i32, i32) {
    %c0_i32 = arith.constant 0 : i32
    %c0_i32_0 = arith.constant 0 : i32
    %c0_i32_1 = arith.constant 0 : i32
    return %c0_i32, %arg0, %c0_i32_0 : i32, i32, i32
  }
  func.func @transform_1(%arg0: i32) -> (i32, i32, i32) {
    %c0_i32 = arith.constant 0 : i32
    %c0_i32_0 = arith.constant 0 : i32
    %c0_i32_1 = arith.constant 0 : i32
    %c0_i32_2 = arith.constant 0 : i32
    return %c0_i32, %c0_i32_0, %c0_i32_1 : i32, i32, i32
  }
  func.func @transform_2(%arg0: i32) -> (i32, i32) {
    %c0_i32 = arith.constant 0 : i32
    %c0_i32_0 = arith.constant 0 : i32
    %c0_i32_1 = arith.constant 0 : i32
    return %c0_i32, %c0_i32_0 : i32, i32
  }
  func.func @transform_3(%arg0: i32) -> (i32, i32) {
    %c0_i32 = arith.constant 0 : i32
    %c0_i32_0 = arith.constant 0 : i32
    %c0_i32_1 = arith.constant 0 : i32
    return %c0_i32, %c0_i32_0 : i32, i32
  }
  func.func @transform_4(%arg0: i32) -> (i32, i32) {
    %c0_i32 = arith.constant 0 : i32
    %c0_i32_0 = arith.constant 0 : i32
    %c0_i32_1 = arith.constant 0 : i32
    return %c0_i32, %c0_i32_0 : i32, i32
  }
  func.func @transform_5(%arg0: i32) -> (i32, i32) {
    %c0_i32 = arith.constant 0 : i32
    %c0_i32_0 = arith.constant 0 : i32
    %c0_i32_1 = arith.constant 0 : i32
    return %c0_i32, %c0_i32_0 : i32, i32
  }
  func.func @transform_6(%arg0: i32) -> (i32, i32) {
    %c0_i32 = arith.constant 0 : i32
    %c0_i32_0 = arith.constant 0 : i32
    %c0_i32_1 = arith.constant 0 : i32
    return %c0_i32, %c0_i32_0 : i32, i32
  }
  func.func @transform_7(%arg0: i32) -> (i32, i32, i32) {
    %c0_i32 = arith.constant 0 : i32
    %c0_i32_0 = arith.constant 0 : i32
    %c0_i32_1 = arith.constant 0 : i32
    %c0_i32_2 = arith.constant 0 : i32
    return %c0_i32, %c0_i32_0, %c0_i32_1 : i32, i32, i32
  }
  func.func @transform_8(%arg0: i32) -> (i32, i32) {
    %c0_i32 = arith.constant 0 : i32
    %c0_i32_0 = arith.constant 0 : i32
    %c0_i32_1 = arith.constant 0 : i32
    return %c0_i32, %c0_i32_0 : i32, i32
  }
  func.func @transform_9(%arg0: i32) -> (i32, i32) {
    %c0_i32 = arith.constant 0 : i32
    %c0_i32_0 = arith.constant 0 : i32
    return %arg0, %c0_i32 : i32, i32
  }
}

</mosaic_0001>

<llo_original>
// kernel: tpu_custom_call.1
$region0: #{tpu_custom_call.1}
  #allocation0 [shape = 'u32[]', space=smem, size = 0x4, offset = 0x4, fixed_abs, tag = 'smem constant byte address 0x4 - core index']
  #allocation1 [shape = 'u32[144,128]{1,0:T(1,128)}', space=vmem, size = 0x12000, scoped, tag = 'internal scratch']
  %s0 = inlined_call_operand.vmem [shape: f32[36,16,8], index: 0, kind: input, shape index: {}]
  %s1 = inlined_call_operand.vmem [shape: f32[5,8,256], index: 1, kind: input, shape index: {}]
  %s2 = inlined_call_operand.vmem [shape: f32[1,256], index: 2, kind: input, shape index: {}]
  %s3 = inlined_call_operand.vmem [shape: f32[1,256], index: 3, kind: input, shape index: {}]
  %s4 = inlined_call_operand.vmem [shape: f32[256,64], index: 4, kind: input, shape index: {}]
  %s5 = inlined_call_operand.vmem [shape: f32[1,64], index: 5, kind: input, shape index: {}]
  %s6 = inlined_call_operand.vmem [shape: f32[1,64], index: 6, kind: input, shape index: {}]
  %s7 = inlined_call_operand.vmem [shape: f32[8,64,4], index: 7, kind: input, shape index: {}]
  %s8 = inlined_call_operand.vmem [shape: f32[1,4], index: 8, kind: input, shape index: {}]
  %s9 = inlined_call_operand.vmem [shape: f32[16,4], index: 9, kind: output, shape index: {}]
  %s10 = sld [smem:[#allocation0]]
  $region107: #{tpu_custom_call.1} parent=0
    _
  %s12 = ssub.s32 1, %s10
  %s13 = scalar_select 0, %s12, %s10
  $region1: #{tpu_custom_call.1} parent=0
    #allocation2 [shape = 'u8[294912]{0}', space=vmem, size = 0x48000, scoped, tag = 'input window, operand 0']
    loop: start=0, step=1, limit=4
    $region2: #{tpu_custom_call.1} parent=1 // loop_pre_header
      _
    $region3: #{tpu_custom_call.1} parent=1 // loop_header
      %s15 = sphi 0, %s19
      %p16 = scmp.ge.s32.totalorder %s15, 4
      %s25 = sphi 0, %s27
      %s28 = sphi 0, %s25
      %s29 = sphi 0, %s28
      %s45 = sphi 0, %s29
      %s49 = sphi 0, %s49
      %s51 = sphi 0, %s49
      %s52 = sphi 0, %s51
      %s66 = sphi 0, %s52
      %s70 = sphi 0, %s70
      %s72 = sphi 0, %s70
      %s73 = sphi 0, %s72
      %s87 = sphi 0, %s73
      %s91 = sphi 0, %s91
      %s93 = sphi 0, %s91
      %s94 = sphi 0, %s93
      %s108 = sphi 0, %s94
      %s112 = sphi 0, %s112
      %s114 = sphi 0, %s112
      %s115 = sphi 0, %s114
      %s129 = sphi 0, %s115
      %s133 = sphi 0, %s133
      %s135 = sphi 0, %s133
      %s136 = sphi 0, %s135
      %s150 = sphi 0, %s136
      %s154 = sphi 0, %s154
      %s156 = sphi 0, %s154
      %s157 = sphi 0, %s156
      %s171 = sphi 0, %s157
      %s175 = sphi 0, %s175
      %s177 = sphi 0, %s175
      %s178 = sphi 0, %s177
      %s192 = sphi 0, %s178
      %s196 = sphi 0, %s196
      %s198 = sphi 0, %s196
      %s199 = sphi 0, %s198
      %s213 = sphi 0, %s199
      %s219 = sphi 0, %s221
      %s222 = sphi 0, %s219
      %s223 = sphi 0, %s222
      %s239 = sphi 0, %s223
    $region4: #{tpu_custom_call.1} parent=1 // loop_header_branch
      %18 = sbr.rel (%p16) target = $region8
    $region5: #{tpu_custom_call.1} parent=1 // loop_body
      %s20 = ssub.s32 %s15, 1
      %s21 = ssub.s32 %s15, 2
      %s22 = sadd.s32 %s15, 1
      %s23 = ssub.s32 %s15, %s22
      %p24 = scmp.eq.s32.totalorder %s23, 0
      %s26 = sadd.s32 %s25, 1
      %s27 = scalar_select %p24, %s25, %s26
      %p30 = pneg %p24
      %p31 = scmp.eq.s32.totalorder %s15, 1
      %p32 = por %p30, %p31
      %p33 = scmp.ne.s32.totalorder %s25, %s28
      %p34 = scmp.eq.s32.totalorder %s15, 0
      %p35 = por %p33, %p34
      %p36 = scmp.ne.s32.totalorder %s25, %s28
      %p37 = scmp.eq.s32.totalorder %s20, 1
      %p38 = por %p36, %p37
      %p39 = scmp.ne.s32.totalorder %s28, %s29
      %p40 = scmp.eq.s32.totalorder %s20, 0
      %p41 = por %p39, %p40
      %p42 = scmp.ne.s32.totalorder %s28, %s29
      %p43 = scmp.eq.s32.totalorder %s21, 1
      %p44 = por %p42, %p43
      %p46 = scmp.ne.s32.totalorder %s29, %s45
      %p47 = scmp.eq.s32.totalorder %s21, 0
      %p48 = por %p46, %p47
      %s50 = sadd.s32 %s49, 1
      %p53 = scmp.eq.s32.totalorder %s15, 1
      %p54 = scmp.ne.s32.totalorder %s49, %s51
      %p55 = scmp.eq.s32.totalorder %s15, 0
      %p56 = por %p54, %p55
      %p57 = scmp.ne.s32.totalorder %s49, %s51
      %p58 = scmp.eq.s32.totalorder %s20, 1
      %p59 = por %p57, %p58
      %p60 = scmp.ne.s32.totalorder %s51, %s52
      %p61 = scmp.eq.s32.totalorder %s20, 0
      %p62 = por %p60, %p61
      %p63 = scmp.ne.s32.totalorder %s51, %s52
      %p64 = scmp.eq.s32.totalorder %s21, 1
      %p65 = por %p63, %p64
      %p67 = scmp.ne.s32.totalorder %s52, %s66
      %p68 = scmp.eq.s32.totalorder %s21, 0
      %p69 = por %p67, %p68
      %s71 = sadd.s32 %s70, 1
      %p74 = scmp.eq.s32.totalorder %s15, 1
      %p75 = scmp.ne.s32.totalorder %s70, %s72
      %p76 = scmp.eq.s32.totalorder %s15, 0
      %p77 = por %p75, %p76
      %p78 = scmp.ne.s32.totalorder %s70, %s72
      %p79 = scmp.eq.s32.totalorder %s20, 1
      %p80 = por %p78, %p79
      %p81 = scmp.ne.s32.totalorder %s72, %s73
      %p82 = scmp.eq.s32.totalorder %s20, 0
      %p83 = por %p81, %p82
      %p84 = scmp.ne.s32.totalorder %s72, %s73
      %p85 = scmp.eq.s32.totalorder %s21, 1
      %p86 = por %p84, %p85
      %p88 = scmp.ne.s32.totalorder %s73, %s87
      %p89 = scmp.eq.s32.totalorder %s21, 0
      %p90 = por %p88, %p89
      %s92 = sadd.s32 %s91, 1
      %p95 = scmp.eq.s32.totalorder %s15, 1
      %p96 = scmp.ne.s32.totalorder %s91, %s93
      %p97 = scmp.eq.s32.totalorder %s15, 0
      %p98 = por %p96, %p97
      %p99 = scmp.ne.s32.totalorder %s91, %s93
      %p100 = scmp.eq.s32.totalorder %s20, 1
      %p101 = por %p99, %p100
      %p102 = scmp.ne.s32.totalorder %s93, %s94
      %p103 = scmp.eq.s32.totalorder %s20, 0
      %p104 = por %p102, %p103
      %p105 = scmp.ne.s32.totalorder %s93, %s94
      %p106 = scmp.eq.s32.totalorder %s21, 1
      %p107 = por %p105, %p106
      %p109 = scmp.ne.s32.totalorder %s94, %s108
      %p110 = scmp.eq.s32.totalorder %s21, 0
      %p111 = por %p109, %p110
      %s113 = sadd.s32 %s112, 1
      %p116 = scmp.eq.s32.totalorder %s15, 1
      %p117 = scmp.ne.s32.totalorder %s112, %s114
      %p118 = scmp.eq.s32.totalorder %s15, 0
      %p119 = por %p117, %p118
      %p120 = scmp.ne.s32.totalorder %s112, %s114
      %p121 = scmp.eq.s32.totalorder %s20, 1
      %p122 = por %p120, %p121
      %p123 = scmp.ne.s32.totalorder %s114, %s115
      %p124 = scmp.eq.s32.totalorder %s20, 0
      %p125 = por %p123, %p124
      %p126 = scmp.ne.s32.totalorder %s114, %s115
      %p127 = scmp.eq.s32.totalorder %s21, 1
      %p128 = por %p126, %p127
      %p130 = scmp.ne.s32.totalorder %s115, %s129
      %p131 = scmp.eq.s32.totalorder %s21, 0
      %p132 = por %p130, %p131
      %s134 = sadd.s32 %s133, 1
      %p137 = scmp.eq.s32.totalorder %s15, 1
      %p138 = scmp.ne.s32.totalorder %s133, %s135
      %p139 = scmp.eq.s32.totalorder %s15, 0
      %p140 = por %p138, %p139
      %p141 = scmp.ne.s32.totalorder %s133, %s135
      %p142 = scmp.eq.s32.totalorder %s20, 1
      %p143 = por %p141, %p142
      %p144 = scmp.ne.s32.totalorder %s135, %s136
      %p145 = scmp.eq.s32.totalorder %s20, 0
      %p146 = por %p144, %p145
      %p147 = scmp.ne.s32.totalorder %s135, %s136
      %p148 = scmp.eq.s32.totalorder %s21, 1
      %p149 = por %p147, %p148
      %p151 = scmp.ne.s32.totalorder %s136, %s150
      %p152 = scmp.eq.s32.totalorder %s21, 0
      %p153 = por %p151, %p152
      %s155 = sadd.s32 %s154, 1
      %p158 = scmp.eq.s32.totalorder %s15, 1
      %p159 = scmp.ne.s32.totalorder %s154, %s156
      %p160 = scmp.eq.s32.totalorder %s15, 0
      %p161 = por %p159, %p160
      %p162 = scmp.ne.s32.totalorder %s154, %s156
      %p163 = scmp.eq.s32.totalorder %s20, 1
      %p164 = por %p162, %p163
      %p165 = scmp.ne.s32.totalorder %s156, %s157
      %p166 = scmp.eq.s32.totalorder %s20, 0
      %p167 = por %p165, %p166
      %p168 = scmp.ne.s32.totalorder %s156, %s157
      %p169 = scmp.eq.s32.totalorder %s21, 1
      %p170 = por %p168, %p169
      %p172 = scmp.ne.s32.totalorder %s157, %s171
      %p173 = scmp.eq.s32.totalorder %s21, 0
      %p174 = por %p172, %p173
      %s176 = sadd.s32 %s175, 1
      %p179 = scmp.eq.s32.totalorder %s15, 1
      %p180 = scmp.ne.s32.totalorder %s175, %s177
      %p181 = scmp.eq.s32.totalorder %s15, 0
      %p182 = por %p180, %p181
      %p183 = scmp.ne.s32.totalorder %s175, %s177
      %p184 = scmp.eq.s32.totalorder %s20, 1
      %p185 = por %p183, %p184
      %p186 = scmp.ne.s32.totalorder %s177, %s178
      %p187 = scmp.eq.s32.totalorder %s20, 0
      %p188 = por %p186, %p187
      %p189 = scmp.ne.s32.totalorder %s177, %s178
      %p190 = scmp.eq.s32.totalorder %s21, 1
      %p191 = por %p189, %p190
      %p193 = scmp.ne.s32.totalorder %s178, %s192
      %p194 = scmp.eq.s32.totalorder %s21, 0
      %p195 = por %p193, %p194
      %s197 = sadd.s32 %s196, 1
      %p200 = scmp.eq.s32.totalorder %s15, 1
      %p201 = scmp.ne.s32.totalorder %s196, %s198
      %p202 = scmp.eq.s32.totalorder %s15, 0
      %p203 = por %p201, %p202
      %p204 = scmp.ne.s32.totalorder %s196, %s198
      %p205 = scmp.eq.s32.totalorder %s20, 1
      %p206 = por %p204, %p205
      %p207 = scmp.ne.s32.totalorder %s198, %s199
      %p208 = scmp.eq.s32.totalorder %s20, 0
      %p209 = por %p207, %p208
      %p210 = scmp.ne.s32.totalorder %s198, %s199
      %p211 = scmp.eq.s32.totalorder %s21, 1
      %p212 = por %p210, %p211
      %p214 = scmp.ne.s32.totalorder %s199, %s213
      %p215 = scmp.eq.s32.totalorder %s21, 0
      %p216 = por %p214, %p215
      %s217 = ssub.s32 %s15, %s22
      %p218 = scmp.eq.s32.totalorder %s217, 0
      %s220 = sadd.s32 %s219, 1
      %s221 = scalar_select %p218, %s219, %s220
      %p224 = pneg %p218
      %p225 = scmp.eq.s32.totalorder %s15, 1
      %p226 = por %p224, %p225
      %p227 = scmp.ne.s32.totalorder %s219, %s222
      %p228 = scmp.eq.s32.totalorder %s15, 0
      %p229 = por %p227, %p228
      %p230 = scmp.ne.s32.totalorder %s219, %s222
      %p231 = scmp.eq.s32.totalorder %s20, 1
      %p232 = por %p230, %p231
      %p233 = scmp.ne.s32.totalorder %s222, %s223
      %p234 = scmp.eq.s32.totalorder %s20, 0
      %p235 = por %p233, %p234
      %p236 = scmp.ne.s32.totalorder %s222, %s223
      %p237 = scmp.eq.s32.totalorder %s21, 1
      %p238 = por %p236, %p237
      %p240 = scmp.ne.s32.totalorder %s223, %s239
      %p241 = scmp.eq.s32.totalorder %s21, 0
      %p242 = por %p240, %p241
      %p243 = scmp.le.s32.totalorder 1, %s15
      %p244 = scmp.lt.s32.totalorder %s15, 3
      %p245 = pnand %p243, %p244
      %p246 = pneg %p245
      // Predicated region
      $region9: #{tpu_custom_call.1} parent=5 // pred_check
        _
      $region10: #{tpu_custom_call.1} parent=5 // pred_check_branch
        %248 = sbr.rel (%p245) target = $region12
      $region11: #{tpu_custom_call.1} parent=5 // pred_region
        %s249 = ssub.s32 %s15, 1
        // Predicated region
        $region13: #{tpu_custom_call.1} parent=11 // pred_check
          %p250 = pneg %p62
        $region14: #{tpu_custom_call.1} parent=11 // pred_check_branch
          %252 = sbr.rel (%p250) target = $region16
        $region15: #{tpu_custom_call.1} parent=11 // pred_region
          _
        $region16: #{tpu_custom_call.1} parent=11 // pred_fallthru
          _
        // Predicated region
        $region17: #{tpu_custom_call.1} parent=11 // pred_check
          %p253 = pneg %p83
        $region18: #{tpu_custom_call.1} parent=11 // pred_check_branch
          %255 = sbr.rel (%p253) target = $region20
        $region19: #{tpu_custom_call.1} parent=11 // pred_region
          _
        $region20: #{tpu_custom_call.1} parent=11 // pred_fallthru
          _
        // Predicated region
        $region21: #{tpu_custom_call.1} parent=11 // pred_check
          %p256 = pneg %p104
        $region22: #{tpu_custom_call.1} parent=11 // pred_check_branch
          %258 = sbr.rel (%p256) target = $region24
        $region23: #{tpu_custom_call.1} parent=11 // pred_region
          _
        $region24: #{tpu_custom_call.1} parent=11 // pred_fallthru
          _
        // Predicated region
        $region25: #{tpu_custom_call.1} parent=11 // pred_check
          %p259 = pneg %p125
        $region26: #{tpu_custom_call.1} parent=11 // pred_check_branch
          %261 = sbr.rel (%p259) target = $region28
        $region27: #{tpu_custom_call.1} parent=11 // pred_region
          _
        $region28: #{tpu_custom_call.1} parent=11 // pred_fallthru
          _
        // Predicated region
        $region29: #{tpu_custom_call.1} parent=11 // pred_check
          %p262 = pneg %p146
        $region30: #{tpu_custom_call.1} parent=11 // pred_check_branch
          %264 = sbr.rel (%p262) target = $region32
        $region31: #{tpu_custom_call.1} parent=11 // pred_region
          _
        $region32: #{tpu_custom_call.1} parent=11 // pred_fallthru
          _
        // Predicated region
        $region33: #{tpu_custom_call.1} parent=11 // pred_check
          %p265 = pneg %p167
        $region34: #{tpu_custom_call.1} parent=11 // pred_check_branch
          %267 = sbr.rel (%p265) target = $region36
        $region35: #{tpu_custom_call.1} parent=11 // pred_region
          _
        $region36: #{tpu_custom_call.1} parent=11 // pred_fallthru
          _
        // Predicated region
        $region37: #{tpu_custom_call.1} parent=11 // pred_check
          %p268 = pneg %p188
        $region38: #{tpu_custom_call.1} parent=11 // pred_check_branch
          %270 = sbr.rel (%p268) target = $region40
        $region39: #{tpu_custom_call.1} parent=11 // pred_region
          _
        $region40: #{tpu_custom_call.1} parent=11 // pred_fallthru
          _
        // Predicated region
        $region41: #{tpu_custom_call.1} parent=11 // pred_check
          %p271 = pneg %p209
        $region42: #{tpu_custom_call.1} parent=11 // pred_check_branch
          %273 = sbr.rel (%p271) target = $region44
        $region43: #{tpu_custom_call.1} parent=11 // pred_region
          _
        $region44: #{tpu_custom_call.1} parent=11 // pred_fallthru
          _
      $region12: #{tpu_custom_call.1} parent=5 // pred_fallthru
        _
      %p274 = scmp.lt.s32.totalorder %s15, 2
      // Predicated region
      $region45: #{tpu_custom_call.1} parent=5 // pred_check
        %p275 = pneg %p274
      $region46: #{tpu_custom_call.1} parent=5 // pred_check_branch
        %277 = sbr.rel (%p275) target = $region48
      $region47: #{tpu_custom_call.1} parent=5 // pred_region
        // Predicated region
        $region49: #{tpu_custom_call.1} parent=47 // pred_check
          %p278 = pneg %p35
        $region50: #{tpu_custom_call.1} parent=47 // pred_check_branch
          %280 = sbr.rel (%p278) target = $region52
        $region51: #{tpu_custom_call.1} parent=47 // pred_region
          %s281 = sand.u32 %s25, 1
          %s282 = sand.u32 %s25, 1
          %s283 = smul.addr %s282, 288
          %s284 = scalar_lea.vmem [#allocation2], %s283
          %s285 = smul.addr %s15, 8
          %s286 = scalar_lea.vmem %s0, %s285
          // Predicated region
          $region53: #{tpu_custom_call.1} parent=51 // pred_check
            _
          $region54: #{tpu_custom_call.1} parent=51 // pred_check_branch
            %288 = sbr.rel (0) target = $region56
          $region55: #{tpu_custom_call.1} parent=51 // pred_region
            // Predicated region
            $region57: #{tpu_custom_call.1} parent=55 // pred_check
              _
            $region58: #{tpu_custom_call.1} parent=55 // pred_check_branch
              %290 = sbr.rel (0) target = $region60
            $region59: #{tpu_custom_call.1} parent=55 // pred_region
              // Predicated region
              $region72: #{tpu_custom_call.1} parent=59 // pred_check
                _
              $region73: #{tpu_custom_call.1} parent=59 // pred_check_branch
                %375 = sbr.rel (0) target = $region75
              $region74: #{tpu_custom_call.1} parent=59 // pred_region
                loop: start=0, step=1, limit=1
                $region76: #{tpu_custom_call.1} parent=74 // loop_pre_header
                  _
                $region77: #{tpu_custom_call.1} parent=74 // loop_header
                  %s377 = sphi 0, %s381
                  %p378 = scmp.ge.s32.totalorder %s377, 1
                  %s382 = sphi %s286, %s286
                  %s383 = sphi %s284, %s284
                $region78: #{tpu_custom_call.1} parent=74 // loop_header_branch
                  %380 = sbr.rel (%p378) target = $region82
                $region79: #{tpu_custom_call.1} parent=74 // loop_body
                  %v384 = vld [vmem:[%s382] sm:$0xff]
                  %385 = vst [vmem:[%s383] sm:$0xff] %v384
                  %v386 = vld [vmem:[%s382 + $0x10] sm:$0xff]
                  %387 = vst [vmem:[%s383 + $0x8] sm:$0xff] %v386
                  %v388 = vld [vmem:[%s382 + $0x20] sm:$0xff]
                  %389 = vst [vmem:[%s383 + $0x10] sm:$0xff] %v388
                  %v390 = vld [vmem:[%s382 + $0x30] sm:$0xff]
                  %391 = vst [vmem:[%s383 + $0x18] sm:$0xff] %v390
                  %v392 = vld [vmem:[%s382 + $0x40] sm:$0xff]
                  %393 = vst [vmem:[%s383 + $0x20] sm:$0xff] %v392
                  %v394 = vld [vmem:[%s382 + $0x50] sm:$0xff]
                  %395 = vst [vmem:[%s383 + $0x28] sm:$0xff] %v394
                  %v396 = vld [vmem:[%s382 + $0x60] sm:$0xff]
                  %397 = vst [vmem:[%s383 + $0x30] sm:$0xff] %v396
                  %v398 = vld [vmem:[%s382 + $0x70] sm:$0xff]
                  %399 = vst [vmem:[%s383 + $0x38] sm:$0xff] %v398
                  %v400 = vld [vmem:[%s382 + $0x80] sm:$0xff]
                  %401 = vst [vmem:[%s383 + $0x40] sm:$0xff] %v400
                  %v402 = vld [vmem:[%s382 + $0x90] sm:$0xff]
                  %403 = vst [vmem:[%s383 + $0x48] sm:$0xff] %v402
                  %v404 = vld [vmem:[%s382 + $0xa0] sm:$0xff]
                  %405 = vst [vmem:[%s383 + $0x50] sm:$0xff] %v404
                  %v406 = vld [vmem:[%s382 + $0xb0] sm:$0xff]
                  %407 = vst [vmem:[%s383 + $0x58] sm:$0xff] %v406
                  %v408 = vld [vmem:[%s382 + $0xc0] sm:$0xff]
                  %409 = vst [vmem:[%s383 + $0x60] sm:$0xff] %v408
                  %v410 = vld [vmem:[%s382 + $0xd0] sm:$0xff]
                  %411 = vst [vmem:[%s383 + $0x68] sm:$0xff] %v410
                  %v412 = vld [vmem:[%s382 + $0xe0] sm:$0xff]
                  %413 = vst [vmem:[%s383 + $0x70] sm:$0xff] %v412
                  %v414 = vld [vmem:[%s382 + $0xf0] sm:$0xff]
                  %415 = vst [vmem:[%s383 + $0x78] sm:$0xff] %v414
                  %v416 = vld [vmem:[%s382 + $0x100] sm:$0xff]
                  %417 = vst [vmem:[%s383 + $0x80] sm:$0xff] %v416
                  %v418 = vld [vmem:[%s382 + $0x110] sm:$0xff]
                  %419 = vst [vmem:[%s383 + $0x88] sm:$0xff] %v418
                  %v420 = vld [vmem:[%s382 + $0x120] sm:$0xff]
                  %421 = vst [vmem:[%s383 + $0x90] sm:$0xff] %v420
                  %v422 = vld [vmem:[%s382 + $0x130] sm:$0xff]
                  %423 = vst [vmem:[%s383 + $0x98] sm:$0xff] %v422
                  %v424 = vld [vmem:[%s382 + $0x140] sm:$0xff]
                  %425 = vst [vmem:[%s383 + $0xa0] sm:$0xff] %v424
                  %v426 = vld [vmem:[%s382 + $0x150] sm:$0xff]
                  %427 = vst [vmem:[%s383 + $0xa8] sm:$0xff] %v426
                  %v428 = vld [vmem:[%s382 + $0x160] sm:$0xff]
                  %429 = vst [vmem:[%s383 + $0xb0] sm:$0xff] %v428
                  %v430 = vld [vmem:[%s382 + $0x170] sm:$0xff]
                  %431 = vst [vmem:[%s383 + $0xb8] sm:$0xff] %v430
                  %v432 = vld [vmem:[%s382 + $0x180] sm:$0xff]
                  %433 = vst [vmem:[%s383 + $0xc0] sm:$0xff] %v432
                  %v434 = vld [vmem:[%s382 + $0x190] sm:$0xff]
                  %435 = vst [vmem:[%s383 + $0xc8] sm:$0xff] %v434
                  %v436 = vld [vmem:[%s382 + $0x1a0] sm:$0xff]
                  %437 = vst [vmem:[%s383 + $0xd0] sm:$0xff] %v436
                  %v438 = vld [vmem:[%s382 + $0x1b0] sm:$0xff]
                  %439 = vst [vmem:[%s383 + $0xd8] sm:$0xff] %v438
                  %v440 = vld [vmem:[%s382 + $0x1c0] sm:$0xff]
                  %441 = vst [vmem:[%s383 + $0xe0] sm:$0xff] %v440
                  %v442 = vld [vmem:[%s382 + $0x1d0] sm:$0xff]
                  %443 = vst [vmem:[%s383 + $0xe8] sm:$0xff] %v442
                  %v444 = vld [vmem:[%s382 + $0x1e0] sm:$0xff]
                  %445 = vst [vmem:[%s383 + $0xf0] sm:$0xff] %v444
                  %v446 = vld [vmem:[%s382 + $0x1f0] sm:$0xff]
                  %447 = vst [vmem:[%s383 + $0xf8] sm:$0xff] %v446
                  %v448 = vld [vmem:[%s382 + $0x200] sm:$0xff]
                  %449 = vst [vmem:[%s383 + $0x100] sm:$0xff] %v448
                  %v450 = vld [vmem:[%s382 + $0x210] sm:$0xff]
                  %451 = vst [vmem:[%s383 + $0x108] sm:$0xff] %v450
                  %v452 = vld [vmem:[%s382 + $0x220] sm:$0xff]
                  %453 = vst [vmem:[%s383 + $0x110] sm:$0xff] %v452
                  %v454 = vld [vmem:[%s382 + $0x230] sm:$0xff]
                  %455 = vst [vmem:[%s383 + $0x118] sm:$0xff] %v454
                $region80: #{tpu_custom_call.1} parent=74 // loop_footer
                  %s381 = sadd.s32 1, %s377
                $region81: #{tpu_custom_call.1} parent=74 // loop_footer_branch
                  %376 = sbr.rel target = $region77
                $region82: #{tpu_custom_call.1} parent=74 // loop_exit
                  _
              $region75: #{tpu_custom_call.1} parent=59 // pred_fallthru
                _
              // Predicated region
              $region83: #{tpu_custom_call.1} parent=59 // pred_check
                _
              $region84: #{tpu_custom_call.1} parent=59 // pred_check_branch
                %457 = sbr.rel target = $region86
              $region85: #{tpu_custom_call.1} parent=59 // pred_region
                _
              $region86: #{tpu_custom_call.1} parent=59 // pred_fallthru
                _
            $region60: #{tpu_custom_call.1} parent=55 // pred_fallthru
              _
            // Predicated region
            $region61: #{tpu_custom_call.1} parent=55 // pred_check
              _
            $region62: #{tpu_custom_call.1} parent=55 // pred_check_branch
              %292 = sbr.rel target = $region64
            $region63: #{tpu_custom_call.1} parent=55 // pred_region
              loop: start=0, step=1, limit=1
              $region65: #{tpu_custom_call.1} parent=63 // loop_pre_header
                _
              $region66: #{tpu_custom_call.1} parent=63 // loop_header
                %s295 = sphi 0, %s299
                %p296 = scmp.ge.s32.totalorder %s295, 1
                %s300 = sphi %s286, %s286
                %s301 = sphi %s284, %s284
              $region67: #{tpu_custom_call.1} parent=63 // loop_header_branch
                %298 = sbr.rel (%p296) target = $region71
              $region68: #{tpu_custom_call.1} parent=63 // loop_body
                %v302 = vld [vmem:[%s300] sm:$0xff]
                %303 = vst [vmem:[%s301] sm:$0xff] %v302
                %v304 = vld [vmem:[%s300 + $0x10] sm:$0xff]
                %305 = vst [vmem:[%s301 + $0x8] sm:$0xff] %v304
                %v306 = vld [vmem:[%s300 + $0x20] sm:$0xff]
                %307 = vst [vmem:[%s301 + $0x10] sm:$0xff] %v306
                %v308 = vld [vmem:[%s300 + $0x30] sm:$0xff]
                %309 = vst [vmem:[%s301 + $0x18] sm:$0xff] %v308
                %v310 = vld [vmem:[%s300 + $0x40] sm:$0xff]
                %311 = vst [vmem:[%s301 + $0x20] sm:$0xff] %v310
                %v312 = vld [vmem:[%s300 + $0x50] sm:$0xff]
                %313 = vst [vmem:[%s301 + $0x28] sm:$0xff] %v312
                %v314 = vld [vmem:[%s300 + $0x60] sm:$0xff]
                %315 = vst [vmem:[%s301 + $0x30] sm:$0xff] %v314
                %v316 = vld [vmem:[%s300 + $0x70] sm:$0xff]
                %317 = vst [vmem:[%s301 + $0x38] sm:$0xff] %v316
                %v318 = vld [vmem:[%s300 + $0x80] sm:$0xff]
                %319 = vst [vmem:[%s301 + $0x40] sm:$0xff] %v318
                %v320 = vld [vmem:[%s300 + $0x90] sm:$0xff]
                %321 = vst [vmem:[%s301 + $0x48] sm:$0xff] %v320
                %v322 = vld [vmem:[%s300 + $0xa0] sm:$0xff]
                %323 = vst [vmem:[%s301 + $0x50] sm:$0xff] %v322
                %v324 = vld [vmem:[%s300 + $0xb0] sm:$0xff]
                %325 = vst [vmem:[%s301 + $0x58] sm:$0xff] %v324
                %v326 = vld [vmem:[%s300 + $0xc0] sm:$0xff]
                %327 = vst [vmem:[%s301 + $0x60] sm:$0xff] %v326
                %v328 = vld [vmem:[%s300 + $0xd0] sm:$0xff]
                %329 = vst [vmem:[%s301 + $0x68] sm:$0xff] %v328
                %v330 = vld [vmem:[%s300 + $0xe0] sm:$0xff]
                %331 = vst [vmem:[%s301 + $0x70] sm:$0xff] %v330
                %v332 = vld [vmem:[%s300 + $0xf0] sm:$0xff]
                %333 = vst [vmem:[%s301 + $0x78] sm:$0xff] %v332
                %v334 = vld [vmem:[%s300 + $0x100] sm:$0xff]
                %335 = vst [vmem:[%s301 + $0x80] sm:$0xff] %v334
                %v336 = vld [vmem:[%s300 + $0x110] sm:$0xff]
                %337 = vst [vmem:[%s301 + $0x88] sm:$0xff] %v336
                %v338 = vld [vmem:[%s300 + $0x120] sm:$0xff]
                %339 = vst [vmem:[%s301 + $0x90] sm:$0xff] %v338
                %v340 = vld [vmem:[%s300 + $0x130] sm:$0xff]
                %341 = vst [vmem:[%s301 + $0x98] sm:$0xff] %v340
                %v342 = vld [vmem:[%s300 + $0x140] sm:$0xff]
                %343 = vst [vmem:[%s301 + $0xa0] sm:$0xff] %v342
                %v344 = vld [vmem:[%s300 + $0x150] sm:$0xff]
                %345 = vst [vmem:[%s301 + $0xa8] sm:$0xff] %v344
                %v346 = vld [vmem:[%s300 + $0x160] sm:$0xff]
                %347 = vst [vmem:[%s301 + $0xb0] sm:$0xff] %v346
                %v348 = vld [vmem:[%s300 + $0x170] sm:$0xff]
                %349 = vst [vmem:[%s301 + $0xb8] sm:$0xff] %v348
                %v350 = vld [vmem:[%s300 + $0x180] sm:$0xff]
                %351 = vst [vmem:[%s301 + $0xc0] sm:$0xff] %v350
                %v352 = vld [vmem:[%s300 + $0x190] sm:$0xff]
                %353 = vst [vmem:[%s301 + $0xc8] sm:$0xff] %v352
                %v354 = vld [vmem:[%s300 + $0x1a0] sm:$0xff]
                %355 = vst [vmem:[%s301 + $0xd0] sm:$0xff] %v354
                %v356 = vld [vmem:[%s300 + $0x1b0] sm:$0xff]
                %357 = vst [vmem:[%s301 + $0xd8] sm:$0xff] %v356
                %v358 = vld [vmem:[%s300 + $0x1c0] sm:$0xff]
                %359 = vst [vmem:[%s301 + $0xe0] sm:$0xff] %v358
                %v360 = vld [vmem:[%s300 + $0x1d0] sm:$0xff]
                %361 = vst [vmem:[%s301 + $0xe8] sm:$0xff] %v360
                %v362 = vld [vmem:[%s300 + $0x1e0] sm:$0xff]
                %363 = vst [vmem:[%s301 + $0xf0] sm:$0xff] %v362
                %v364 = vld [vmem:[%s300 + $0x1f0] sm:$0xff]
                %365 = vst [vmem:[%s301 + $0xf8] sm:$0xff] %v364
                %v366 = vld [vmem:[%s300 + $0x200] sm:$0xff]
                %367 = vst [vmem:[%s301 + $0x100] sm:$0xff] %v366
                %v368 = vld [vmem:[%s300 + $0x210] sm:$0xff]
                %369 = vst [vmem:[%s301 + $0x108] sm:$0xff] %v368
                %v370 = vld [vmem:[%s300 + $0x220] sm:$0xff]
                %371 = vst [vmem:[%s301 + $0x110] sm:$0xff] %v370
                %v372 = vld [vmem:[%s300 + $0x230] sm:$0xff]
                %373 = vst [vmem:[%s301 + $0x118] sm:$0xff] %v372
              $region69: #{tpu_custom_call.1} parent=63 // loop_footer
                %s299 = sadd.s32 1, %s295
              $region70: #{tpu_custom_call.1} parent=63 // loop_footer_branch
                %294 = sbr.rel target = $region66
              $region71: #{tpu_custom_call.1} parent=63 // loop_exit
                _
            $region64: #{tpu_custom_call.1} parent=55 // pred_fallthru
              _
          $region56: #{tpu_custom_call.1} parent=51 // pred_fallthru
            _
          %458 = vnop
        $region52: #{tpu_custom_call.1} parent=47 // pred_fallthru
          _
      $region48: #{tpu_custom_call.1} parent=5 // pred_fallthru
        _
      %p459 = scmp.le.s32.totalorder 1, %s15
      %p460 = scmp.lt.s32.totalorder %s15, 3
      %p461 = pnand %p459, %p460
      %p462 = pneg %p461
      // Predicated region
      $region87: #{tpu_custom_call.1} parent=5 // pred_check
        _
      $region88: #{tpu_custom_call.1} parent=5 // pred_check_branch
        %464 = sbr.rel (%p461) target = $region90
      $region89: #{tpu_custom_call.1} parent=5 // pred_region
        %s465 = ssub.s32 %s15, 1
        %s466 = sand.u32 %s28, 1
        %s467 = sand.u32 %s28, 1
        %s468 = smul.addr %s467, 288
        %s469 = scalar_lea.vmem [#allocation2], %s468
        // Predicated region
        $region91: #{tpu_custom_call.1} parent=89 // pred_check
          %p470 = pneg %p41
        $region92: #{tpu_custom_call.1} parent=89 // pred_check_branch
          %472 = sbr.rel (%p470) target = $region94
        $region93: #{tpu_custom_call.1} parent=89 // pred_region
          _
        $region94: #{tpu_custom_call.1} parent=89 // pred_fallthru
          _
        %s473 = sand.u32 %s28, 1
        %s474 = sand.u32 %s28, 1
        %s475 = smul.addr %s474, 288
        %s476 = scalar_lea.vmem [#allocation2], %s475
        %p477 = pneg %p41
        %p478 = pneg %p38
        %p479 = pneg %p62
        %p480 = pneg %p59
        %p481 = pneg %p83
        %p482 = pneg %p80
        %p483 = pneg %p104
        %p484 = pneg %p101
        %p485 = pneg %p125
        %p486 = pneg %p122
        %p487 = pneg %p146
        %p488 = pneg %p143
        %p489 = pneg %p167
        %p490 = pneg %p164
        %p491 = pneg %p188
        %p492 = pneg %p185
        %p493 = pneg %p209
        %p494 = pneg %p206
        %p495 = pneg %p235
        %p496 = pneg %p232
        %p497 = scmp.lt.s32.totalorder %s20, 1
        %s498 = scalar_select %p497, %s20, 1
        %s499 = smul.addr %s498, 8
        %s500 = scalar_lea.vmem %s9, %s499
        %p501 = scmp.lt.s32.totalorder %s20, 1
        %s502 = scalar_select %p501, %s20, 1
        %s503 = smul.addr %s502, 8
        %s504 = scalar_lea.vmem %s9, %s503
        %v505 = vld [vmem:[%s469] sm:$0xff]
        %v506 = vld [vmem:[%s469 + $0x8] sm:$0xff]
        %v507 = vld [vmem:[%s469 + $0x10] sm:$0xff]
        %v508 = vld [vmem:[%s469 + $0x18] sm:$0xff]
        %v509 = vld [vmem:[%s469 + $0x20] sm:$0xff]
        %v510 = vld [vmem:[%s469 + $0x28] sm:$0xff]
        %v511 = vld [vmem:[%s469 + $0x30] sm:$0xff]
        %v512 = vld [vmem:[%s469 + $0x38] sm:$0xff]
        %v513 = vld [vmem:[%s469 + $0x40] sm:$0xff]
        %v514 = vld [vmem:[%s469 + $0x48] sm:$0xff]
        %v515 = vld [vmem:[%s469 + $0x50] sm:$0xff]
        %v516 = vld [vmem:[%s469 + $0x58] sm:$0xff]
        %v517 = vld [vmem:[%s469 + $0x60] sm:$0xff]
        %v518 = vld [vmem:[%s469 + $0x68] sm:$0xff]
        %v519 = vld [vmem:[%s469 + $0x70] sm:$0xff]
        %v520 = vld [vmem:[%s469 + $0x78] sm:$0xff]
        %v521 = vld [vmem:[%s469 + $0x80] sm:$0xff]
        %v522 = vld [vmem:[%s469 + $0x88] sm:$0xff]
        %v523 = vld [vmem:[%s469 + $0x90] sm:$0xff]
        %v524 = vld [vmem:[%s469 + $0x98] sm:$0xff]
        %v525 = vld [vmem:[%s469 + $0xa0] sm:$0xff]
        %v526 = vld [vmem:[%s469 + $0xa8] sm:$0xff]
        %v527 = vld [vmem:[%s469 + $0xb0] sm:$0xff]
        %v528 = vld [vmem:[%s469 + $0xb8] sm:$0xff]
        %v529 = vld [vmem:[%s469 + $0xc0] sm:$0xff]
        %v530 = vld [vmem:[%s469 + $0xc8] sm:$0xff]
        %v531 = vld [vmem:[%s469 + $0xd0] sm:$0xff]
        %v532 = vld [vmem:[%s469 + $0xd8] sm:$0xff]
        %v533 = vld [vmem:[%s469 + $0xe0] sm:$0xff]
        %v534 = vld [vmem:[%s469 + $0xe8] sm:$0xff]
        %v535 = vld [vmem:[%s469 + $0xf0] sm:$0xff]
        %v536 = vld [vmem:[%s469 + $0xf8] sm:$0xff]
        %v537 = vld [vmem:[%s469 + $0x100] sm:$0xff]
        %v538 = vld [vmem:[%s469 + $0x108] sm:$0xff]
        %v539 = vld [vmem:[%s469 + $0x110] sm:$0xff]
        %v540 = vld [vmem:[%s469 + $0x118] sm:$0xff]
        %v541 = vld [vmem:[%s1] sm:$0xff]
        %v542 = vld [vmem:[%s1 + $0x8] sm:$0xff]
        %s543 = scalar_lea.vmem %s1, 16
        %v544 = vld [vmem:[%s543] sm:$0xff]
        %v545 = vld [vmem:[%s543 + $0x8] sm:$0xff]
        %vm546 = vcmask 64512
        %v548 = vsel %vm546, %v506, 0
        %v551 = vsel %vm546, %v507, 0
        %v554 = vsel %vm546, %v508, 0
        %v557 = vsel %vm546, %v509, 0
        %v560 = vsel %vm546, %v510, 0
        %v563 = vsel %vm546, %v511, 0
        %v566 = vsel %vm546, %v512, 0
        %v569 = vsel %vm546, %v513, 0
        %v572 = vsel %vm546, %v514, 0
        %v575 = vsel %vm546, %v515, 0
        %v578 = vsel %vm546, %v516, 0
        %v581 = vsel %vm546, %v517, 0
        %v584 = vsel %vm546, %v518, 0
        %v587 = vsel %vm546, %v519, 0
        %v590 = vsel %vm546, %v520, 0
        %v593 = vsel %vm546, %v521, 0
        %v596 = vsel %vm546, %v522, 0
        %v599 = vsel %vm546, %v523, 0
        %v602 = vsel %vm546, %v524, 0
        %v605 = vsel %vm546, %v525, 0
        %v608 = vsel %vm546, %v526, 0
        %v611 = vsel %vm546, %v527, 0
        %v614 = vsel %vm546, %v528, 0
        %v617 = vsel %vm546, %v529, 0
        %v620 = vsel %vm546, %v530, 0
        %v623 = vsel %vm546, %v531, 0
        %v626 = vsel %vm546, %v532, 0
        %v629 = vsel %vm546, %v533, 0
        %v632 = vsel %vm546, %v534, 0
        %v635 = vsel %vm546, %v535, 0
        %v638 = vsel %vm546, %v536, 0
        %v641 = vsel %vm546, %v537, 0
        %643 = vmatprep.subr.mxu0 %v545
        %644 = vmatpush1.msra.mxu0 %v544
        %645 = vmatprep.subr.mxu0 0.0
        %646 = vmatpush1.msra.mxu0 0.0
        %647 = vmatprep.subr.mxu0 0.0
        %648 = vmatpush1.msra.mxu0 0.0
        %649 = vmatprep.subr.mxu0 0.0
        %650 = vmatpush1.msra.mxu0 0.0
        %651 = vmatprep.subr.mxu0 0.0
        %652 = vmatpush1.msra.mxu0 0.0
        %653 = vmatprep.subr.mxu0 0.0
        %654 = vmatpush1.msra.mxu0 0.0
        %655 = vmatprep.subr.mxu0 0.0
        %656 = vmatpush1.msra.mxu0 0.0
        %657 = vmatprep.subr.mxu0 0.0
        %658 = vmatpush1.msra.mxu0 0.0
        %659 = vmatprep.subr.mxu0 0.0
        %660 = vmatpush1.msra.mxu0 0.0
        %661 = vmatprep.subr.mxu0 0.0
        %662 = vmatpush1.msra.mxu0 0.0
        %663 = vmatprep.subr.mxu0 0.0
        %664 = vmatpush1.msra.mxu0 0.0
        %665 = vmatprep.subr.mxu0 0.0
        %666 = vmatpush1.msra.mxu0 0.0
        %667 = vmatprep.subr.mxu0 0.0
        %668 = vmatpush1.msra.mxu0 0.0
        %669 = vmatprep.subr.mxu0 0.0
        %670 = vmatpush1.msra.mxu0 0.0
        %671 = vmatprep.subr.mxu0 0.0
        %672 = vmatpush1.msra.mxu0 0.0
        %673 = vmatprep.subr.mxu0 0.0
        %674 = vmatpush1.msra.mxu0 0.0
        %675 = vmatprep.subr.mxu0 0.0
        %676 = vmatpush1.msra.mxu0 0.0
        %677 = vmatprep.subr.mxu0 0.0
        %678 = vmatpush1.msra.mxu0 0.0
        %679 = vmatprep.subr.mxu0 0.0
        %680 = vmatpush1.msra.mxu0 0.0
        %681 = vmatprep.subr.mxu0 0.0
        %682 = vmatpush1.msra.mxu0 0.0
        %683 = vmatprep.subr.mxu0 0.0
        %684 = vmatpush1.msra.mxu0 0.0
        %685 = vmatprep.subr.mxu0 0.0
        %686 = vmatpush1.msra.mxu0 0.0
        %687 = vmatprep.subr.mxu0 0.0
        %688 = vmatpush1.msra.mxu0 0.0
        %689 = vmatprep.subr.mxu0 0.0
        %690 = vmatpush1.msra.mxu0 0.0
        %691 = vmatprep.subr.mxu0 0.0
        %692 = vmatpush1.msra.mxu0 0.0
        %693 = vmatprep.subr.mxu0 0.0
        %694 = vmatpush1.msra.mxu0 0.0
        %695 = vmatprep.subr.mxu0 0.0
        %696 = vmatpush1.msra.mxu0 0.0
        %697 = vmatprep.subr.mxu0 0.0
        %698 = vmatpush1.msra.mxu0 0.0
        %699 = vmatprep.subr.mxu0 0.0
        %700 = vmatpush1.msra.mxu0 0.0
        %701 = vmatprep.subr.mxu0 0.0
        %702 = vmatpush1.msra.mxu0 0.0
        %703 = vmatprep.subr.mxu0 0.0
        %704 = vmatpush1.msra.mxu0 0.0
        %705 = vmatprep.subr.mxu0 0.0
        %706 = vmatpush1.msra.mxu0 0.0
        %707 = vmatprep.mubr.f32.mxu0 0.0
        %708 = vmatmul.mubr.f32.gmra.mrb[0].mxu0 %v548
        %v709 = vpop.f32.mrb[0].mxu0
        %v710 = vadd.f32 0.0, %v709
        %v711 = vpop.f32.mrb[0].mxu0
        %v712 = vadd.f32 0.0, %v711
        %713 = vmatprep.mubr.f32.mxu0 0.0
        %714 = vmatmul.mubr.f32.gmra.mrb[0].mxu0 %v551
        %v715 = vpop.f32.mrb[0].mxu0
        %v716 = vadd.f32 0.0, %v715
        %v717 = vpop.f32.mrb[0].mxu0
        %v718 = vadd.f32 0.0, %v717
        %719 = vmatprep.mubr.f32.mxu0 0.0
        %720 = vmatmul.mubr.f32.gmra.mrb[0].mxu0 %v554
        %v721 = vpop.f32.mrb[0].mxu0
        %v722 = vadd.f32 0.0, %v721
        %v723 = vpop.f32.mrb[0].mxu0
        %v724 = vadd.f32 0.0, %v723
        %725 = vmatprep.mubr.f32.mxu0 0.0
        %726 = vmatmul.mubr.f32.gmra.mrb[0].mxu0 %v557
        %v727 = vpop.f32.mrb[0].mxu0
        %v728 = vadd.f32 0.0, %v727
        %v729 = vpop.f32.mrb[0].mxu0
        %v730 = vadd.f32 0.0, %v729
        %731 = vmatprep.mubr.f32.mxu0 0.0
        %732 = vmatmul.mubr.f32.gmra.mrb[0].mxu0 %v560
        %v733 = vpop.f32.mrb[0].mxu0
        %v734 = vadd.f32 0.0, %v733
        %v735 = vpop.f32.mrb[0].mxu0
        %v736 = vadd.f32 0.0, %v735
        %737 = vmatprep.mubr.f32.mxu0 0.0
        %738 = vmatmul.mubr.f32.gmra.mrb[0].mxu0 %v563
        %v739 = vpop.f32.mrb[0].mxu0
        %v740 = vadd.f32 0.0, %v739
        %v741 = vpop.f32.mrb[0].mxu0
        %v742 = vadd.f32 0.0, %v741
        %743 = vmatprep.mubr.f32.mxu0 0.0
        %744 = vmatmul.mubr.f32.gmra.mrb[0].mxu0 %v566
        %v745 = vpop.f32.mrb[0].mxu0
        %v746 = vadd.f32 0.0, %v745
        %v747 = vpop.f32.mrb[0].mxu0
        %v748 = vadd.f32 0.0, %v747
        %749 = vmatprep.mubr.f32.mxu0 0.0
        %750 = vmatmul.mubr.f32.gmra.mrb[0].mxu0 %v569
        %v751 = vpop.f32.mrb[0].mxu0
        %v752 = vadd.f32 0.0, %v751
        %v753 = vpop.f32.mrb[0].mxu0
        %v754 = vadd.f32 0.0, %v753
        %755 = vmatprep.mubr.f32.mxu0 0.0
        %756 = vmatmul.mubr.f32.gmra.mrb[0].mxu0 %v572
        %v757 = vpop.f32.mrb[0].mxu0
        %v758 = vadd.f32 0.0, %v757
        %v759 = vpop.f32.mrb[0].mxu0
        %v760 = vadd.f32 0.0, %v759
        %761 = vmatprep.mubr.f32.mxu0 0.0
        %762 = vmatmul.mubr.f32.gmra.mrb[0].mxu0 %v575
        %v763 = vpop.f32.mrb[0].mxu0
        %v764 = vadd.f32 0.0, %v763
        %v765 = vpop.f32.mrb[0].mxu0
        %v766 = vadd.f32 0.0, %v765
        %767 = vmatprep.mubr.f32.mxu0 0.0
        %768 = vmatmul.mubr.f32.gmra.mrb[0].mxu0 %v578
        %v769 = vpop.f32.mrb[0].mxu0
        %v770 = vadd.f32 0.0, %v769
        %v771 = vpop.f32.mrb[0].mxu0
        %v772 = vadd.f32 0.0, %v771
        %773 = vmatprep.mubr.f32.mxu0 0.0
        %774 = vmatmul.mubr.f32.gmra.mrb[0].mxu0 %v581
        %v775 = vpop.f32.mrb[0].mxu0
        %v776 = vadd.f32 0.0, %v775
        %v777 = vpop.f32.mrb[0].mxu0
        %v778 = vadd.f32 0.0, %v777
        %779 = vmatprep.mubr.f32.mxu0 0.0
        %780 = vmatmul.mubr.f32.gmra.mrb[0].mxu0 %v584
        %v781 = vpop.f32.mrb[0].mxu0
        %v782 = vadd.f32 0.0, %v781
        %v783 = vpop.f32.mrb[0].mxu0
        %v784 = vadd.f32 0.0, %v783
        %785 = vmatprep.mubr.f32.mxu0 0.0
        %786 = vmatmul.mubr.f32.gmra.mrb[0].mxu0 %v587
        %v787 = vpop.f32.mrb[0].mxu0
        %v788 = vadd.f32 0.0, %v787
        %v789 = vpop.f32.mrb[0].mxu0
        %v790 = vadd.f32 0.0, %v789
        %791 = vmatprep.mubr.f32.mxu0 0.0
        %792 = vmatmul.mubr.f32.gmra.mrb[0].mxu0 %v590
        %v793 = vpop.f32.mrb[0].mxu0
        %v794 = vadd.f32 0.0, %v793
        %v795 = vpop.f32.mrb[0].mxu0
        %v796 = vadd.f32 0.0, %v795
        %797 = vmatprep.mubr.f32.mxu0 0.0
        %798 = vmatmul.mubr.f32.gmra.mrb[0].mxu0 %v593
        %v799 = vpop.f32.mrb[0].mxu0
        %v800 = vadd.f32 0.0, %v799
        %v801 = vpop.f32.mrb[0].mxu0
        %v802 = vadd.f32 0.0, %v801
        %803 = vmatprep.mubr.f32.mxu0 0.0
        %804 = vmatmul.mubr.f32.gmra.mrb[0].mxu0 %v596
        %v805 = vpop.f32.mrb[0].mxu0
        %v806 = vadd.f32 0.0, %v805
        %v807 = vpop.f32.mrb[0].mxu0
        %v808 = vadd.f32 0.0, %v807
        %809 = vmatprep.mubr.f32.mxu0 0.0
        %810 = vmatmul.mubr.f32.gmra.mrb[0].mxu0 %v599
        %v811 = vpop.f32.mrb[0].mxu0
        %v812 = vadd.f32 0.0, %v811
        %v813 = vpop.f32.mrb[0].mxu0
        %v814 = vadd.f32 0.0, %v813
        %815 = vmatprep.mubr.f32.mxu0 0.0
        %816 = vmatmul.mubr.f32.gmra.mrb[0].mxu0 %v602
        %v817 = vpop.f32.mrb[0].mxu0
        %v818 = vadd.f32 0.0, %v817
        %v819 = vpop.f32.mrb[0].mxu0
        %v820 = vadd.f32 0.0, %v819
        %821 = vmatprep.mubr.f32.mxu0 0.0
        %822 = vmatmul.mubr.f32.gmra.mrb[0].mxu0 %v605
        %v823 = vpop.f32.mrb[0].mxu0
        %v824 = vadd.f32 0.0, %v823
        %v825 = vpop.f32.mrb[0].mxu0
        %v826 = vadd.f32 0.0, %v825
        %827 = vmatprep.mubr.f32.mxu0 0.0
        %828 = vmatmul.mubr.f32.gmra.mrb[0].mxu0 %v608
        %v829 = vpop.f32.mrb[0].mxu0
        %v830 = vadd.f32 0.0, %v829
        %v831 = vpop.f32.mrb[0].mxu0
        %v832 = vadd.f32 0.0, %v831
        %833 = vmatprep.mubr.f32.mxu0 0.0
        %834 = vmatmul.mubr.f32.gmra.mrb[0].mxu0 %v611
        %v835 = vpop.f32.mrb[0].mxu0
        %v836 = vadd.f32 0.0, %v835
        %v837 = vpop.f32.mrb[0].mxu0
        %v838 = vadd.f32 0.0, %v837
        %839 = vmatprep.mubr.f32.mxu0 0.0
        %840 = vmatmul.mubr.f32.gmra.mrb[0].mxu0 %v614
        %v841 = vpop.f32.mrb[0].mxu0
        %v842 = vadd.f32 0.0, %v841
        %v843 = vpop.f32.mrb[0].mxu0
        %v844 = vadd.f32 0.0, %v843
        %845 = vmatprep.mubr.f32.mxu0 0.0
        %846 = vmatmul.mubr.f32.gmra.mrb[0].mxu0 %v617
        %v847 = vpop.f32.mrb[0].mxu0
        %v848 = vadd.f32 0.0, %v847
        %v849 = vpop.f32.mrb[0].mxu0
        %v850 = vadd.f32 0.0, %v849
        %851 = vmatprep.mubr.f32.mxu0 0.0
        %852 = vmatmul.mubr.f32.gmra.mrb[0].mxu0 %v620
        %v853 = vpop.f32.mrb[0].mxu0
        %v854 = vadd.f32 0.0, %v853
        %v855 = vpop.f32.mrb[0].mxu0
        %v856 = vadd.f32 0.0, %v855
        %857 = vmatprep.mubr.f32.mxu0 0.0
        %858 = vmatmul.mubr.f32.gmra.mrb[0].mxu0 %v623
        %v859 = vpop.f32.mrb[0].mxu0
        %v860 = vadd.f32 0.0, %v859
        %v861 = vpop.f32.mrb[0].mxu0
        %v862 = vadd.f32 0.0, %v861
        %863 = vmatprep.mubr.f32.mxu0 0.0
        %864 = vmatmul.mubr.f32.gmra.mrb[0].mxu0 %v626
        %v865 = vpop.f32.mrb[0].mxu0
        %v866 = vadd.f32 0.0, %v865
        %v867 = vpop.f32.mrb[0].mxu0
        %v868 = vadd.f32 0.0, %v867
        %869 = vmatprep.mubr.f32.mxu0 0.0
        %870 = vmatmul.mubr.f32.gmra.mrb[0].mxu0 %v629
        %v871 = vpop.f32.mrb[0].mxu0
        %v872 = vadd.f32 0.0, %v871
        %v873 = vpop.f32.mrb[0].mxu0
        %v874 = vadd.f32 0.0, %v873
        %875 = vmatprep.mubr.f32.mxu0 0.0
        %876 = vmatmul.mubr.f32.gmra.mrb[0].mxu0 %v632
        %v877 = vpop.f32.mrb[0].mxu0
        %v878 = vadd.f32 0.0, %v877
        %v879 = vpop.f32.mrb[0].mxu0
        %v880 = vadd.f32 0.0, %v879
        %881 = vmatprep.mubr.f32.mxu0 0.0
        %882 = vmatmul.mubr.f32.gmra.mrb[0].mxu0 %v635
        %v883 = vpop.f32.mrb[0].mxu0
        %v884 = vadd.f32 0.0, %v883
        %v885 = vpop.f32.mrb[0].mxu0
        %v886 = vadd.f32 0.0, %v885
        %887 = vmatprep.mubr.f32.mxu0 0.0
        %888 = vmatmul.mubr.f32.gmra.mrb[0].mxu0 %v638
        %v889 = vpop.f32.mrb[0].mxu0
        %v890 = vadd.f32 0.0, %v889
        %v891 = vpop.f32.mrb[0].mxu0
        %v892 = vadd.f32 0.0, %v891
        %893 = vmatprep.mubr.f32.mxu0 0.0
        %894 = vmatmul.mubr.f32.gmra.mrb[0].mxu0 %v641
        %v895 = vpop.f32.mrb[0].mxu0
        %v896 = vadd.f32 0.0, %v895
        %v897 = vpop.f32.mrb[0].mxu0
        %v898 = vadd.f32 0.0, %v897
        %899 = vdwg.mxu0
        %v901 = vsel %vm546, %v505, 0
        %903 = vmatprep.subr.mxu0 %v542
        %904 = vmatpush1.msra.mxu0 %v541
        %905 = vmatprep.subr.mxu0 0.0
        %906 = vmatpush1.msra.mxu0 0.0
        %907 = vmatprep.subr.mxu0 0.0
        %908 = vmatpush1.msra.mxu0 0.0
        %909 = vmatprep.subr.mxu0 0.0
        %910 = vmatpush1.msra.mxu0 0.0
        %911 = vmatprep.subr.mxu0 0.0
        %912 = vmatpush1.msra.mxu0 0.0
        %913 = vmatprep.subr.mxu0 0.0
        %914 = vmatpush1.msra.mxu0 0.0
        %915 = vmatprep.subr.mxu0 0.0
        %916 = vmatpush1.msra.mxu0 0.0
        %917 = vmatprep.subr.mxu0 0.0
        %918 = vmatpush1.msra.mxu0 0.0
        %919 = vmatprep.subr.mxu0 0.0
        %920 = vmatpush1.msra.mxu0 0.0
        %921 = vmatprep.subr.mxu0 0.0
        %922 = vmatpush1.msra.mxu0 0.0
        %923 = vmatprep.subr.mxu0 0.0
        %924 = vmatpush1.msra.mxu0 0.0
        %925 = vmatprep.subr.mxu0 0.0
        %926 = vmatpush1.msra.mxu0 0.0
        %927 = vmatprep.subr.mxu0 0.0
        %928 = vmatpush1.msra.mxu0 0.0
        %929 = vmatprep.subr.mxu0 0.0
        %930 = vmatpush1.msra.mxu0 0.0
        %931 = vmatprep.subr.mxu0 0.0
        %932 = vmatpush1.msra.mxu0 0.0
        %933 = vmatprep.subr.mxu0 0.0
        %934 = vmatpush1.msra.mxu0 0.0
        %935 = vmatprep.subr.mxu0 0.0
        %936 = vmatpush1.msra.mxu0 0.0
        %937 = vmatprep.subr.mxu0 0.0
        %938 = vmatpush1.msra.mxu0 0.0
        %939 = vmatprep.subr.mxu0 0.0
        %940 = vmatpush1.msra.mxu0 0.0
        %941 = vmatprep.subr.mxu0 0.0
        %942 = vmatpush1.msra.mxu0 0.0
        %943 = vmatprep.subr.mxu0 0.0
        %944 = vmatpush1.msra.mxu0 0.0
        %945 = vmatprep.subr.mxu0 0.0
        %946 = vmatpush1.msra.mxu0 0.0
        %947 = vmatprep.subr.mxu0 0.0
        %948 = vmatpush1.msra.mxu0 0.0
        %949 = vmatprep.subr.mxu0 0.0
        %950 = vmatpush1.msra.mxu0 0.0
        %951 = vmatprep.subr.mxu0 0.0
        %952 = vmatpush1.msra.mxu0 0.0
        %953 = vmatprep.subr.mxu0 0.0
        %954 = vmatpush1.msra.mxu0 0.0
        %955 = vmatprep.subr.mxu0 0.0
        %956 = vmatpush1.msra.mxu0 0.0
        %957 = vmatprep.subr.mxu0 0.0
        %958 = vmatpush1.msra.mxu0 0.0
        %959 = vmatprep.subr.mxu0 0.0
        %960 = vmatpush1.msra.mxu0 0.0
        %961 = vmatprep.subr.mxu0 0.0
        %962 = vmatpush1.msra.mxu0 0.0
        %963 = vmatprep.subr.mxu0 0.0
        %964 = vmatpush1.msra.mxu0 0.0
        %965 = vmatprep.subr.mxu0 0.0
        %966 = vmatpush1.msra.mxu0 0.0
        %967 = vmatprep.mubr.f32.mxu0 0.0
        %968 = vmatmul.mubr.f32.gmra.mrb[0].mxu0 %v901
        %v969 = vpop.f32.mrb[0].mxu0
        %v970 = vadd.f32 %v710, %v969
        %v971 = vpop.f32.mrb[0].mxu0
        %v972 = vadd.f32 %v712, %v971
        %973 = vmatprep.mubr.f32.mxu0 0.0
        %974 = vmatmul.mubr.f32.gmra.mrb[0].mxu0 %v548
        %v975 = vpop.f32.mrb[0].mxu0
        %v976 = vadd.f32 %v716, %v975
        %v977 = vpop.f32.mrb[0].mxu0
        %v978 = vadd.f32 %v718, %v977
        %979 = vmatprep.mubr.f32.mxu0 0.0
        %980 = vmatmul.mubr.f32.gmra.mrb[0].mxu0 %v551
        %v981 = vpop.f32.mrb[0].mxu0
        %v982 = vadd.f32 %v722, %v981
        %v983 = vpop.f32.mrb[0].mxu0
        %v984 = vadd.f32 %v724, %v983
        %985 = vmatprep.mubr.f32.mxu0 0.0
        %986 = vmatmul.mubr.f32.gmra.mrb[0].mxu0 %v554
        %v987 = vpop.f32.mrb[0].mxu0
        %v988 = vadd.f32 %v728, %v987
        %v989 = vpop.f32.mrb[0].mxu0
        %v990 = vadd.f32 %v730, %v989
        %991 = vmatprep.mubr.f32.mxu0 0.0
        %992 = vmatmul.mubr.f32.gmra.mrb[0].mxu0 %v557
        %v993 = vpop.f32.mrb[0].mxu0
        %v994 = vadd.f32 %v734, %v993
        %v995 = vpop.f32.mrb[0].mxu0
        %v996 = vadd.f32 %v736, %v995
        %997 = vmatprep.mubr.f32.mxu0 0.0
        %998 = vmatmul.mubr.f32.gmra.mrb[0].mxu0 %v560
        %v999 = vpop.f32.mrb[0].mxu0
        %v1000 = vadd.f32 %v740, %v999
        %v1001 = vpop.f32.mrb[0].mxu0
        %v1002 = vadd.f32 %v742, %v1001
        %1003 = vmatprep.mubr.f32.mxu0 0.0
        %1004 = vmatmul.mubr.f32.gmra.mrb[0].mxu0 %v563
        %v1005 = vpop.f32.mrb[0].mxu0
        %v1006 = vadd.f32 %v746, %v1005
        %v1007 = vpop.f32.mrb[0].mxu0
        %v1008 = vadd.f32 %v748, %v1007
        %1009 = vmatprep.mubr.f32.mxu0 0.0
        %1010 = vmatmul.mubr.f32.gmra.mrb[0].mxu0 %v566
        %v1011 = vpop.f32.mrb[0].mxu0
        %v1012 = vadd.f32 %v752, %v1011
        %v1013 = vpop.f32.mrb[0].mxu0
        %v1014 = vadd.f32 %v754, %v1013
        %1015 = vmatprep.mubr.f32.mxu0 0.0
        %1016 = vmatmul.mubr.f32.gmra.mrb[0].mxu0 %v569
        %v1017 = vpop.f32.mrb[0].mxu0
        %v1018 = vadd.f32 %v758, %v1017
        %v1019 = vpop.f32.mrb[0].mxu0
        %v1020 = vadd.f32 %v760, %v1019
        %1021 = vmatprep.mubr.f32.mxu0 0.0
        %1022 = vmatmul.mubr.f32.gmra.mrb[0].mxu0 %v572
        %v1023 = vpop.f32.mrb[0].mxu0
        %v1024 = vadd.f32 %v764, %v1023
        %v1025 = vpop.f32.mrb[0].mxu0
        %v1026 = vadd.f32 %v766, %v1025
        %1027 = vmatprep.mubr.f32.mxu0 0.0
        %1028 = vmatmul.mubr.f32.gmra.mrb[0].mxu0 %v575
        %v1029 = vpop.f32.mrb[0].mxu0
        %v1030 = vadd.f32 %v770, %v1029
        %v1031 = vpop.f32.mrb[0].mxu0
        %v1032 = vadd.f32 %v772, %v1031
        %1033 = vmatprep.mubr.f32.mxu0 0.0
        %1034 = vmatmul.mubr.f32.gmra.mrb[0].mxu0 %v578
        %v1035 = vpop.f32.mrb[0].mxu0
        %v1036 = vadd.f32 %v776, %v1035
        %v1037 = vpop.f32.mrb[0].mxu0
        %v1038 = vadd.f32 %v778, %v1037
        %1039 = vmatprep.mubr.f32.mxu0 0.0
        %1040 = vmatmul.mubr.f32.gmra.mrb[0].mxu0 %v581
        %v1041 = vpop.f32.mrb[0].mxu0
        %v1042 = vadd.f32 %v782, %v1041
        %v1043 = vpop.f32.mrb[0].mxu0
        %v1044 = vadd.f32 %v784, %v1043
        %1045 = vmatprep.mubr.f32.mxu0 0.0
        %1046 = vmatmul.mubr.f32.gmra.mrb[0].mxu0 %v584
        %v1047 = vpop.f32.mrb[0].mxu0
        %v1048 = vadd.f32 %v788, %v1047
        %v1049 = vpop.f32.mrb[0].mxu0
        %v1050 = vadd.f32 %v790, %v1049
        %1051 = vmatprep.mubr.f32.mxu0 0.0
        %1052 = vmatmul.mubr.f32.gmra.mrb[0].mxu0 %v587
        %v1053 = vpop.f32.mrb[0].mxu0
        %v1054 = vadd.f32 %v794, %v1053
        %v1055 = vpop.f32.mrb[0].mxu0
        %v1056 = vadd.f32 %v796, %v1055
        %1057 = vmatprep.mubr.f32.mxu0 0.0
        %1058 = vmatmul.mubr.f32.gmra.mrb[0].mxu0 %v590
        %v1059 = vpop.f32.mrb[0].mxu0
        %v1060 = vadd.f32 %v800, %v1059
        %v1061 = vpop.f32.mrb[0].mxu0
        %v1062 = vadd.f32 %v802, %v1061
        %1063 = vmatprep.mubr.f32.mxu0 0.0
        %1064 = vmatmul.mubr.f32.gmra.mrb[0].mxu0 %v593
        %v1065 = vpop.f32.mrb[0].mxu0
        %v1066 = vadd.f32 %v806, %v1065
        %v1067 = vpop.f32.mrb[0].mxu0
        %v1068 = vadd.f32 %v808, %v1067
        %1069 = vmatprep.mubr.f32.mxu0 0.0
        %1070 = vmatmul.mubr.f32.gmra.mrb[0].mxu0 %v596
        %v1071 = vpop.f32.mrb[0].mxu0
        %v1072 = vadd.f32 %v812, %v1071
        %v1073 = vpop.f32.mrb[0].mxu0
        %v1074 = vadd.f32 %v814, %v1073
        %1075 = vmatprep.mubr.f32.mxu0 0.0
        %1076 = vmatmul.mubr.f32.gmra.mrb[0].mxu0 %v599
        %v1077 = vpop.f32.mrb[0].mxu0
        %v1078 = vadd.f32 %v818, %v1077
        %v1079 = vpop.f32.mrb[0].mxu0
        %v1080 = vadd.f32 %v820, %v1079
        %1081 = vmatprep.mubr.f32.mxu0 0.0
        %1082 = vmatmul.mubr.f32.gmra.mrb[0].mxu0 %v602
        %v1083 = vpop.f32.mrb[0].mxu0
        %v1084 = vadd.f32 %v824, %v1083
        %v1085 = vpop.f32.mrb[0].mxu0
        %v1086 = vadd.f32 %v826, %v1085
        %1087 = vmatprep.mubr.f32.mxu0 0.0
        %1088 = vmatmul.mubr.f32.gmra.mrb[0].mxu0 %v605
        %v1089 = vpop.f32.mrb[0].mxu0
        %v1090 = vadd.f32 %v830, %v1089
        %v1091 = vpop.f32.mrb[0].mxu0
        %v1092 = vadd.f32 %v832, %v1091
        %1093 = vmatprep.mubr.f32.mxu0 0.0
        %1094 = vmatmul.mubr.f32.gmra.mrb[0].mxu0 %v608
        %v1095 = vpop.f32.mrb[0].mxu0
        %v1096 = vadd.f32 %v836, %v1095
        %v1097 = vpop.f32.mrb[0].mxu0
        %v1098 = vadd.f32 %v838, %v1097
        %1099 = vmatprep.mubr.f32.mxu0 0.0
        %1100 = vmatmul.mubr.f32.gmra.mrb[0].mxu0 %v611
        %v1101 = vpop.f32.mrb[0].mxu0
        %v1102 = vadd.f32 %v842, %v1101
        %v1103 = vpop.f32.mrb[0].mxu0
        %v1104 = vadd.f32 %v844, %v1103
        %1105 = vmatprep.mubr.f32.mxu0 0.0
        %1106 = vmatmul.mubr.f32.gmra.mrb[0].mxu0 %v614
        %v1107 = vpop.f32.mrb[0].mxu0
        %v1108 = vadd.f32 %v848, %v1107
        %v1109 = vpop.f32.mrb[0].mxu0
        %v1110 = vadd.f32 %v850, %v1109
        %1111 = vmatprep.mubr.f32.mxu0 0.0
        %1112 = vmatmul.mubr.f32.gmra.mrb[0].mxu0 %v617
        %v1113 = vpop.f32.mrb[0].mxu0
        %v1114 = vadd.f32 %v854, %v1113
        %v1115 = vpop.f32.mrb[0].mxu0
        %v1116 = vadd.f32 %v856, %v1115
        %1117 = vmatprep.mubr.f32.mxu0 0.0
        %1118 = vmatmul.mubr.f32.gmra.mrb[0].mxu0 %v620
        %v1119 = vpop.f32.mrb[0].mxu0
        %v1120 = vadd.f32 %v860, %v1119
        %v1121 = vpop.f32.mrb[0].mxu0
        %v1122 = vadd.f32 %v862, %v1121
        %1123 = vmatprep.mubr.f32.mxu0 0.0
        %1124 = vmatmul.mubr.f32.gmra.mrb[0].mxu0 %v623
        %v1125 = vpop.f32.mrb[0].mxu0
        %v1126 = vadd.f32 %v866, %v1125
        %v1127 = vpop.f32.mrb[0].mxu0
        %v1128 = vadd.f32 %v868, %v1127
        %1129 = vmatprep.mubr.f32.mxu0 0.0
        %1130 = vmatmul.mubr.f32.gmra.mrb[0].mxu0 %v626
        %v1131 = vpop.f32.mrb[0].mxu0
        %v1132 = vadd.f32 %v872, %v1131
        %v1133 = vpop.f32.mrb[0].mxu0
        %v1134 = vadd.f32 %v874, %v1133
        %1135 = vmatprep.mubr.f32.mxu0 0.0
        %1136 = vmatmul.mubr.f32.gmra.mrb[0].mxu0 %v629
        %v1137 = vpop.f32.mrb[0].mxu0
        %v1138 = vadd.f32 %v878, %v1137
        %v1139 = vpop.f32.mrb[0].mxu0
        %v1140 = vadd.f32 %v880, %v1139
        %1141 = vmatprep.mubr.f32.mxu0 0.0
        %1142 = vmatmul.mubr.f32.gmra.mrb[0].mxu0 %v632
        %v1143 = vpop.f32.mrb[0].mxu0
        %v1144 = vadd.f32 %v884, %v1143
        %v1145 = vpop.f32.mrb[0].mxu0
        %v1146 = vadd.f32 %v886, %v1145
        %1147 = vmatprep.mubr.f32.mxu0 0.0
        %1148 = vmatmul.mubr.f32.gmra.mrb[0].mxu0 %v635
        %v1149 = vpop.f32.mrb[0].mxu0
        %v1150 = vadd.f32 %v890, %v1149
        %v1151 = vpop.f32.mrb[0].mxu0
        %v1152 = vadd.f32 %v892, %v1151
        %1153 = vmatprep.mubr.f32.mxu0 0.0
        %1154 = vmatmul.mubr.f32.gmra.mrb[0].mxu0 %v638
        %v1155 = vpop.f32.mrb[0].mxu0
        %v1156 = vadd.f32 %v896, %v1155
        %v1157 = vpop.f32.mrb[0].mxu0
        %v1158 = vadd.f32 %v898, %v1157
        %1159 = vdwg.mxu0
        %s1160 = scalar_lea.vmem %s1, 32
        %v1161 = vld [vmem:[%s1160] sm:$0xff]
        %v1162 = vld [vmem:[%s1160 + $0x8] sm:$0xff]
        %v1164 = vsel %vm546, %v538, 0
        %1166 = vmatprep.subr.mxu0 %v1162
        %1167 = vmatpush1.msra.mxu0 %v1161
        %1168 = vmatprep.subr.mxu0 0.0
        %1169 = vmatpush1.msra.mxu0 0.0
        %1170 = vmatprep.subr.mxu0 0.0
        %1171 = vmatpush1.msra.mxu0 0.0
        %1172 = vmatprep.subr.mxu0 0.0
        %1173 = vmatpush1.msra.mxu0 0.0
        %1174 = vmatprep.subr.mxu0 0.0
        %1175 = vmatpush1.msra.mxu0 0.0
        %1176 = vmatprep.subr.mxu0 0.0
        %1177 = vmatpush1.msra.mxu0 0.0
        %1178 = vmatprep.subr.mxu0 0.0
        %1179 = vmatpush1.msra.mxu0 0.0
        %1180 = vmatprep.subr.mxu0 0.0
        %1181 = vmatpush1.msra.mxu0 0.0
        %1182 = vmatprep.subr.mxu0 0.0
        %1183 = vmatpush1.msra.mxu0 0.0
        %1184 = vmatprep.subr.mxu0 0.0
        %1185 = vmatpush1.msra.mxu0 0.0
        %1186 = vmatprep.subr.mxu0 0.0
        %1187 = vmatpush1.msra.mxu0 0.0
        %1188 = vmatprep.subr.mxu0 0.0
        %1189 = vmatpush1.msra.mxu0 0.0
        %1190 = vmatprep.subr.mxu0 0.0
        %1191 = vmatpush1.msra.mxu0 0.0
        %1192 = vmatprep.subr.mxu0 0.0
        %1193 = vmatpush1.msra.mxu0 0.0
        %1194 = vmatprep.subr.mxu0 0.0
        %1195 = vmatpush1.msra.mxu0 0.0
        %1196 = vmatprep.subr.mxu0 0.0
        %1197 = vmatpush1.msra.mxu0 0.0
        %1198 = vmatprep.subr.mxu0 0.0
        %1199 = vmatpush1.msra.mxu0 0.0
        %1200 = vmatprep.subr.mxu0 0.0
        %1201 = vmatpush1.msra.mxu0 0.0
        %1202 = vmatprep.subr.mxu0 0.0
        %1203 = vmatpush1.msra.mxu0 0.0
        %1204 = vmatprep.subr.mxu0 0.0
        %1205 = vmatpush1.msra.mxu0 0.0
        %1206 = vmatprep.subr.mxu0 0.0
        %1207 = vmatpush1.msra.mxu0 0.0
        %1208 = vmatprep.subr.mxu0 0.0
        %1209 = vmatpush1.msra.mxu0 0.0
        %1210 = vmatprep.subr.mxu0 0.0
        %1211 = vmatpush1.msra.mxu0 0.0
        %1212 = vmatprep.subr.mxu0 0.0
        %1213 = vmatpush1.msra.mxu0 0.0
        %1214 = vmatprep.subr.mxu0 0.0
        %1215 = vmatpush1.msra.mxu0 0.0
        %1216 = vmatprep.subr.mxu0 0.0
        %1217 = vmatpush1.msra.mxu0 0.0
        %1218 = vmatprep.subr.mxu0 0.0
        %1219 = vmatpush1.msra.mxu0 0.0
        %1220 = vmatprep.subr.mxu0 0.0
        %1221 = vmatpush1.msra.mxu0 0.0
        %1222 = vmatprep.subr.mxu0 0.0
        %1223 = vmatpush1.msra.mxu0 0.0
        %1224 = vmatprep.subr.mxu0 0.0
        %1225 = vmatpush1.msra.mxu0 0.0
        %1226 = vmatprep.subr.mxu0 0.0
        %1227 = vmatpush1.msra.mxu0 0.0
        %1228 = vmatprep.subr.mxu0 0.0
        %1229 = vmatpush1.msra.mxu0 0.0
        %1230 = vmatprep.mubr.f32.mxu0 0.0
        %1231 = vmatmul.mubr.f32.gmra.mrb[0].mxu0 %v551
        %v1232 = vpop.f32.mrb[0].mxu0
        %v1233 = vadd.f32 0.0, %v1232
        %v1234 = vpop.f32.mrb[0].mxu0
        %v1235 = vadd.f32 0.0, %v1234
        %1236 = vmatprep.mubr.f32.mxu0 0.0
        %1237 = vmatmul.mubr.f32.gmra.mrb[0].mxu0 %v554
        %v1238 = vpop.f32.mrb[0].mxu0
        %v1239 = vadd.f32 0.0, %v1238
        %v1240 = vpop.f32.mrb[0].mxu0
        %v1241 = vadd.f32 0.0, %v1240
        %1242 = vmatprep.mubr.f32.mxu0 0.0
        %1243 = vmatmul.mubr.f32.gmra.mrb[0].mxu0 %v557
        %v1244 = vpop.f32.mrb[0].mxu0
        %v1245 = vadd.f32 0.0, %v1244
        %v1246 = vpop.f32.mrb[0].mxu0
        %v1247 = vadd.f32 0.0, %v1246
        %1248 = vmatprep.mubr.f32.mxu0 0.0
        %1249 = vmatmul.mubr.f32.gmra.mrb[0].mxu0 %v560
        %v1250 = vpop.f32.mrb[0].mxu0
        %v1251 = vadd.f32 0.0, %v1250
        %v1252 = vpop.f32.mrb[0].mxu0
        %v1253 = vadd.f32 0.0, %v1252
        %1254 = vmatprep.mubr.f32.mxu0 0.0
        %1255 = vmatmul.mubr.f32.gmra.mrb[0].mxu0 %v563
        %v1256 = vpop.f32.mrb[0].mxu0
        %v1257 = vadd.f32 0.0, %v1256
        %v1258 = vpop.f32.mrb[0].mxu0
        %v1259 = vadd.f32 0.0, %v1258
        %1260 = vmatprep.mubr.f32.mxu0 0.0
        %1261 = vmatmul.mubr.f32.gmra.mrb[0].mxu0 %v566
        %v1262 = vpop.f32.mrb[0].mxu0
        %v1263 = vadd.f32 0.0, %v1262
        %v1264 = vpop.f32.mrb[0].mxu0
        %v1265 = vadd.f32 0.0, %v1264
        %1266 = vmatprep.mubr.f32.mxu0 0.0
        %1267 = vmatmul.mubr.f32.gmra.mrb[0].mxu0 %v569
        %v1268 = vpop.f32.mrb[0].mxu0
        %v1269 = vadd.f32 0.0, %v1268
        %v1270 = vpop.f32.mrb[0].mxu0
        %v1271 = vadd.f32 0.0, %v1270
        %1272 = vmatprep.mubr.f32.mxu0 0.0
        %1273 = vmatmul.mubr.f32.gmra.mrb[0].mxu0 %v572
        %v1274 = vpop.f32.mrb[0].mxu0
        %v1275 = vadd.f32 0.0, %v1274
        %v1276 = vpop.f32.mrb[0].mxu0
        %v1277 = vadd.f32 0.0, %v1276
        %1278 = vmatprep.mubr.f32.mxu0 0.0
        %1279 = vmatmul.mubr.f32.gmra.mrb[0].mxu0 %v575
        %v1280 = vpop.f32.mrb[0].mxu0
        %v1281 = vadd.f32 0.0, %v1280
        %v1282 = vpop.f32.mrb[0].mxu0
        %v1283 = vadd.f32 0.0, %v1282
        %1284 = vmatprep.mubr.f32.mxu0 0.0
        %1285 = vmatmul.mubr.f32.gmra.mrb[0].mxu0 %v578
        %v1286 = vpop.f32.mrb[0].mxu0
        %v1287 = vadd.f32 0.0, %v1286
        %v1288 = vpop.f32.mrb[0].mxu0
        %v1289 = vadd.f32 0.0, %v1288
        %1290 = vmatprep.mubr.f32.mxu0 0.0
        %1291 = vmatmul.mubr.f32.gmra.mrb[0].mxu0 %v581
        %v1292 = vpop.f32.mrb[0].mxu0
        %v1293 = vadd.f32 0.0, %v1292
        %v1294 = vpop.f32.mrb[0].mxu0
        %v1295 = vadd.f32 0.0, %v1294
        %1296 = vmatprep.mubr.f32.mxu0 0.0
        %1297 = vmatmul.mubr.f32.gmra.mrb[0].mxu0 %v584
        %v1298 = vpop.f32.mrb[0].mxu0
        %v1299 = vadd.f32 0.0, %v1298
        %v1300 = vpop.f32.mrb[0].mxu0
        %v1301 = vadd.f32 0.0, %v1300
        %1302 = vmatprep.mubr.f32.mxu0 0.0
        %1303 = vmatmul.mubr.f32.gmra.mrb[0].mxu0 %v587
        %v1304 = vpop.f32.mrb[0].mxu0
        %v1305 = vadd.f32 0.0, %v1304
        %v1306 = vpop.f32.mrb[0].mxu0
        %v1307 = vadd.f32 0.0, %v1306
        %1308 = vmatprep.mubr.f32.mxu0 0.0
        %1309 = vmatmul.mubr.f32.gmra.mrb[0].mxu0 %v590
        %v1310 = vpop.f32.mrb[0].mxu0
        %v1311 = vadd.f32 0.0, %v1310
        %v1312 = vpop.f32.mrb[0].mxu0
        %v1313 = vadd.f32 0.0, %v1312
        %1314 = vmatprep.mubr.f32.mxu0 0.0
        %1315 = vmatmul.mubr.f32.gmra.mrb[0].mxu0 %v593
        %v1316 = vpop.f32.mrb[0].mxu0
        %v1317 = vadd.f32 0.0, %v1316
        %v1318 = vpop.f32.mrb[0].mxu0
        %v1319 = vadd.f32 0.0, %v1318
        %1320 = vmatprep.mubr.f32.mxu0 0.0
        %1321 = vmatmul.mubr.f32.gmra.mrb[0].mxu0 %v596
        %v1322 = vpop.f32.mrb[0].mxu0
        %v1323 = vadd.f32 0.0, %v1322
        %v1324 = vpop.f32.mrb[0].mxu0
        %v1325 = vadd.f32 0.0, %v1324
        %1326 = vmatprep.mubr.f32.mxu0 0.0
        %1327 = vmatmul.mubr.f32.gmra.mrb[0].mxu0 %v599
        %v1328 = vpop.f32.mrb[0].mxu0
        %v1329 = vadd.f32 0.0, %v1328
        %v1330 = vpop.f32.mrb[0].mxu0
        %v1331 = vadd.f32 0.0, %v1330
        %1332 = vmatprep.mubr.f32.mxu0 0.0
        %1333 = vmatmul.mubr.f32.gmra.mrb[0].mxu0 %v602
        %v1334 = vpop.f32.mrb[0].mxu0
        %v1335 = vadd.f32 0.0, %v1334
        %v1336 = vpop.f32.mrb[0].mxu0
        %v1337 = vadd.f32 0.0, %v1336
        %1338 = vmatprep.mubr.f32.mxu0 0.0
        %1339 = vmatmul.mubr.f32.gmra.mrb[0].mxu0 %v605
        %v1340 = vpop.f32.mrb[0].mxu0
        %v1341 = vadd.f32 0.0, %v1340
        %v1342 = vpop.f32.mrb[0].mxu0
        %v1343 = vadd.f32 0.0, %v1342
        %1344 = vmatprep.mubr.f32.mxu0 0.0
        %1345 = vmatmul.mubr.f32.gmra.mrb[0].mxu0 %v608
        %v1346 = vpop.f32.mrb[0].mxu0
        %v1347 = vadd.f32 0.0, %v1346
        %v1348 = vpop.f32.mrb[0].mxu0
        %v1349 = vadd.f32 0.0, %v1348
        %1350 = vmatprep.mubr.f32.mxu0 0.0
        %1351 = vmatmul.mubr.f32.gmra.mrb[0].mxu0 %v611
        %v1352 = vpop.f32.mrb[0].mxu0
        %v1353 = vadd.f32 0.0, %v1352
        %v1354 = vpop.f32.mrb[0].mxu0
        %v1355 = vadd.f32 0.0, %v1354
        %1356 = vmatprep.mubr.f32.mxu0 0.0
        %1357 = vmatmul.mubr.f32.gmra.mrb[0].mxu0 %v614
        %v1358 = vpop.f32.mrb[0].mxu0
        %v1359 = vadd.f32 0.0, %v1358
        %v1360 = vpop.f32.mrb[0].mxu0
        %v1361 = vadd.f32 0.0, %v1360
        %1362 = vmatprep.mubr.f32.mxu0 0.0
        %1363 = vmatmul.mubr.f32.gmra.mrb[0].mxu0 %v617
        %v1364 = vpop.f32.mrb[0].mxu0
        %v1365 = vadd.f32 0.0, %v1364
        %v1366 = vpop.f32.mrb[0].mxu0
        %v1367 = vadd.f32 0.0, %v1366
        %1368 = vmatprep.mubr.f32.mxu0 0.0
        %1369 = vmatmul.mubr.f32.gmra.mrb[0].mxu0 %v620
        %v1370 = vpop.f32.mrb[0].mxu0
        %v1371 = vadd.f32 0.0, %v1370
        %v1372 = vpop.f32.mrb[0].mxu0
        %v1373 = vadd.f32 0.0, %v1372
        %1374 = vmatprep.mubr.f32.mxu0 0.0
        %1375 = vmatmul.mubr.f32.gmra.mrb[0].mxu0 %v623
        %v1376 = vpop.f32.mrb[0].mxu0
        %v1377 = vadd.f32 0.0, %v1376
        %v1378 = vpop.f32.mrb[0].mxu0
        %v1379 = vadd.f32 0.0, %v1378
        %1380 = vmatprep.mubr.f32.mxu0 0.0
        %1381 = vmatmul.mubr.f32.gmra.mrb[0].mxu0 %v626
        %v1382 = vpop.f32.mrb[0].mxu0
        %v1383 = vadd.f32 0.0, %v1382
        %v1384 = vpop.f32.mrb[0].mxu0
        %v1385 = vadd.f32 0.0, %v1384
        %1386 = vmatprep.mubr.f32.mxu0 0.0
        %1387 = vmatmul.mubr.f32.gmra.mrb[0].mxu0 %v629
        %v1388 = vpop.f32.mrb[0].mxu0
        %v1389 = vadd.f32 0.0, %v1388
        %v1390 = vpop.f32.mrb[0].mxu0
        %v1391 = vadd.f32 0.0, %v1390
        %1392 = vmatprep.mubr.f32.mxu0 0.0
        %1393 = vmatmul.mubr.f32.gmra.mrb[0].mxu0 %v632
        %v1394 = vpop.f32.mrb[0].mxu0
        %v1395 = vadd.f32 0.0, %v1394
        %v1396 = vpop.f32.mrb[0].mxu0
        %v1397 = vadd.f32 0.0, %v1396
        %1398 = vmatprep.mubr.f32.mxu0 0.0
        %1399 = vmatmul.mubr.f32.gmra.mrb[0].mxu0 %v635
        %v1400 = vpop.f32.mrb[0].mxu0
        %v1401 = vadd.f32 0.0, %v1400
        %v1402 = vpop.f32.mrb[0].mxu0
        %v1403 = vadd.f32 0.0, %v1402
        %1404 = vmatprep.mubr.f32.mxu0 0.0
        %1405 = vmatmul.mubr.f32.gmra.mrb[0].mxu0 %v638
        %v1406 = vpop.f32.mrb[0].mxu0
        %v1407 = vadd.f32 0.0, %v1406
        %v1408 = vpop.f32.mrb[0].mxu0
        %v1409 = vadd.f32 0.0, %v1408
        %1410 = vmatprep.mubr.f32.mxu0 0.0
        %1411 = vmatmul.mubr.f32.gmra.mrb[0].mxu0 %v641
        %v1412 = vpop.f32.mrb[0].mxu0
        %v1413 = vadd.f32 0.0, %v1412
        %v1414 = vpop.f32.mrb[0].mxu0
        %v1415 = vadd.f32 0.0, %v1414
        %1416 = vmatprep.mubr.f32.mxu0 0.0
        %1417 = vmatmul.mubr.f32.gmra.mrb[0].mxu0 %v1164
        %v1418 = vpop.f32.mrb[0].mxu0
        %v1419 = vadd.f32 0.0, %v1418
        %v1420 = vpop.f32.mrb[0].mxu0
        %v1421 = vadd.f32 0.0, %v1420
        %1422 = vdwg.mxu0
        %v1423 = vadd.f32 %v970, %v1233
        %v1424 = vadd.f32 %v972, %v1235
        %v1425 = vadd.f32 %v976, %v1239
        %v1426 = vadd.f32 %v978, %v1241
        %v1427 = vadd.f32 %v982, %v1245
        %v1428 = vadd.f32 %v984, %v1247
        %v1429 = vadd.f32 %v988, %v1251
        %v1430 = vadd.f32 %v990, %v1253
        %v1431 = vadd.f32 %v994, %v1257
        %v1432 = vadd.f32 %v996, %v1259
        %v1433 = vadd.f32 %v1000, %v1263
        %v1434 = vadd.f32 %v1002, %v1265
        %v1435 = vadd.f32 %v1006, %v1269
        %v1436 = vadd.f32 %v1008, %v1271
        %v1437 = vadd.f32 %v1012, %v1275
        %v1438 = vadd.f32 %v1014, %v1277
        %v1439 = vadd.f32 %v1018, %v1281
        %v1440 = vadd.f32 %v1020, %v1283
        %v1441 = vadd.f32 %v1024, %v1287
        %v1442 = vadd.f32 %v1026, %v1289
        %v1443 = vadd.f32 %v1030, %v1293
        %v1444 = vadd.f32 %v1032, %v1295
        %v1445 = vadd.f32 %v1036, %v1299
        %v1446 = vadd.f32 %v1038, %v1301
        %v1447 = vadd.f32 %v1042, %v1305
        %v1448 = vadd.f32 %v1044, %v1307
        %v1449 = vadd.f32 %v1048, %v1311
        %v1450 = vadd.f32 %v1050, %v1313
        %v1451 = vadd.f32 %v1054, %v1317
        %v1452 = vadd.f32 %v1056, %v1319
        %v1453 = vadd.f32 %v1060, %v1323
        %v1454 = vadd.f32 %v1062, %v1325
        %v1455 = vadd.f32 %v1066, %v1329
        %v1456 = vadd.f32 %v1068, %v1331
        %v1457 = vadd.f32 %v1072, %v1335
        %v1458 = vadd.f32 %v1074, %v1337
        %v1459 = vadd.f32 %v1078, %v1341
        %v1460 = vadd.f32 %v1080, %v1343
        %v1461 = vadd.f32 %v1084, %v1347
        %v1462 = vadd.f32 %v1086, %v1349
        %v1463 = vadd.f32 %v1090, %v1353
        %v1464 = vadd.f32 %v1092, %v1355
        %v1465 = vadd.f32 %v1096, %v1359
        %v1466 = vadd.f32 %v1098, %v1361
        %v1467 = vadd.f32 %v1102, %v1365
        %v1468 = vadd.f32 %v1104, %v1367
        %v1469 = vadd.f32 %v1108, %v1371
        %v1470 = vadd.f32 %v1110, %v1373
        %v1471 = vadd.f32 %v1114, %v1377
        %v1472 = vadd.f32 %v1116, %v1379
        %v1473 = vadd.f32 %v1120, %v1383
        %v1474 = vadd.f32 %v1122, %v1385
        %v1475 = vadd.f32 %v1126, %v1389
        %v1476 = vadd.f32 %v1128, %v1391
        %v1477 = vadd.f32 %v1132, %v1395
        %v1478 = vadd.f32 %v1134, %v1397
        %v1479 = vadd.f32 %v1138, %v1401
        %v1480 = vadd.f32 %v1140, %v1403
        %v1481 = vadd.f32 %v1144, %v1407
        %v1482 = vadd.f32 %v1146, %v1409
        %v1483 = vadd.f32 %v1150, %v1413
        %v1484 = vadd.f32 %v1152, %v1415
        %v1485 = vadd.f32 %v1156, %v1419
        %v1486 = vadd.f32 %v1158, %v1421
        %s1487 = scalar_lea.vmem %s1, 48
        %v1488 = vld [vmem:[%s1487] sm:$0xff]
        %v1489 = vld [vmem:[%s1487 + $0x8] sm:$0xff]
        %v1491 = vsel %vm546, %v539, 0
        %1493 = vmatprep.subr.mxu0 %v1489
        %1494 = vmatpush1.msra.mxu0 %v1488
        %1495 = vmatprep.subr.mxu0 0.0
        %1496 = vmatpush1.msra.mxu0 0.0
        %1497 = vmatprep.subr.mxu0 0.0
        %1498 = vmatpush1.msra.mxu0 0.0
        %1499 = vmatprep.subr.mxu0 0.0
        %1500 = vmatpush1.msra.mxu0 0.0
        %1501 = vmatprep.subr.mxu0 0.0
        %1502 = vmatpush1.msra.mxu0 0.0
        %1503 = vmatprep.subr.mxu0 0.0
        %1504 = vmatpush1.msra.mxu0 0.0
        %1505 = vmatprep.subr.mxu0 0.0
        %1506 = vmatpush1.msra.mxu0 0.0
        %1507 = vmatprep.subr.mxu0 0.0
        %1508 = vmatpush1.msra.mxu0 0.0
        %1509 = vmatprep.subr.mxu0 0.0
        %1510 = vmatpush1.msra.mxu0 0.0
        %1511 = vmatprep.subr.mxu0 0.0
        %1512 = vmatpush1.msra.mxu0 0.0
        %1513 = vmatprep.subr.mxu0 0.0
        %1514 = vmatpush1.msra.mxu0 0.0
        %1515 = vmatprep.subr.mxu0 0.0
        %1516 = vmatpush1.msra.mxu0 0.0
        %1517 = vmatprep.subr.mxu0 0.0
        %1518 = vmatpush1.msra.mxu0 0.0
        %1519 = vmatprep.subr.mxu0 0.0
        %1520 = vmatpush1.msra.mxu0 0.0
        %1521 = vmatprep.subr.mxu0 0.0
        %1522 = vmatpush1.msra.mxu0 0.0
        %1523 = vmatprep.subr.mxu0 0.0
        %1524 = vmatpush1.msra.mxu0 0.0
        %1525 = vmatprep.subr.mxu0 0.0
        %1526 = vmatpush1.msra.mxu0 0.0
        %1527 = vmatprep.subr.mxu0 0.0
        %1528 = vmatpush1.msra.mxu0 0.0
        %1529 = vmatprep.subr.mxu0 0.0
        %1530 = vmatpush1.msra.mxu0 0.0
        %1531 = vmatprep.subr.mxu0 0.0
        %1532 = vmatpush1.msra.mxu0 0.0
        %1533 = vmatprep.subr.mxu0 0.0
        %1534 = vmatpush1.msra.mxu0 0.0
        %1535 = vmatprep.subr.mxu0 0.0
        %1536 = vmatpush1.msra.mxu0 0.0
        %1537 = vmatprep.subr.mxu0 0.0
        %1538 = vmatpush1.msra.mxu0 0.0
        %1539 = vmatprep.subr.mxu0 0.0
        %1540 = vmatpush1.msra.mxu0 0.0
        %1541 = vmatprep.subr.mxu0 0.0
        %1542 = vmatpush1.msra.mxu0 0.0
        %1543 = vmatprep.subr.mxu0 0.0
        %1544 = vmatpush1.msra.mxu0 0.0
        %1545 = vmatprep.subr.mxu0 0.0
        %1546 = vmatpush1.msra.mxu0 0.0
        %1547 = vmatprep.subr.mxu0 0.0
        %1548 = vmatpush1.msra.mxu0 0.0
        %1549 = vmatprep.subr.mxu0 0.0
        %1550 = vmatpush1.msra.mxu0 0.0
        %1551 = vmatprep.subr.mxu0 0.0
        %1552 = vmatpush1.msra.mxu0 0.0
        %1553 = vmatprep.subr.mxu0 0.0
        %1554 = vmatpush1.msra.mxu0 0.0
        %1555 = vmatprep.subr.mxu0 0.0
        %1556 = vmatpush1.msra.mxu0 0.0
        %1557 = vmatprep.mubr.f32.mxu0 0.0
        %1558 = vmatmul.mubr.f32.gmra.mrb[0].mxu0 %v554
        %v1559 = vpop.f32.mrb[0].mxu0
        %v1560 = vadd.f32 0.0, %v1559
        %v1561 = vpop.f32.mrb[0].mxu0
        %v1562 = vadd.f32 0.0, %v1561
        %1563 = vmatprep.mubr.f32.mxu0 0.0
        %1564 = vmatmul.mubr.f32.gmra.mrb[0].mxu0 %v557
        %v1565 = vpop.f32.mrb[0].mxu0
        %v1566 = vadd.f32 0.0, %v1565
        %v1567 = vpop.f32.mrb[0].mxu0
        %v1568 = vadd.f32 0.0, %v1567
        %1569 = vmatprep.mubr.f32.mxu0 0.0
        %1570 = vmatmul.mubr.f32.gmra.mrb[0].mxu0 %v560
        %v1571 = vpop.f32.mrb[0].mxu0
        %v1572 = vadd.f32 0.0, %v1571
        %v1573 = vpop.f32.mrb[0].mxu0
        %v1574 = vadd.f32 0.0, %v1573
        %1575 = vmatprep.mubr.f32.mxu0 0.0
        %1576 = vmatmul.mubr.f32.gmra.mrb[0].mxu0 %v563
        %v1577 = vpop.f32.mrb[0].mxu0
        %v1578 = vadd.f32 0.0, %v1577
        %v1579 = vpop.f32.mrb[0].mxu0
        %v1580 = vadd.f32 0.0, %v1579
        %1581 = vmatprep.mubr.f32.mxu0 0.0
        %1582 = vmatmul.mubr.f32.gmra.mrb[0].mxu0 %v566
        %v1583 = vpop.f32.mrb[0].mxu0
        %v1584 = vadd.f32 0.0, %v1583
        %v1585 = vpop.f32.mrb[0].mxu0
        %v1586 = vadd.f32 0.0, %v1585
        %1587 = vmatprep.mubr.f32.mxu0 0.0
        %1588 = vmatmul.mubr.f32.gmra.mrb[0].mxu0 %v569
        %v1589 = vpop.f32.mrb[0].mxu0
        %v1590 = vadd.f32 0.0, %v1589
        %v1591 = vpop.f32.mrb[0].mxu0
        %v1592 = vadd.f32 0.0, %v1591
        %1593 = vmatprep.mubr.f32.mxu0 0.0
        %1594 = vmatmul.mubr.f32.gmra.mrb[0].mxu0 %v572
        %v1595 = vpop.f32.mrb[0].mxu0
        %v1596 = vadd.f32 0.0, %v1595
        %v1597 = vpop.f32.mrb[0].mxu0
        %v1598 = vadd.f32 0.0, %v1597
        %1599 = vmatprep.mubr.f32.mxu0 0.0
        %1600 = vmatmul.mubr.f32.gmra.mrb[0].mxu0 %v575
        %v1601 = vpop.f32.mrb[0].mxu0
        %v1602 = vadd.f32 0.0, %v1601
        %v1603 = vpop.f32.mrb[0].mxu0
        %v1604 = vadd.f32 0.0, %v1603
        %1605 = vmatprep.mubr.f32.mxu0 0.0
        %1606 = vmatmul.mubr.f32.gmra.mrb[0].mxu0 %v578
        %v1607 = vpop.f32.mrb[0].mxu0
        %v1608 = vadd.f32 0.0, %v1607
        %v1609 = vpop.f32.mrb[0].mxu0
        %v1610 = vadd.f32 0.0, %v1609
        %1611 = vmatprep.mubr.f32.mxu0 0.0
        %1612 = vmatmul.mubr.f32.gmra.mrb[0].mxu0 %v581
        %v1613 = vpop.f32.mrb[0].mxu0
        %v1614 = vadd.f32 0.0, %v1613
        %v1615 = vpop.f32.mrb[0].mxu0
        %v1616 = vadd.f32 0.0, %v1615
        %1617 = vmatprep.mubr.f32.mxu0 0.0
        %1618 = vmatmul.mubr.f32.gmra.mrb[0].mxu0 %v584
        %v1619 = vpop.f32.mrb[0].mxu0
        %v1620 = vadd.f32 0.0, %v1619
        %v1621 = vpop.f32.mrb[0].mxu0
        %v1622 = vadd.f32 0.0, %v1621
        %1623 = vmatprep.mubr.f32.mxu0 0.0
        %1624 = vmatmul.mubr.f32.gmra.mrb[0].mxu0 %v587
        %v1625 = vpop.f32.mrb[0].mxu0
        %v1626 = vadd.f32 0.0, %v1625
        %v1627 = vpop.f32.mrb[0].mxu0
        %v1628 = vadd.f32 0.0, %v1627
        %1629 = vmatprep.mubr.f32.mxu0 0.0
        %1630 = vmatmul.mubr.f32.gmra.mrb[0].mxu0 %v590
        %v1631 = vpop.f32.mrb[0].mxu0
        %v1632 = vadd.f32 0.0, %v1631
        %v1633 = vpop.f32.mrb[0].mxu0
        %v1634 = vadd.f32 0.0, %v1633
        %1635 = vmatprep.mubr.f32.mxu0 0.0
        %1636 = vmatmul.mubr.f32.gmra.mrb[0].mxu0 %v593
        %v1637 = vpop.f32.mrb[0].mxu0
        %v1638 = vadd.f32 0.0, %v1637
        %v1639 = vpop.f32.mrb[0].mxu0
        %v1640 = vadd.f32 0.0, %v1639
        %1641 = vmatprep.mubr.f32.mxu0 0.0
        %1642 = vmatmul.mubr.f32.gmra.mrb[0].mxu0 %v596
        %v1643 = vpop.f32.mrb[0].mxu0
        %v1644 = vadd.f32 0.0, %v1643
        %v1645 = vpop.f32.mrb[0].mxu0
        %v1646 = vadd.f32 0.0, %v1645
        %1647 = vmatprep.mubr.f32.mxu0 0.0
        %1648 = vmatmul.mubr.f32.gmra.mrb[0].mxu0 %v599
        %v1649 = vpop.f32.mrb[0].mxu0
        %v1650 = vadd.f32 0.0, %v1649
        %v1651 = vpop.f32.mrb[0].mxu0
        %v1652 = vadd.f32 0.0, %v1651
        %1653 = vmatprep.mubr.f32.mxu0 0.0
        %1654 = vmatmul.mubr.f32.gmra.mrb[0].mxu0 %v602
        %v1655 = vpop.f32.mrb[0].mxu0
        %v1656 = vadd.f32 0.0, %v1655
        %v1657 = vpop.f32.mrb[0].mxu0
        %v1658 = vadd.f32 0.0, %v1657
        %1659 = vmatprep.mubr.f32.mxu0 0.0
        %1660 = vmatmul.mubr.f32.gmra.mrb[0].mxu0 %v605
        %v1661 = vpop.f32.mrb[0].mxu0
        %v1662 = vadd.f32 0.0, %v1661
        %v1663 = vpop.f32.mrb[0].mxu0
        %v1664 = vadd.f32 0.0, %v1663
        %1665 = vmatprep.mubr.f32.mxu0 0.0
        %1666 = vmatmul.mubr.f32.gmra.mrb[0].mxu0 %v608
        %v1667 = vpop.f32.mrb[0].mxu0
        %v1668 = vadd.f32 0.0, %v1667
        %v1669 = vpop.f32.mrb[0].mxu0
        %v1670 = vadd.f32 0.0, %v1669
        %1671 = vmatprep.mubr.f32.mxu0 0.0
        %1672 = vmatmul.mubr.f32.gmra.mrb[0].mxu0 %v611
        %v1673 = vpop.f32.mrb[0].mxu0
        %v1674 = vadd.f32 0.0, %v1673
        %v1675 = vpop.f32.mrb[0].mxu0
        %v1676 = vadd.f32 0.0, %v1675
        %1677 = vmatprep.mubr.f32.mxu0 0.0
        %1678 = vmatmul.mubr.f32.gmra.mrb[0].mxu0 %v614
        %v1679 = vpop.f32.mrb[0].mxu0
        %v1680 = vadd.f32 0.0, %v1679
        %v1681 = vpop.f32.mrb[0].mxu0
        %v1682 = vadd.f32 0.0, %v1681
        %1683 = vmatprep.mubr.f32.mxu0 0.0
        %1684 = vmatmul.mubr.f32.gmra.mrb[0].mxu0 %v617
        %v1685 = vpop.f32.mrb[0].mxu0
        %v1686 = vadd.f32 0.0, %v1685
        %v1687 = vpop.f32.mrb[0].mxu0
        %v1688 = vadd.f32 0.0, %v1687
        %1689 = vmatprep.mubr.f32.mxu0 0.0
        %1690 = vmatmul.mubr.f32.gmra.mrb[0].mxu0 %v620
        %v1691 = vpop.f32.mrb[0].mxu0
        %v1692 = vadd.f32 0.0, %v1691
        %v1693 = vpop.f32.mrb[0].mxu0
        %v1694 = vadd.f32 0.0, %v1693
        %1695 = vmatprep.mubr.f32.mxu0 0.0
        %1696 = vmatmul.mubr.f32.gmra.mrb[0].mxu0 %v623
        %v1697 = vpop.f32.mrb[0].mxu0
        %v1698 = vadd.f32 0.0, %v1697
        %v1699 = vpop.f32.mrb[0].mxu0
        %v1700 = vadd.f32 0.0, %v1699
        %1701 = vmatprep.mubr.f32.mxu0 0.0
        %1702 = vmatmul.mubr.f32.gmra.mrb[0].mxu0 %v626
        %v1703 = vpop.f32.mrb[0].mxu0
        %v1704 = vadd.f32 0.0, %v1703
        %v1705 = vpop.f32.mrb[0].mxu0
        %v1706 = vadd.f32 0.0, %v1705
        %1707 = vmatprep.mubr.f32.mxu0 0.0
        %1708 = vmatmul.mubr.f32.gmra.mrb[0].mxu0 %v629
        %v1709 = vpop.f32.mrb[0].mxu0
        %v1710 = vadd.f32 0.0, %v1709
        %v1711 = vpop.f32.mrb[0].mxu0
        %v1712 = vadd.f32 0.0, %v1711
        %1713 = vmatprep.mubr.f32.mxu0 0.0
        %1714 = vmatmul.mubr.f32.gmra.mrb[0].mxu0 %v632
        %v1715 = vpop.f32.mrb[0].mxu0
        %v1716 = vadd.f32 0.0, %v1715
        %v1717 = vpop.f32.mrb[0].mxu0
        %v1718 = vadd.f32 0.0, %v1717
        %1719 = vmatprep.mubr.f32.mxu0 0.0
        %1720 = vmatmul.mubr.f32.gmra.mrb[0].mxu0 %v635
        %v1721 = vpop.f32.mrb[0].mxu0
        %v1722 = vadd.f32 0.0, %v1721
        %v1723 = vpop.f32.mrb[0].mxu0
        %v1724 = vadd.f32 0.0, %v1723
        %1725 = vmatprep.mubr.f32.mxu0 0.0
        %1726 = vmatmul.mubr.f32.gmra.mrb[0].mxu0 %v638
        %v1727 = vpop.f32.mrb[0].mxu0
        %v1728 = vadd.f32 0.0, %v1727
        %v1729 = vpop.f32.mrb[0].mxu0
        %v1730 = vadd.f32 0.0, %v1729
        %1731 = vmatprep.mubr.f32.mxu0 0.0
        %1732 = vmatmul.mubr.f32.gmra.mrb[0].mxu0 %v641
        %v1733 = vpop.f32.mrb[0].mxu0
        %v1734 = vadd.f32 0.0, %v1733
        %v1735 = vpop.f32.mrb[0].mxu0
        %v1736 = vadd.f32 0.0, %v1735
        %1737 = vmatprep.mubr.f32.mxu0 0.0
        %1738 = vmatmul.mubr.f32.gmra.mrb[0].mxu0 %v1164
        %v1739 = vpop.f32.mrb[0].mxu0
        %v1740 = vadd.f32 0.0, %v1739
        %v1741 = vpop.f32.mrb[0].mxu0
        %v1742 = vadd.f32 0.0, %v1741
        %1743 = vmatprep.mubr.f32.mxu0 0.0
        %1744 = vmatmul.mubr.f32.gmra.mrb[0].mxu0 %v1491
        %v1745 = vpop.f32.mrb[0].mxu0
        %v1746 = vadd.f32 0.0, %v1745
        %v1747 = vpop.f32.mrb[0].mxu0
        %v1748 = vadd.f32 0.0, %v1747
        %1749 = vdwg.mxu0
        %v1750 = vadd.f32 %v1423, %v1560
        %v1751 = vadd.f32 %v1424, %v1562
        %v1752 = vadd.f32 %v1425, %v1566
        %v1753 = vadd.f32 %v1426, %v1568
        %v1754 = vadd.f32 %v1427, %v1572
        %v1755 = vadd.f32 %v1428, %v1574
        %v1756 = vadd.f32 %v1429, %v1578
        %v1757 = vadd.f32 %v1430, %v1580
        %v1758 = vadd.f32 %v1431, %v1584
        %v1759 = vadd.f32 %v1432, %v1586
        %v1760 = vadd.f32 %v1433, %v1590
        %v1761 = vadd.f32 %v1434, %v1592
        %v1762 = vadd.f32 %v1435, %v1596
        %v1763 = vadd.f32 %v1436, %v1598
        %v1764 = vadd.f32 %v1437, %v1602
        %v1765 = vadd.f32 %v1438, %v1604
        %v1766 = vadd.f32 %v1439, %v1608
        %v1767 = vadd.f32 %v1440, %v1610
        %v1768 = vadd.f32 %v1441, %v1614
        %v1769 = vadd.f32 %v1442, %v1616
        %v1770 = vadd.f32 %v1443, %v1620
        %v1771 = vadd.f32 %v1444, %v1622
        %v1772 = vadd.f32 %v1445, %v1626
        %v1773 = vadd.f32 %v1446, %v1628
        %v1774 = vadd.f32 %v1447, %v1632
        %v1775 = vadd.f32 %v1448, %v1634
        %v1776 = vadd.f32 %v1449, %v1638
        %v1777 = vadd.f32 %v1450, %v1640
        %v1778 = vadd.f32 %v1451, %v1644
        %v1779 = vadd.f32 %v1452, %v1646
        %v1780 = vadd.f32 %v1453, %v1650
        %v1781 = vadd.f32 %v1454, %v1652
        %v1782 = vadd.f32 %v1455, %v1656
        %v1783 = vadd.f32 %v1456, %v1658
        %v1784 = vadd.f32 %v1457, %v1662
        %v1785 = vadd.f32 %v1458, %v1664
        %v1786 = vadd.f32 %v1459, %v1668
        %v1787 = vadd.f32 %v1460, %v1670
        %v1788 = vadd.f32 %v1461, %v1674
        %v1789 = vadd.f32 %v1462, %v1676
        %v1790 = vadd.f32 %v1463, %v1680
        %v1791 = vadd.f32 %v1464, %v1682
        %v1792 = vadd.f32 %v1465, %v1686
        %v1793 = vadd.f32 %v1466, %v1688
        %v1794 = vadd.f32 %v1467, %v1692
        %v1795 = vadd.f32 %v1468, %v1694
        %v1796 = vadd.f32 %v1469, %v1698
        %v1797 = vadd.f32 %v1470, %v1700
        %v1798 = vadd.f32 %v1471, %v1704
        %v1799 = vadd.f32 %v1472, %v1706
        %v1800 = vadd.f32 %v1473, %v1710
        %v1801 = vadd.f32 %v1474, %v1712
        %v1802 = vadd.f32 %v1475, %v1716
        %v1803 = vadd.f32 %v1476, %v1718
        %v1804 = vadd.f32 %v1477, %v1722
        %v1805 = vadd.f32 %v1478, %v1724
        %v1806 = vadd.f32 %v1479, %v1728
        %v1807 = vadd.f32 %v1480, %v1730
        %v1808 = vadd.f32 %v1481, %v1734
        %v1809 = vadd.f32 %v1482, %v1736
        %v1810 = vadd.f32 %v1483, %v1740
        %v1811 = vadd.f32 %v1484, %v1742
        %v1812 = vadd.f32 %v1485, %v1746
        %v1813 = vadd.f32 %v1486, %v1748
        %s1814 = scalar_lea.vmem %s1, 64
        %v1815 = vld [vmem:[%s1814] sm:$0xff]
        %v1816 = vld [vmem:[%s1814 + $0x8] sm:$0xff]
        %v1818 = vsel %vm546, %v540, 0
        %1820 = vmatprep.subr.mxu0 %v1816
        %1821 = vmatpush1.msra.mxu0 %v1815
        %1822 = vmatprep.subr.mxu0 0.0
        %1823 = vmatpush1.msra.mxu0 0.0
        %1824 = vmatprep.subr.mxu0 0.0
        %1825 = vmatpush1.msra.mxu0 0.0
        %1826 = vmatprep.subr.mxu0 0.0
        %1827 = vmatpush1.msra.mxu0 0.0
        %1828 = vmatprep.subr.mxu0 0.0
        %1829 = vmatpush1.msra.mxu0 0.0
        %1830 = vmatprep.subr.mxu0 0.0
        %1831 = vmatpush1.msra.mxu0 0.0
        %1832 = vmatprep.subr.mxu0 0.0
        %1833 = vmatpush1.msra.mxu0 0.0
        %1834 = vmatprep.subr.mxu0 0.0
        %1835 = vmatpush1.msra.mxu0 0.0
        %1836 = vmatprep.subr.mxu0 0.0
        %1837 = vmatpush1.msra.mxu0 0.0
        %1838 = vmatprep.subr.mxu0 0.0
        %1839 = vmatpush1.msra.mxu0 0.0
        %1840 = vmatprep.subr.mxu0 0.0
        %1841 = vmatpush1.msra.mxu0 0.0
        %1842 = vmatprep.subr.mxu0 0.0
        %1843 = vmatpush1.msra.mxu0 0.0
        %1844 = vmatprep.subr.mxu0 0.0
        %1845 = vmatpush1.msra.mxu0 0.0
        %1846 = vmatprep.subr.mxu0 0.0
        %1847 = vmatpush1.msra.mxu0 0.0
        %1848 = vmatprep.subr.mxu0 0.0
        %1849 = vmatpush1.msra.mxu0 0.0
        %1850 = vmatprep.subr.mxu0 0.0
        %1851 = vmatpush1.msra.mxu0 0.0
        %1852 = vmatprep.subr.mxu0 0.0
        %1853 = vmatpush1.msra.mxu0 0.0
        %1854 = vmatprep.subr.mxu0 0.0
        %1855 = vmatpush1.msra.mxu0 0.0
        %1856 = vmatprep.subr.mxu0 0.0
        %1857 = vmatpush1.msra.mxu0 0.0
        %1858 = vmatprep.subr.mxu0 0.0
        %1859 = vmatpush1.msra.mxu0 0.0
        %1860 = vmatprep.subr.mxu0 0.0
        %1861 = vmatpush1.msra.mxu0 0.0
        %1862 = vmatprep.subr.mxu0 0.0
        %1863 = vmatpush1.msra.mxu0 0.0
        %1864 = vmatprep.subr.mxu0 0.0
        %1865 = vmatpush1.msra.mxu0 0.0
        %1866 = vmatprep.subr.mxu0 0.0
        %1867 = vmatpush1.msra.mxu0 0.0
        %1868 = vmatprep.subr.mxu0 0.0
        %1869 = vmatpush1.msra.mxu0 0.0
        %1870 = vmatprep.subr.mxu0 0.0
        %1871 = vmatpush1.msra.mxu0 0.0
        %1872 = vmatprep.subr.mxu0 0.0
        %1873 = vmatpush1.msra.mxu0 0.0
        %1874 = vmatprep.subr.mxu0 0.0
        %1875 = vmatpush1.msra.mxu0 0.0
        %1876 = vmatprep.subr.mxu0 0.0
        %1877 = vmatpush1.msra.mxu0 0.0
        %1878 = vmatprep.subr.mxu0 0.0
        %1879 = vmatpush1.msra.mxu0 0.0
        %1880 = vmatprep.subr.mxu0 0.0
        %1881 = vmatpush1.msra.mxu0 0.0
        %1882 = vmatprep.subr.mxu0 0.0
        %1883 = vmatpush1.msra.mxu0 0.0
        %1884 = vmatprep.mubr.f32.mxu0 0.0
        %1885 = vmatmul.mubr.f32.gmra.mrb[0].mxu0 %v557
        %v1886 = vpop.f32.mrb[0].mxu0
        %v1887 = vadd.f32 0.0, %v1886
        %v1888 = vpop.f32.mrb[0].mxu0
        %v1889 = vadd.f32 0.0, %v1888
        %1890 = vmatprep.mubr.f32.mxu0 0.0
        %1891 = vmatmul.mubr.f32.gmra.mrb[0].mxu0 %v560
        %v1892 = vpop.f32.mrb[0].mxu0
        %v1893 = vadd.f32 0.0, %v1892
        %v1894 = vpop.f32.mrb[0].mxu0
        %v1895 = vadd.f32 0.0, %v1894
        %1896 = vmatprep.mubr.f32.mxu0 0.0
        %1897 = vmatmul.mubr.f32.gmra.mrb[0].mxu0 %v563
        %v1898 = vpop.f32.mrb[0].mxu0
        %v1899 = vadd.f32 0.0, %v1898
        %v1900 = vpop.f32.mrb[0].mxu0
        %v1901 = vadd.f32 0.0, %v1900
        %1902 = vmatprep.mubr.f32.mxu0 0.0
        %1903 = vmatmul.mubr.f32.gmra.mrb[0].mxu0 %v566
        %v1904 = vpop.f32.mrb[0].mxu0
        %v1905 = vadd.f32 0.0, %v1904
        %v1906 = vpop.f32.mrb[0].mxu0
        %v1907 = vadd.f32 0.0, %v1906
        %1908 = vmatprep.mubr.f32.mxu0 0.0
        %1909 = vmatmul.mubr.f32.gmra.mrb[0].mxu0 %v569
        %v1910 = vpop.f32.mrb[0].mxu0
        %v1911 = vadd.f32 0.0, %v1910
        %v1912 = vpop.f32.mrb[0].mxu0
        %v1913 = vadd.f32 0.0, %v1912
        %1914 = vmatprep.mubr.f32.mxu0 0.0
        %1915 = vmatmul.mubr.f32.gmra.mrb[0].mxu0 %v572
        %v1916 = vpop.f32.mrb[0].mxu0
        %v1917 = vadd.f32 0.0, %v1916
        %v1918 = vpop.f32.mrb[0].mxu0
        %v1919 = vadd.f32 0.0, %v1918
        %1920 = vmatprep.mubr.f32.mxu0 0.0
        %1921 = vmatmul.mubr.f32.gmra.mrb[0].mxu0 %v575
        %v1922 = vpop.f32.mrb[0].mxu0
        %v1923 = vadd.f32 0.0, %v1922
        %v1924 = vpop.f32.mrb[0].mxu0
        %v1925 = vadd.f32 0.0, %v1924
        %1926 = vmatprep.mubr.f32.mxu0 0.0
        %1927 = vmatmul.mubr.f32.gmra.mrb[0].mxu0 %v578
        %v1928 = vpop.f32.mrb[0].mxu0
        %v1929 = vadd.f32 0.0, %v1928
        %v1930 = vpop.f32.mrb[0].mxu0
        %v1931 = vadd.f32 0.0, %v1930
        %1932 = vmatprep.mubr.f32.mxu0 0.0
        %1933 = vmatmul.mubr.f32.gmra.mrb[0].mxu0 %v581
        %v1934 = vpop.f32.mrb[0].mxu0
        %v1935 = vadd.f32 0.0, %v1934
        %v1936 = vpop.f32.mrb[0].mxu0
        %v1937 = vadd.f32 0.0, %v1936
        %1938 = vmatprep.mubr.f32.mxu0 0.0
        %1939 = vmatmul.mubr.f32.gmra.mrb[0].mxu0 %v584
        %v1940 = vpop.f32.mrb[0].mxu0
        %v1941 = vadd.f32 0.0, %v1940
        %v1942 = vpop.f32.mrb[0].mxu0
        %v1943 = vadd.f32 0.0, %v1942
        %1944 = vmatprep.mubr.f32.mxu0 0.0
        %1945 = vmatmul.mubr.f32.gmra.mrb[0].mxu0 %v587
        %v1946 = vpop.f32.mrb[0].mxu0
        %v1947 = vadd.f32 0.0, %v1946
        %v1948 = vpop.f32.mrb[0].mxu0
        %v1949 = vadd.f32 0.0, %v1948
        %1950 = vmatprep.mubr.f32.mxu0 0.0
        %1951 = vmatmul.mubr.f32.gmra.mrb[0].mxu0 %v590
        %v1952 = vpop.f32.mrb[0].mxu0
        %v1953 = vadd.f32 0.0, %v1952
        %v1954 = vpop.f32.mrb[0].mxu0
        %v1955 = vadd.f32 0.0, %v1954
        %1956 = vmatprep.mubr.f32.mxu0 0.0
        %1957 = vmatmul.mubr.f32.gmra.mrb[0].mxu0 %v593
        %v1958 = vpop.f32.mrb[0].mxu0
        %v1959 = vadd.f32 0.0, %v1958
        %v1960 = vpop.f32.mrb[0].mxu0
        %v1961 = vadd.f32 0.0, %v1960
        %1962 = vmatprep.mubr.f32.mxu0 0.0
        %1963 = vmatmul.mubr.f32.gmra.mrb[0].mxu0 %v596
        %v1964 = vpop.f32.mrb[0].mxu0
        %v1965 = vadd.f32 0.0, %v1964
        %v1966 = vpop.f32.mrb[0].mxu0
        %v1967 = vadd.f32 0.0, %v1966
        %1968 = vmatprep.mubr.f32.mxu0 0.0
        %1969 = vmatmul.mubr.f32.gmra.mrb[0].mxu0 %v599
        %v1970 = vpop.f32.mrb[0].mxu0
        %v1971 = vadd.f32 0.0, %v1970
        %v1972 = vpop.f32.mrb[0].mxu0
        %v1973 = vadd.f32 0.0, %v1972
        %1974 = vmatprep.mubr.f32.mxu0 0.0
        %1975 = vmatmul.mubr.f32.gmra.mrb[0].mxu0 %v602
        %v1976 = vpop.f32.mrb[0].mxu0
        %v1977 = vadd.f32 0.0, %v1976
        %v1978 = vpop.f32.mrb[0].mxu0
        %v1979 = vadd.f32 0.0, %v1978
        %1980 = vmatprep.mubr.f32.mxu0 0.0
        %1981 = vmatmul.mubr.f32.gmra.mrb[0].mxu0 %v605
        %v1982 = vpop.f32.mrb[0].mxu0
        %v1983 = vadd.f32 0.0, %v1982
        %v1984 = vpop.f32.mrb[0].mxu0
        %v1985 = vadd.f32 0.0, %v1984
        %1986 = vmatprep.mubr.f32.mxu0 0.0
        %1987 = vmatmul.mubr.f32.gmra.mrb[0].mxu0 %v608
        %v1988 = vpop.f32.mrb[0].mxu0
        %v1989 = vadd.f32 0.0, %v1988
        %v1990 = vpop.f32.mrb[0].mxu0
        %v1991 = vadd.f32 0.0, %v1990
        %1992 = vmatprep.mubr.f32.mxu0 0.0
        %1993 = vmatmul.mubr.f32.gmra.mrb[0].mxu0 %v611
        %v1994 = vpop.f32.mrb[0].mxu0
        %v1995 = vadd.f32 0.0, %v1994
        %v1996 = vpop.f32.mrb[0].mxu0
        %v1997 = vadd.f32 0.0, %v1996
        %1998 = vmatprep.mubr.f32.mxu0 0.0
        %1999 = vmatmul.mubr.f32.gmra.mrb[0].mxu0 %v614
        %v2000 = vpop.f32.mrb[0].mxu0
        %v2001 = vadd.f32 0.0, %v2000
        %v2002 = vpop.f32.mrb[0].mxu0
        %v2003 = vadd.f32 0.0, %v2002
        %2004 = vmatprep.mubr.f32.mxu0 0.0
        %2005 = vmatmul.mubr.f32.gmra.mrb[0].mxu0 %v617
        %v2006 = vpop.f32.mrb[0].mxu0
        %v2007 = vadd.f32 0.0, %v2006
        %v2008 = vpop.f32.mrb[0].mxu0
        %v2009 = vadd.f32 0.0, %v2008
        %2010 = vmatprep.mubr.f32.mxu0 0.0
        %2011 = vmatmul.mubr.f32.gmra.mrb[0].mxu0 %v620
        %v2012 = vpop.f32.mrb[0].mxu0
        %v2013 = vadd.f32 0.0, %v2012
        %v2014 = vpop.f32.mrb[0].mxu0
        %v2015 = vadd.f32 0.0, %v2014
        %2016 = vmatprep.mubr.f32.mxu0 0.0
        %2017 = vmatmul.mubr.f32.gmra.mrb[0].mxu0 %v623
        %v2018 = vpop.f32.mrb[0].mxu0
        %v2019 = vadd.f32 0.0, %v2018
        %v2020 = vpop.f32.mrb[0].mxu0
        %v2021 = vadd.f32 0.0, %v2020
        %2022 = vmatprep.mubr.f32.mxu0 0.0
        %2023 = vmatmul.mubr.f32.gmra.mrb[0].mxu0 %v626
        %v2024 = vpop.f32.mrb[0].mxu0
        %v2025 = vadd.f32 0.0, %v2024
        %v2026 = vpop.f32.mrb[0].mxu0
        %v2027 = vadd.f32 0.0, %v2026
        %2028 = vmatprep.mubr.f32.mxu0 0.0
        %2029 = vmatmul.mubr.f32.gmra.mrb[0].mxu0 %v629
        %v2030 = vpop.f32.mrb[0].mxu0
        %v2031 = vadd.f32 0.0, %v2030
        %v2032 = vpop.f32.mrb[0].mxu0
        %v2033 = vadd.f32 0.0, %v2032
        %2034 = vmatprep.mubr.f32.mxu0 0.0
        %2035 = vmatmul.mubr.f32.gmra.mrb[0].mxu0 %v632
        %v2036 = vpop.f32.mrb[0].mxu0
        %v2037 = vadd.f32 0.0, %v2036
        %v2038 = vpop.f32.mrb[0].mxu0
        %v2039 = vadd.f32 0.0, %v2038
        %2040 = vmatprep.mubr.f32.mxu0 0.0
        %2041 = vmatmul.mubr.f32.gmra.mrb[0].mxu0 %v635
        %v2042 = vpop.f32.mrb[0].mxu0
        %v2043 = vadd.f32 0.0, %v2042
        %v2044 = vpop.f32.mrb[0].mxu0
        %v2045 = vadd.f32 0.0, %v2044
        %2046 = vmatprep.mubr.f32.mxu0 0.0
        %2047 = vmatmul.mubr.f32.gmra.mrb[0].mxu0 %v638
        %v2048 = vpop.f32.mrb[0].mxu0
        %v2049 = vadd.f32 0.0, %v2048
        %v2050 = vpop.f32.mrb[0].mxu0
        %v2051 = vadd.f32 0.0, %v2050
        %2052 = vmatprep.mubr.f32.mxu0 0.0
        %2053 = vmatmul.mubr.f32.gmra.mrb[0].mxu0 %v641
        %v2054 = vpop.f32.mrb[0].mxu0
        %v2055 = vadd.f32 0.0, %v2054
        %v2056 = vpop.f32.mrb[0].mxu0
        %v2057 = vadd.f32 0.0, %v2056
        %2058 = vmatprep.mubr.f32.mxu0 0.0
        %2059 = vmatmul.mubr.f32.gmra.mrb[0].mxu0 %v1164
        %v2060 = vpop.f32.mrb[0].mxu0
        %v2061 = vadd.f32 0.0, %v2060
        %v2062 = vpop.f32.mrb[0].mxu0
        %v2063 = vadd.f32 0.0, %v2062
        %2064 = vmatprep.mubr.f32.mxu0 0.0
        %2065 = vmatmul.mubr.f32.gmra.mrb[0].mxu0 %v1491
        %v2066 = vpop.f32.mrb[0].mxu0
        %v2067 = vadd.f32 0.0, %v2066
        %v2068 = vpop.f32.mrb[0].mxu0
        %v2069 = vadd.f32 0.0, %v2068
        %2070 = vmatprep.mubr.f32.mxu0 0.0
        %2071 = vmatmul.mubr.f32.gmra.mrb[0].mxu0 %v1818
        %v2072 = vpop.f32.mrb[0].mxu0
        %v2073 = vadd.f32 0.0, %v2072
        %v2074 = vpop.f32.mrb[0].mxu0
        %v2075 = vadd.f32 0.0, %v2074
        %2076 = vdwg.mxu0
        %v2077 = vadd.f32 %v1750, %v1887
        %v2078 = vadd.f32 %v1751, %v1889
        %v2079 = vadd.f32 %v1752, %v1893
        %v2080 = vadd.f32 %v1753, %v1895
        %v2081 = vadd.f32 %v1754, %v1899
        %v2082 = vadd.f32 %v1755, %v1901
        %v2083 = vadd.f32 %v1756, %v1905
        %v2084 = vadd.f32 %v1757, %v1907
        %v2085 = vadd.f32 %v1758, %v1911
        %v2086 = vadd.f32 %v1759, %v1913
        %v2087 = vadd.f32 %v1760, %v1917
        %v2088 = vadd.f32 %v1761, %v1919
        %v2089 = vadd.f32 %v1762, %v1923
        %v2090 = vadd.f32 %v1763, %v1925
        %v2091 = vadd.f32 %v1764, %v1929
        %v2092 = vadd.f32 %v1765, %v1931
        %v2093 = vadd.f32 %v1766, %v1935
        %v2094 = vadd.f32 %v1767, %v1937
        %v2095 = vadd.f32 %v1768, %v1941
        %v2096 = vadd.f32 %v1769, %v1943
        %v2097 = vadd.f32 %v1770, %v1947
        %v2098 = vadd.f32 %v1771, %v1949
        %v2099 = vadd.f32 %v1772, %v1953
        %v2100 = vadd.f32 %v1773, %v1955
        %v2101 = vadd.f32 %v1774, %v1959
        %v2102 = vadd.f32 %v1775, %v1961
        %v2103 = vadd.f32 %v1776, %v1965
        %v2104 = vadd.f32 %v1777, %v1967
        %v2105 = vadd.f32 %v1778, %v1971
        %v2106 = vadd.f32 %v1779, %v1973
        %v2107 = vadd.f32 %v1780, %v1977
        %v2108 = vadd.f32 %v1781, %v1979
        %v2109 = vadd.f32 %v1782, %v1983
        %v2110 = vadd.f32 %v1783, %v1985
        %v2111 = vadd.f32 %v1784, %v1989
        %v2112 = vadd.f32 %v1785, %v1991
        %v2113 = vadd.f32 %v1786, %v1995
        %v2114 = vadd.f32 %v1787, %v1997
        %v2115 = vadd.f32 %v1788, %v2001
        %v2116 = vadd.f32 %v1789, %v2003
        %v2117 = vadd.f32 %v1790, %v2007
        %v2118 = vadd.f32 %v1791, %v2009
        %v2119 = vadd.f32 %v1792, %v2013
        %v2120 = vadd.f32 %v1793, %v2015
        %v2121 = vadd.f32 %v1794, %v2019
        %v2122 = vadd.f32 %v1795, %v2021
        %v2123 = vadd.f32 %v1796, %v2025
        %v2124 = vadd.f32 %v1797, %v2027
        %v2125 = vadd.f32 %v1798, %v2031
        %v2126 = vadd.f32 %v1799, %v2033
        %v2127 = vadd.f32 %v1800, %v2037
        %v2128 = vadd.f32 %v1801, %v2039
        %v2129 = vadd.f32 %v1802, %v2043
        %v2130 = vadd.f32 %v1803, %v2045
        %v2131 = vadd.f32 %v1804, %v2049
        %v2132 = vadd.f32 %v1805, %v2051
        %v2133 = vadd.f32 %v1806, %v2055
        %v2134 = vadd.f32 %v1807, %v2057
        %v2135 = vadd.f32 %v1808, %v2061
        %v2136 = vadd.f32 %v1809, %v2063
        %v2137 = vadd.f32 %v1810, %v2067
        %v2138 = vadd.f32 %v1811, %v2069
        %v2139 = vadd.f32 %v1812, %v2073
        %v2140 = vadd.f32 %v1813, %v2075
        %v2141 = vld [vmem:[%s2] sm:$0x3]
        %v2143 = vlaneseq
        %v2144 = vshrl.u32 %v2143, 7
        %v2145 = vsub.s32 0, %v2144
        %v2146 = vrot.slane %v2141, %v2145
        %v2147 = vlaneseq
        %v2148 = vshrl.u32 %v2147, 7
        %v2149 = vsub.s32 1, %v2148
        %v2150 = vrot.slane %v2141, %v2149
        %v2153 = vmul.f32 %v2077, %v2146
        %v2154 = vmul.f32 %v2078, %v2150
        %v2155 = vmul.f32 %v2079, %v2146
        %v2156 = vmul.f32 %v2080, %v2150
        %v2157 = vmul.f32 %v2081, %v2146
        %v2158 = vmul.f32 %v2082, %v2150
        %v2159 = vmul.f32 %v2083, %v2146
        %v2160 = vmul.f32 %v2084, %v2150
        %v2161 = vmul.f32 %v2085, %v2146
        %v2162 = vmul.f32 %v2086, %v2150
        %v2163 = vmul.f32 %v2087, %v2146
        %v2164 = vmul.f32 %v2088, %v2150
        %v2165 = vmul.f32 %v2089, %v2146
        %v2166 = vmul.f32 %v2090, %v2150
        %v2167 = vmul.f32 %v2091, %v2146
        %v2168 = vmul.f32 %v2092, %v2150
        %v2169 = vmul.f32 %v2093, %v2146
        %v2170 = vmul.f32 %v2094, %v2150
        %v2171 = vmul.f32 %v2095, %v2146
        %v2172 = vmul.f32 %v2096, %v2150
        %v2173 = vmul.f32 %v2097, %v2146
        %v2174 = vmul.f32 %v2098, %v2150
        %v2175 = vmul.f32 %v2099, %v2146
        %v2176 = vmul.f32 %v2100, %v2150
        %v2177 = vmul.f32 %v2101, %v2146
        %v2178 = vmul.f32 %v2102, %v2150
        %v2179 = vmul.f32 %v2103, %v2146
        %v2180 = vmul.f32 %v2104, %v2150
        %v2181 = vmul.f32 %v2105, %v2146
        %v2182 = vmul.f32 %v2106, %v2150
        %v2183 = vmul.f32 %v2107, %v2146
        %v2184 = vmul.f32 %v2108, %v2150
        %v2185 = vmul.f32 %v2109, %v2146
        %v2186 = vmul.f32 %v2110, %v2150
        %v2187 = vmul.f32 %v2111, %v2146
        %v2188 = vmul.f32 %v2112, %v2150
        %v2189 = vmul.f32 %v2113, %v2146
        %v2190 = vmul.f32 %v2114, %v2150
        %v2191 = vmul.f32 %v2115, %v2146
        %v2192 = vmul.f32 %v2116, %v2150
        %v2193 = vmul.f32 %v2117, %v2146
        %v2194 = vmul.f32 %v2118, %v2150
        %v2195 = vmul.f32 %v2119, %v2146
        %v2196 = vmul.f32 %v2120, %v2150
        %v2197 = vmul.f32 %v2121, %v2146
        %v2198 = vmul.f32 %v2122, %v2150
        %v2199 = vmul.f32 %v2123, %v2146
        %v2200 = vmul.f32 %v2124, %v2150
        %v2201 = vmul.f32 %v2125, %v2146
        %v2202 = vmul.f32 %v2126, %v2150
        %v2203 = vmul.f32 %v2127, %v2146
        %v2204 = vmul.f32 %v2128, %v2150
        %v2205 = vmul.f32 %v2129, %v2146
        %v2206 = vmul.f32 %v2130, %v2150
        %v2207 = vmul.f32 %v2131, %v2146
        %v2208 = vmul.f32 %v2132, %v2150
        %v2209 = vmul.f32 %v2133, %v2146
        %v2210 = vmul.f32 %v2134, %v2150
        %v2211 = vmul.f32 %v2135, %v2146
        %v2212 = vmul.f32 %v2136, %v2150
        %v2213 = vmul.f32 %v2137, %v2146
        %v2214 = vmul.f32 %v2138, %v2150
        %v2215 = vmul.f32 %v2139, %v2146
        %v2216 = vmul.f32 %v2140, %v2150
        %v2217 = vld [vmem:[%s3] sm:$0x3]
        %v2219 = vlaneseq
        %v2220 = vshrl.u32 %v2219, 7
        %v2221 = vsub.s32 0, %v2220
        %v2222 = vrot.slane %v2217, %v2221
        %v2223 = vlaneseq
        %v2224 = vshrl.u32 %v2223, 7
        %v2225 = vsub.s32 1, %v2224
        %v2226 = vrot.slane %v2217, %v2225
        %v2229 = vadd.f32 %v2153, %v2222
        %v2230 = vadd.f32 %v2154, %v2226
        %v2231 = vadd.f32 %v2155, %v2222
        %v2232 = vadd.f32 %v2156, %v2226
        %v2233 = vadd.f32 %v2157, %v2222
        %v2234 = vadd.f32 %v2158, %v2226
        %v2235 = vadd.f32 %v2159, %v2222
        %v2236 = vadd.f32 %v2160, %v2226
        %v2237 = vadd.f32 %v2161, %v2222
        %v2238 = vadd.f32 %v2162, %v2226
        %v2239 = vadd.f32 %v2163, %v2222
        %v2240 = vadd.f32 %v2164, %v2226
        %v2241 = vadd.f32 %v2165, %v2222
        %v2242 = vadd.f32 %v2166, %v2226
        %v2243 = vadd.f32 %v2167, %v2222
        %v2244 = vadd.f32 %v2168, %v2226
        %v2245 = vadd.f32 %v2169, %v2222
        %v2246 = vadd.f32 %v2170, %v2226
        %v2247 = vadd.f32 %v2171, %v2222
        %v2248 = vadd.f32 %v2172, %v2226
        %v2249 = vadd.f32 %v2173, %v2222
        %v2250 = vadd.f32 %v2174, %v2226
        %v2251 = vadd.f32 %v2175, %v2222
        %v2252 = vadd.f32 %v2176, %v2226
        %v2253 = vadd.f32 %v2177, %v2222
        %v2254 = vadd.f32 %v2178, %v2226
        %v2255 = vadd.f32 %v2179, %v2222
        %v2256 = vadd.f32 %v2180, %v2226
        %v2257 = vadd.f32 %v2181, %v2222
        %v2258 = vadd.f32 %v2182, %v2226
        %v2259 = vadd.f32 %v2183, %v2222
        %v2260 = vadd.f32 %v2184, %v2226
        %v2261 = vadd.f32 %v2185, %v2222
        %v2262 = vadd.f32 %v2186, %v2226
        %v2263 = vadd.f32 %v2187, %v2222
        %v2264 = vadd.f32 %v2188, %v2226
        %v2265 = vadd.f32 %v2189, %v2222
        %v2266 = vadd.f32 %v2190, %v2226
        %v2267 = vadd.f32 %v2191, %v2222
        %v2268 = vadd.f32 %v2192, %v2226
        %v2269 = vadd.f32 %v2193, %v2222
        %v2270 = vadd.f32 %v2194, %v2226
        %v2271 = vadd.f32 %v2195, %v2222
        %v2272 = vadd.f32 %v2196, %v2226
        %v2273 = vadd.f32 %v2197, %v2222
        %v2274 = vadd.f32 %v2198, %v2226
        %v2275 = vadd.f32 %v2199, %v2222
        %v2276 = vadd.f32 %v2200, %v2226
        %v2277 = vadd.f32 %v2201, %v2222
        %v2278 = vadd.f32 %v2202, %v2226
        %v2279 = vadd.f32 %v2203, %v2222
        %v2280 = vadd.f32 %v2204, %v2226
        %v2281 = vadd.f32 %v2205, %v2222
        %v2282 = vadd.f32 %v2206, %v2226
        %v2283 = vadd.f32 %v2207, %v2222
        %v2284 = vadd.f32 %v2208, %v2226
        %v2285 = vadd.f32 %v2209, %v2222
        %v2286 = vadd.f32 %v2210, %v2226
        %v2287 = vadd.f32 %v2211, %v2222
        %v2288 = vadd.f32 %v2212, %v2226
        %v2289 = vadd.f32 %v2213, %v2222
        %v2290 = vadd.f32 %v2214, %v2226
        %v2291 = vadd.f32 %v2215, %v2222
        %v2292 = vadd.f32 %v2216, %v2226
        %vm2293 = vcmp.gt.f32.partialorder %v2229, 0.0
        %vm2294 = vcmp.gt.f32.partialorder %v2230, 0.0
        %vm2295 = vcmp.gt.f32.partialorder %v2231, 0.0
        %vm2296 = vcmp.gt.f32.partialorder %v2232, 0.0
        %vm2297 = vcmp.gt.f32.partialorder %v2233, 0.0
        %vm2298 = vcmp.gt.f32.partialorder %v2234, 0.0
        %vm2299 = vcmp.gt.f32.partialorder %v2235, 0.0
        %vm2300 = vcmp.gt.f32.partialorder %v2236, 0.0
        %vm2301 = vcmp.gt.f32.partialorder %v2237, 0.0
        %vm2302 = vcmp.gt.f32.partialorder %v2238, 0.0
        %vm2303 = vcmp.gt.f32.partialorder %v2239, 0.0
        %vm2304 = vcmp.gt.f32.partialorder %v2240, 0.0
        %vm2305 = vcmp.gt.f32.partialorder %v2241, 0.0
        %vm2306 = vcmp.gt.f32.partialorder %v2242, 0.0
        %vm2307 = vcmp.gt.f32.partialorder %v2243, 0.0
        %vm2308 = vcmp.gt.f32.partialorder %v2244, 0.0
        %vm2309 = vcmp.gt.f32.partialorder %v2245, 0.0
        %vm2310 = vcmp.gt.f32.partialorder %v2246, 0.0
        %vm2311 = vcmp.gt.f32.partialorder %v2247, 0.0
        %vm2312 = vcmp.gt.f32.partialorder %v2248, 0.0
        %vm2313 = vcmp.gt.f32.partialorder %v2249, 0.0
        %vm2314 = vcmp.gt.f32.partialorder %v2250, 0.0
        %vm2315 = vcmp.gt.f32.partialorder %v2251, 0.0
        %vm2316 = vcmp.gt.f32.partialorder %v2252, 0.0
        %vm2317 = vcmp.gt.f32.partialorder %v2253, 0.0
        %vm2318 = vcmp.gt.f32.partialorder %v2254, 0.0
        %vm2319 = vcmp.gt.f32.partialorder %v2255, 0.0
        %vm2320 = vcmp.gt.f32.partialorder %v2256, 0.0
        %vm2321 = vcmp.gt.f32.partialorder %v2257, 0.0
        %vm2322 = vcmp.gt.f32.partialorder %v2258, 0.0
        %vm2323 = vcmp.gt.f32.partialorder %v2259, 0.0
        %vm2324 = vcmp.gt.f32.partialorder %v2260, 0.0
        %vm2325 = vcmp.gt.f32.partialorder %v2261, 0.0
        %vm2326 = vcmp.gt.f32.partialorder %v2262, 0.0
        %vm2327 = vcmp.gt.f32.partialorder %v2263, 0.0
        %vm2328 = vcmp.gt.f32.partialorder %v2264, 0.0
        %vm2329 = vcmp.gt.f32.partialorder %v2265, 0.0
        %vm2330 = vcmp.gt.f32.partialorder %v2266, 0.0
        %vm2331 = vcmp.gt.f32.partialorder %v2267, 0.0
        %vm2332 = vcmp.gt.f32.partialorder %v2268, 0.0
        %vm2333 = vcmp.gt.f32.partialorder %v2269, 0.0
        %vm2334 = vcmp.gt.f32.partialorder %v2270, 0.0
        %vm2335 = vcmp.gt.f32.partialorder %v2271, 0.0
        %vm2336 = vcmp.gt.f32.partialorder %v2272, 0.0
        %vm2337 = vcmp.gt.f32.partialorder %v2273, 0.0
        %vm2338 = vcmp.gt.f32.partialorder %v2274, 0.0
        %vm2339 = vcmp.gt.f32.partialorder %v2275, 0.0
        %vm2340 = vcmp.gt.f32.partialorder %v2276, 0.0
        %vm2341 = vcmp.gt.f32.partialorder %v2277, 0.0
        %vm2342 = vcmp.gt.f32.partialorder %v2278, 0.0
        %vm2343 = vcmp.gt.f32.partialorder %v2279, 0.0
        %vm2344 = vcmp.gt.f32.partialorder %v2280, 0.0
        %vm2345 = vcmp.gt.f32.partialorder %v2281, 0.0
        %vm2346 = vcmp.gt.f32.partialorder %v2282, 0.0
        %vm2347 = vcmp.gt.f32.partialorder %v2283, 0.0
        %vm2348 = vcmp.gt.f32.partialorder %v2284, 0.0
        %vm2349 = vcmp.gt.f32.partialorder %v2285, 0.0
        %vm2350 = vcmp.gt.f32.partialorder %v2286, 0.0
        %vm2351 = vcmp.gt.f32.partialorder %v2287, 0.0
        %vm2352 = vcmp.gt.f32.partialorder %v2288, 0.0
        %vm2353 = vcmp.gt.f32.partialorder %v2289, 0.0
        %vm2354 = vcmp.gt.f32.partialorder %v2290, 0.0
        %vm2355 = vcmp.gt.f32.partialorder %v2291, 0.0
        %vm2356 = vcmp.gt.f32.partialorder %v2292, 0.0
        %v2357 = vmul.f32 %v2229, 1.442695
        %v2358 = vpow.pop %v2357
        %v2359 = vmul.f32 %v2230, 1.442695
        %v2360 = vpow.pop %v2359
        %v2361 = vmul.f32 %v2231, 1.442695
        %v2362 = vpow.pop %v2361
        %v2363 = vmul.f32 %v2232, 1.442695
        %v2364 = vpow.pop %v2363
        %v2365 = vmul.f32 %v2233, 1.442695
        %v2366 = vpow.pop %v2365
        %v2367 = vmul.f32 %v2234, 1.442695
        %v2368 = vpow.pop %v2367
        %v2369 = vmul.f32 %v2235, 1.442695
        %v2370 = vpow.pop %v2369
        %v2371 = vmul.f32 %v2236, 1.442695
        %v2372 = vpow.pop %v2371
        %v2373 = vmul.f32 %v2237, 1.442695
        %v2374 = vpow.pop %v2373
        %v2375 = vmul.f32 %v2238, 1.442695
        %v2376 = vpow.pop %v2375
        %v2377 = vmul.f32 %v2239, 1.442695
        %v2378 = vpow.pop %v2377
        %v2379 = vmul.f32 %v2240, 1.442695
        %v2380 = vpow.pop %v2379
        %v2381 = vmul.f32 %v2241, 1.442695
        %v2382 = vpow.pop %v2381
        %v2383 = vmul.f32 %v2242, 1.442695
        %v2384 = vpow.pop %v2383
        %v2385 = vmul.f32 %v2243, 1.442695
        %v2386 = vpow.pop %v2385
        %v2387 = vmul.f32 %v2244, 1.442695
        %v2388 = vpow.pop %v2387
        %v2389 = vmul.f32 %v2245, 1.442695
        %v2390 = vpow.pop %v2389
        %v2391 = vmul.f32 %v2246, 1.442695
        %v2392 = vpow.pop %v2391
        %v2393 = vmul.f32 %v2247, 1.442695
        %v2394 = vpow.pop %v2393
        %v2395 = vmul.f32 %v2248, 1.442695
        %v2396 = vpow.pop %v2395
        %v2397 = vmul.f32 %v2249, 1.442695
        %v2398 = vpow.pop %v2397
        %v2399 = vmul.f32 %v2250, 1.442695
        %v2400 = vpow.pop %v2399
        %v2401 = vmul.f32 %v2251, 1.442695
        %v2402 = vpow.pop %v2401
        %v2403 = vmul.f32 %v2252, 1.442695
        %v2404 = vpow.pop %v2403
        %v2405 = vmul.f32 %v2253, 1.442695
        %v2406 = vpow.pop %v2405
        %v2407 = vmul.f32 %v2254, 1.442695
        %v2408 = vpow.pop %v2407
        %v2409 = vmul.f32 %v2255, 1.442695
        %v2410 = vpow.pop %v2409
        %v2411 = vmul.f32 %v2256, 1.442695
        %v2412 = vpow.pop %v2411
        %v2413 = vmul.f32 %v2257, 1.442695
        %v2414 = vpow.pop %v2413
        %v2415 = vmul.f32 %v2258, 1.442695
        %v2416 = vpow.pop %v2415
        %v2417 = vmul.f32 %v2259, 1.442695
        %v2418 = vpow.pop %v2417
        %v2419 = vmul.f32 %v2260, 1.442695
        %v2420 = vpow.pop %v2419
        %v2421 = vmul.f32 %v2261, 1.442695
        %v2422 = vpow.pop %v2421
        %v2423 = vmul.f32 %v2262, 1.442695
        %v2424 = vpow.pop %v2423
        %v2425 = vmul.f32 %v2263, 1.442695
        %v2426 = vpow.pop %v2425
        %v2427 = vmul.f32 %v2264, 1.442695
        %v2428 = vpow.pop %v2427
        %v2429 = vmul.f32 %v2265, 1.442695
        %v2430 = vpow.pop %v2429
        %v2431 = vmul.f32 %v2266, 1.442695
        %v2432 = vpow.pop %v2431
        %v2433 = vmul.f32 %v2267, 1.442695
        %v2434 = vpow.pop %v2433
        %v2435 = vmul.f32 %v2268, 1.442695
        %v2436 = vpow.pop %v2435
        %v2437 = vmul.f32 %v2269, 1.442695
        %v2438 = vpow.pop %v2437
        %v2439 = vmul.f32 %v2270, 1.442695
        %v2440 = vpow.pop %v2439
        %v2441 = vmul.f32 %v2271, 1.442695
        %v2442 = vpow.pop %v2441
        %v2443 = vmul.f32 %v2272, 1.442695
        %v2444 = vpow.pop %v2443
        %v2445 = vmul.f32 %v2273, 1.442695
        %v2446 = vpow.pop %v2445
        %v2447 = vmul.f32 %v2274, 1.442695
        %v2448 = vpow.pop %v2447
        %v2449 = vmul.f32 %v2275, 1.442695
        %v2450 = vpow.pop %v2449
        %v2451 = vmul.f32 %v2276, 1.442695
        %v2452 = vpow.pop %v2451
        %v2453 = vmul.f32 %v2277, 1.442695
        %v2454 = vpow.pop %v2453
        %v2455 = vmul.f32 %v2278, 1.442695
        %v2456 = vpow.pop %v2455
        %v2457 = vmul.f32 %v2279, 1.442695
        %v2458 = vpow.pop %v2457
        %v2459 = vmul.f32 %v2280, 1.442695
        %v2460 = vpow.pop %v2459
        %v2461 = vmul.f32 %v2281, 1.442695
        %v2462 = vpow.pop %v2461
        %v2463 = vmul.f32 %v2282, 1.442695
        %v2464 = vpow.pop %v2463
        %v2465 = vmul.f32 %v2283, 1.442695
        %v2466 = vpow.pop %v2465
        %v2467 = vmul.f32 %v2284, 1.442695
        %v2468 = vpow.pop %v2467
        %v2469 = vmul.f32 %v2285, 1.442695
        %v2470 = vpow.pop %v2469
        %v2471 = vmul.f32 %v2286, 1.442695
        %v2472 = vpow.pop %v2471
        %v2473 = vmul.f32 %v2287, 1.442695
        %v2474 = vpow.pop %v2473
        %v2475 = vmul.f32 %v2288, 1.442695
        %v2476 = vpow.pop %v2475
        %v2477 = vmul.f32 %v2289, 1.442695
        %v2478 = vpow.pop %v2477
        %v2479 = vmul.f32 %v2290, 1.442695
        %v2480 = vpow.pop %v2479
        %v2481 = vmul.f32 %v2291, 1.442695
        %v2482 = vpow.pop %v2481
        %v2483 = vmul.f32 %v2292, 1.442695
        %v2484 = vpow.pop %v2483
        %v2485 = vsub.f32 %v2358, 1.0
        %v2486 = vsub.f32 %v2360, 1.0
        %v2487 = vsub.f32 %v2362, 1.0
        %v2488 = vsub.f32 %v2364, 1.0
        %v2489 = vsub.f32 %v2366, 1.0
        %v2490 = vsub.f32 %v2368, 1.0
        %v2491 = vsub.f32 %v2370, 1.0
        %v2492 = vsub.f32 %v2372, 1.0
        %v2493 = vsub.f32 %v2374, 1.0
        %v2494 = vsub.f32 %v2376, 1.0
        %v2495 = vsub.f32 %v2378, 1.0
        %v2496 = vsub.f32 %v2380, 1.0
        %v2497 = vsub.f32 %v2382, 1.0
        %v2498 = vsub.f32 %v2384, 1.0
        %v2499 = vsub.f32 %v2386, 1.0
        %v2500 = vsub.f32 %v2388, 1.0
        %v2501 = vsub.f32 %v2390, 1.0
        %v2502 = vsub.f32 %v2392, 1.0
        %v2503 = vsub.f32 %v2394, 1.0
        %v2504 = vsub.f32 %v2396, 1.0
        %v2505 = vsub.f32 %v2398, 1.0
        %v2506 = vsub.f32 %v2400, 1.0
        %v2507 = vsub.f32 %v2402, 1.0
        %v2508 = vsub.f32 %v2404, 1.0
        %v2509 = vsub.f32 %v2406, 1.0
        %v2510 = vsub.f32 %v2408, 1.0
        %v2511 = vsub.f32 %v2410, 1.0
        %v2512 = vsub.f32 %v2412, 1.0
        %v2513 = vsub.f32 %v2414, 1.0
        %v2514 = vsub.f32 %v2416, 1.0
        %v2515 = vsub.f32 %v2418, 1.0
        %v2516 = vsub.f32 %v2420, 1.0
        %v2517 = vsub.f32 %v2422, 1.0
        %v2518 = vsub.f32 %v2424, 1.0
        %v2519 = vsub.f32 %v2426, 1.0
        %v2520 = vsub.f32 %v2428, 1.0
        %v2521 = vsub.f32 %v2430, 1.0
        %v2522 = vsub.f32 %v2432, 1.0
        %v2523 = vsub.f32 %v2434, 1.0
        %v2524 = vsub.f32 %v2436, 1.0
        %v2525 = vsub.f32 %v2438, 1.0
        %v2526 = vsub.f32 %v2440, 1.0
        %v2527 = vsub.f32 %v2442, 1.0
        %v2528 = vsub.f32 %v2444, 1.0
        %v2529 = vsub.f32 %v2446, 1.0
        %v2530 = vsub.f32 %v2448, 1.0
        %v2531 = vsub.f32 %v2450, 1.0
        %v2532 = vsub.f32 %v2452, 1.0
        %v2533 = vsub.f32 %v2454, 1.0
        %v2534 = vsub.f32 %v2456, 1.0
        %v2535 = vsub.f32 %v2458, 1.0
        %v2536 = vsub.f32 %v2460, 1.0
        %v2537 = vsub.f32 %v2462, 1.0
        %v2538 = vsub.f32 %v2464, 1.0
        %v2539 = vsub.f32 %v2466, 1.0
        %v2540 = vsub.f32 %v2468, 1.0
        %v2541 = vsub.f32 %v2470, 1.0
        %v2542 = vsub.f32 %v2472, 1.0
        %v2543 = vsub.f32 %v2474, 1.0
        %v2544 = vsub.f32 %v2476, 1.0
        %v2545 = vsub.f32 %v2478, 1.0
        %v2546 = vsub.f32 %v2480, 1.0
        %v2547 = vsub.f32 %v2482, 1.0
        %v2548 = vsub.f32 %v2484, 1.0
        %v2549 = vsel %vm2293, %v2229, %v2485
        %v2550 = vsel %vm2294, %v2230, %v2486
        %v2551 = vsel %vm2295, %v2231, %v2487
        %v2552 = vsel %vm2296, %v2232, %v2488
        %v2553 = vsel %vm2297, %v2233, %v2489
        %v2554 = vsel %vm2298, %v2234, %v2490
        %v2555 = vsel %vm2299, %v2235, %v2491
        %v2556 = vsel %vm2300, %v2236, %v2492
        %v2557 = vsel %vm2301, %v2237, %v2493
        %v2558 = vsel %vm2302, %v2238, %v2494
        %v2559 = vsel %vm2303, %v2239, %v2495
        %v2560 = vsel %vm2304, %v2240, %v2496
        %v2561 = vsel %vm2305, %v2241, %v2497
        %v2562 = vsel %vm2306, %v2242, %v2498
        %v2563 = vsel %vm2307, %v2243, %v2499
        %v2564 = vsel %vm2308, %v2244, %v2500
        %v2565 = vsel %vm2309, %v2245, %v2501
        %v2566 = vsel %vm2310, %v2246, %v2502
        %v2567 = vsel %vm2311, %v2247, %v2503
        %v2568 = vsel %vm2312, %v2248, %v2504
        %v2569 = vsel %vm2313, %v2249, %v2505
        %v2570 = vsel %vm2314, %v2250, %v2506
        %v2571 = vsel %vm2315, %v2251, %v2507
        %v2572 = vsel %vm2316, %v2252, %v2508
        %v2573 = vsel %vm2317, %v2253, %v2509
        %v2574 = vsel %vm2318, %v2254, %v2510
        %v2575 = vsel %vm2319, %v2255, %v2511
        %v2576 = vsel %vm2320, %v2256, %v2512
        %v2577 = vsel %vm2321, %v2257, %v2513
        %v2578 = vsel %vm2322, %v2258, %v2514
        %v2579 = vsel %vm2323, %v2259, %v2515
        %v2580 = vsel %vm2324, %v2260, %v2516
        %v2581 = vsel %vm2325, %v2261, %v2517
        %v2582 = vsel %vm2326, %v2262, %v2518
        %v2583 = vsel %vm2327, %v2263, %v2519
        %v2584 = vsel %vm2328, %v2264, %v2520
        %v2585 = vsel %vm2329, %v2265, %v2521
        %v2586 = vsel %vm2330, %v2266, %v2522
        %v2587 = vsel %vm2331, %v2267, %v2523
        %v2588 = vsel %vm2332, %v2268, %v2524
        %v2589 = vsel %vm2333, %v2269, %v2525
        %v2590 = vsel %vm2334, %v2270, %v2526
        %v2591 = vsel %vm2335, %v2271, %v2527
        %v2592 = vsel %vm2336, %v2272, %v2528
        %v2593 = vsel %vm2337, %v2273, %v2529
        %v2594 = vsel %vm2338, %v2274, %v2530
        %v2595 = vsel %vm2339, %v2275, %v2531
        %v2596 = vsel %vm2340, %v2276, %v2532
        %v2597 = vsel %vm2341, %v2277, %v2533
        %v2598 = vsel %vm2342, %v2278, %v2534
        %v2599 = vsel %vm2343, %v2279, %v2535
        %v2600 = vsel %vm2344, %v2280, %v2536
        %v2601 = vsel %vm2345, %v2281, %v2537
        %v2602 = vsel %vm2346, %v2282, %v2538
        %v2603 = vsel %vm2347, %v2283, %v2539
        %v2604 = vsel %vm2348, %v2284, %v2540
        %v2605 = vsel %vm2349, %v2285, %v2541
        %v2606 = vsel %vm2350, %v2286, %v2542
        %v2607 = vsel %vm2351, %v2287, %v2543
        %v2608 = vsel %vm2352, %v2288, %v2544
        %v2609 = vsel %vm2353, %v2289, %v2545
        %v2610 = vsel %vm2354, %v2290, %v2546
        %v2611 = vsel %vm2355, %v2291, %v2547
        %v2612 = vsel %vm2356, %v2292, %v2548
        %v2613 = vmax.f32 %v2549, %v2551
        %v2614 = vmax.f32 %v2550, %v2552
        %v2615 = vmax.f32 %v2553, %v2555
        %v2616 = vmax.f32 %v2554, %v2556
        %v2617 = vmax.f32 %v2557, %v2559
        %v2618 = vmax.f32 %v2558, %v2560
        %v2619 = vmax.f32 %v2561, %v2563
        %v2620 = vmax.f32 %v2562, %v2564
        %v2621 = vmax.f32 %v2565, %v2567
        %v2622 = vmax.f32 %v2566, %v2568
        %v2623 = vmax.f32 %v2569, %v2571
        %v2624 = vmax.f32 %v2570, %v2572
        %v2625 = vmax.f32 %v2573, %v2575
        %v2626 = vmax.f32 %v2574, %v2576
        %v2627 = vmax.f32 %v2577, %v2579
        %v2628 = vmax.f32 %v2578, %v2580
        %v2629 = vmax.f32 %v2581, %v2583
        %v2630 = vmax.f32 %v2582, %v2584
        %v2631 = vmax.f32 %v2585, %v2587
        %v2632 = vmax.f32 %v2586, %v2588
        %v2633 = vmax.f32 %v2589, %v2591
        %v2634 = vmax.f32 %v2590, %v2592
        %v2635 = vmax.f32 %v2593, %v2595
        %v2636 = vmax.f32 %v2594, %v2596
        %v2637 = vmax.f32 %v2597, %v2599
        %v2638 = vmax.f32 %v2598, %v2600
        %v2639 = vmax.f32 %v2601, %v2603
        %v2640 = vmax.f32 %v2602, %v2604
        %v2641 = vmax.f32 %v2605, %v2607
        %v2642 = vmax.f32 %v2606, %v2608
        %v2643 = vmax.f32 %v2609, %v2611
        %v2644 = vmax.f32 %v2610, %v2612
        %v2645 = vld [vmem:[%s4] sm:$0xff]
        %v2646 = vld [vmem:[%s4 + $0x8] sm:$0xff]
        %v2647 = vld [vmem:[%s4 + $0x10] sm:$0xff]
        %v2648 = vld [vmem:[%s4 + $0x18] sm:$0xff]
        %v2649 = vld [vmem:[%s4 + $0x20] sm:$0xff]
        %v2650 = vld [vmem:[%s4 + $0x28] sm:$0xff]
        %v2651 = vld [vmem:[%s4 + $0x30] sm:$0xff]
        %v2652 = vld [vmem:[%s4 + $0x38] sm:$0xff]
        %v2653 = vld [vmem:[%s4 + $0x40] sm:$0xff]
        %v2654 = vld [vmem:[%s4 + $0x48] sm:$0xff]
        %v2655 = vld [vmem:[%s4 + $0x50] sm:$0xff]
        %v2656 = vld [vmem:[%s4 + $0x58] sm:$0xff]
        %v2657 = vld [vmem:[%s4 + $0x60] sm:$0xff]
        %v2658 = vld [vmem:[%s4 + $0x68] sm:$0xff]
        %v2659 = vld [vmem:[%s4 + $0x70] sm:$0xff]
        %v2660 = vld [vmem:[%s4 + $0x78] sm:$0xff]
        %v2661 = vld [vmem:[%s4 + $0x80] sm:$0xff]
        %v2662 = vld [vmem:[%s4 + $0x88] sm:$0xff]
        %v2663 = vld [vmem:[%s4 + $0x90] sm:$0xff]
        %v2664 = vld [vmem:[%s4 + $0x98] sm:$0xff]
        %v2665 = vld [vmem:[%s4 + $0xa0] sm:$0xff]
        %v2666 = vld [vmem:[%s4 + $0xa8] sm:$0xff]
        %v2667 = vld [vmem:[%s4 + $0xb0] sm:$0xff]
        %v2668 = vld [vmem:[%s4 + $0xb8] sm:$0xff]
        %v2669 = vld [vmem:[%s4 + $0xc0] sm:$0xff]
        %v2670 = vld [vmem:[%s4 + $0xc8] sm:$0xff]
        %v2671 = vld [vmem:[%s4 + $0xd0] sm:$0xff]
        %v2672 = vld [vmem:[%s4 + $0xd8] sm:$0xff]
        %v2673 = vld [vmem:[%s4 + $0xe0] sm:$0xff]
        %v2674 = vld [vmem:[%s4 + $0xe8] sm:$0xff]
        %v2675 = vld [vmem:[%s4 + $0xf0] sm:$0xff]
        %v2676 = vld [vmem:[%s4 + $0xf8] sm:$0xff]
        %2677 = vmatprep.subr.mxu0 0.0
        %2678 = vmatpush1.msra.mxu0 %v2645
        %2679 = vmatprep.subr.mxu0 0.0
        %2680 = vmatpush1.msra.mxu0 %v2646
        %2681 = vmatprep.subr.mxu0 0.0
        %2682 = vmatpush1.msra.mxu0 %v2647
        %2683 = vmatprep.subr.mxu0 0.0
        %2684 = vmatpush1.msra.mxu0 %v2648
        %2685 = vmatprep.subr.mxu0 0.0
        %2686 = vmatpush1.msra.mxu0 %v2649
        %2687 = vmatprep.subr.mxu0 0.0
        %2688 = vmatpush1.msra.mxu0 %v2650
        %2689 = vmatprep.subr.mxu0 0.0
        %2690 = vmatpush1.msra.mxu0 %v2651
        %2691 = vmatprep.subr.mxu0 0.0
        %2692 = vmatpush1.msra.mxu0 %v2652
        %2693 = vmatprep.subr.mxu0 0.0
        %2694 = vmatpush1.msra.mxu0 %v2653
        %2695 = vmatprep.subr.mxu0 0.0
        %2696 = vmatpush1.msra.mxu0 %v2654
        %2697 = vmatprep.subr.mxu0 0.0
        %2698 = vmatpush1.msra.mxu0 %v2655
        %2699 = vmatprep.subr.mxu0 0.0
        %2700 = vmatpush1.msra.mxu0 %v2656
        %2701 = vmatprep.subr.mxu0 0.0
        %2702 = vmatpush1.msra.mxu0 %v2657
        %2703 = vmatprep.subr.mxu0 0.0
        %2704 = vmatpush1.msra.mxu0 %v2658
        %2705 = vmatprep.subr.mxu0 0.0
        %2706 = vmatpush1.msra.mxu0 %v2659
        %2707 = vmatprep.subr.mxu0 0.0
        %2708 = vmatpush1.msra.mxu0 %v2660
        %2709 = vmatprep.subr.mxu0 0.0
        %2710 = vmatpush1.msra.mxu0 %v2661
        %2711 = vmatprep.subr.mxu0 0.0
        %2712 = vmatpush1.msra.mxu0 %v2662
        %2713 = vmatprep.subr.mxu0 0.0
        %2714 = vmatpush1.msra.mxu0 %v2663
        %2715 = vmatprep.subr.mxu0 0.0
        %2716 = vmatpush1.msra.mxu0 %v2664
        %2717 = vmatprep.subr.mxu0 0.0
        %2718 = vmatpush1.msra.mxu0 %v2665
        %2719 = vmatprep.subr.mxu0 0.0
        %2720 = vmatpush1.msra.mxu0 %v2666
        %2721 = vmatprep.subr.mxu0 0.0
        %2722 = vmatpush1.msra.mxu0 %v2667
        %2723 = vmatprep.subr.mxu0 0.0
        %2724 = vmatpush1.msra.mxu0 %v2668
        %2725 = vmatprep.subr.mxu0 0.0
        %2726 = vmatpush1.msra.mxu0 %v2669
        %2727 = vmatprep.subr.mxu0 0.0
        %2728 = vmatpush1.msra.mxu0 %v2670
        %2729 = vmatprep.subr.mxu0 0.0
        %2730 = vmatpush1.msra.mxu0 %v2671
        %2731 = vmatprep.subr.mxu0 0.0
        %2732 = vmatpush1.msra.mxu0 %v2672
        %2733 = vmatprep.subr.mxu0 0.0
        %2734 = vmatpush1.msra.mxu0 %v2673
        %2735 = vmatprep.subr.mxu0 0.0
        %2736 = vmatpush1.msra.mxu0 %v2674
        %2737 = vmatprep.subr.mxu0 0.0
        %2738 = vmatpush1.msra.mxu0 %v2675
        %2739 = vmatprep.subr.mxu0 0.0
        %2740 = vmatpush1.msra.mxu0 %v2676
        %2741 = vmatprep.mubr.f32.mxu0 %v2614
        %2742 = vmatmul.mubr.f32.gmra.mrb[0].mxu0 %v2613
        %v2743 = vpop.f32.mrb[0].mxu0
        %v2744 = vadd.f32 0.0, %v2743
        %v2745 = vpop.f32.mrb[0].mxu0
        %2746 = vmatprep.mubr.f32.mxu0 %v2616
        %2747 = vmatmul.mubr.f32.gmra.mrb[0].mxu0 %v2615
        %v2748 = vpop.f32.mrb[0].mxu0
        %v2749 = vadd.f32 0.0, %v2748
        %v2750 = vpop.f32.mrb[0].mxu0
        %2751 = vmatprep.mubr.f32.mxu0 %v2618
        %2752 = vmatmul.mubr.f32.gmra.mrb[0].mxu0 %v2617
        %v2753 = vpop.f32.mrb[0].mxu0
        %v2754 = vadd.f32 0.0, %v2753
        %v2755 = vpop.f32.mrb[0].mxu0
        %2756 = vmatprep.mubr.f32.mxu0 %v2620
        %2757 = vmatmul.mubr.f32.gmra.mrb[0].mxu0 %v2619
        %v2758 = vpop.f32.mrb[0].mxu0
        %v2759 = vadd.f32 0.0, %v2758
        %v2760 = vpop.f32.mrb[0].mxu0
        %2761 = vmatprep.mubr.f32.mxu0 %v2622
        %2762 = vmatmul.mubr.f32.gmra.mrb[0].mxu0 %v2621
        %v2763 = vpop.f32.mrb[0].mxu0
        %v2764 = vadd.f32 0.0, %v2763
        %v2765 = vpop.f32.mrb[0].mxu0
        %2766 = vmatprep.mubr.f32.mxu0 %v2624
        %2767 = vmatmul.mubr.f32.gmra.mrb[0].mxu0 %v2623
        %v2768 = vpop.f32.mrb[0].mxu0
        %v2769 = vadd.f32 0.0, %v2768
        %v2770 = vpop.f32.mrb[0].mxu0
        %2771 = vmatprep.mubr.f32.mxu0 %v2626
        %2772 = vmatmul.mubr.f32.gmra.mrb[0].mxu0 %v2625
        %v2773 = vpop.f32.mrb[0].mxu0
        %v2774 = vadd.f32 0.0, %v2773
        %v2775 = vpop.f32.mrb[0].mxu0
        %2776 = vmatprep.mubr.f32.mxu0 %v2628
        %2777 = vmatmul.mubr.f32.gmra.mrb[0].mxu0 %v2627
        %v2778 = vpop.f32.mrb[0].mxu0
        %v2779 = vadd.f32 0.0, %v2778
        %v2780 = vpop.f32.mrb[0].mxu0
        %2781 = vmatprep.mubr.f32.mxu0 %v2630
        %2782 = vmatmul.mubr.f32.gmra.mrb[0].mxu0 %v2629
        %v2783 = vpop.f32.mrb[0].mxu0
        %v2784 = vadd.f32 0.0, %v2783
        %v2785 = vpop.f32.mrb[0].mxu0
        %2786 = vmatprep.mubr.f32.mxu0 %v2632
        %2787 = vmatmul.mubr.f32.gmra.mrb[0].mxu0 %v2631
        %v2788 = vpop.f32.mrb[0].mxu0
        %v2789 = vadd.f32 0.0, %v2788
        %v2790 = vpop.f32.mrb[0].mxu0
        %2791 = vmatprep.mubr.f32.mxu0 %v2634
        %2792 = vmatmul.mubr.f32.gmra.mrb[0].mxu0 %v2633
        %v2793 = vpop.f32.mrb[0].mxu0
        %v2794 = vadd.f32 0.0, %v2793
        %v2795 = vpop.f32.mrb[0].mxu0
        %2796 = vmatprep.mubr.f32.mxu0 %v2636
        %2797 = vmatmul.mubr.f32.gmra.mrb[0].mxu0 %v2635
        %v2798 = vpop.f32.mrb[0].mxu0
        %v2799 = vadd.f32 0.0, %v2798
        %v2800 = vpop.f32.mrb[0].mxu0
        %2801 = vmatprep.mubr.f32.mxu0 %v2638
        %2802 = vmatmul.mubr.f32.gmra.mrb[0].mxu0 %v2637
        %v2803 = vpop.f32.mrb[0].mxu0
        %v2804 = vadd.f32 0.0, %v2803
        %v2805 = vpop.f32.mrb[0].mxu0
        %2806 = vmatprep.mubr.f32.mxu0 %v2640
        %2807 = vmatmul.mubr.f32.gmra.mrb[0].mxu0 %v2639
        %v2808 = vpop.f32.mrb[0].mxu0
        %v2809 = vadd.f32 0.0, %v2808
        %v2810 = vpop.f32.mrb[0].mxu0
        %2811 = vmatprep.mubr.f32.mxu0 %v2642
        %2812 = vmatmul.mubr.f32.gmra.mrb[0].mxu0 %v2641
        %v2813 = vpop.f32.mrb[0].mxu0
        %v2814 = vadd.f32 0.0, %v2813
        %v2815 = vpop.f32.mrb[0].mxu0
        %2816 = vmatprep.mubr.f32.mxu0 %v2644
        %2817 = vmatmul.mubr.f32.gmra.mrb[0].mxu0 %v2643
        %v2818 = vpop.f32.mrb[0].mxu0
        %v2819 = vadd.f32 0.0, %v2818
        %v2820 = vpop.f32.mrb[0].mxu0
        %2821 = vdwg.mxu0
        %v2822 = vld [vmem:[%s5] sm:$0x1]
        %v2824 = vlaneseq
        %v2825 = vshrl.u32 %v2824, 7
        %v2826 = vsub.s32 0, %v2825
        %v2827 = vrot.slane %v2822, %v2826
        %v2829 = vmul.f32 %v2744, %v2827
        %v2830 = vmul.f32 %v2749, %v2827
        %v2831 = vmul.f32 %v2754, %v2827
        %v2832 = vmul.f32 %v2759, %v2827
        %v2833 = vmul.f32 %v2764, %v2827
        %v2834 = vmul.f32 %v2769, %v2827
        %v2835 = vmul.f32 %v2774, %v2827
        %v2836 = vmul.f32 %v2779, %v2827
        %v2837 = vmul.f32 %v2784, %v2827
        %v2838 = vmul.f32 %v2789, %v2827
        %v2839 = vmul.f32 %v2794, %v2827
        %v2840 = vmul.f32 %v2799, %v2827
        %v2841 = vmul.f32 %v2804, %v2827
        %v2842 = vmul.f32 %v2809, %v2827
        %v2843 = vmul.f32 %v2814, %v2827
        %v2844 = vmul.f32 %v2819, %v2827
        %v2845 = vld [vmem:[%s6] sm:$0x1]
        %v2847 = vlaneseq
        %v2848 = vshrl.u32 %v2847, 7
        %v2849 = vsub.s32 0, %v2848
        %v2850 = vrot.slane %v2845, %v2849
        %v2852 = vadd.f32 %v2829, %v2850
        %v2853 = vadd.f32 %v2830, %v2850
        %v2854 = vadd.f32 %v2831, %v2850
        %v2855 = vadd.f32 %v2832, %v2850
        %v2856 = vadd.f32 %v2833, %v2850
        %v2857 = vadd.f32 %v2834, %v2850
        %v2858 = vadd.f32 %v2835, %v2850
        %v2859 = vadd.f32 %v2836, %v2850
        %v2860 = vadd.f32 %v2837, %v2850
        %v2861 = vadd.f32 %v2838, %v2850
        %v2862 = vadd.f32 %v2839, %v2850
        %v2863 = vadd.f32 %v2840, %v2850
        %v2864 = vadd.f32 %v2841, %v2850
        %v2865 = vadd.f32 %v2842, %v2850
        %v2866 = vadd.f32 %v2843, %v2850
        %v2867 = vadd.f32 %v2844, %v2850
        %vm2868 = vcmp.gt.f32.partialorder %v2852, 0.0
        %vm2869 = vcmp.gt.f32.partialorder %v2853, 0.0
        %vm2870 = vcmp.gt.f32.partialorder %v2854, 0.0
        %vm2871 = vcmp.gt.f32.partialorder %v2855, 0.0
        %vm2872 = vcmp.gt.f32.partialorder %v2856, 0.0
        %vm2873 = vcmp.gt.f32.partialorder %v2857, 0.0
        %vm2874 = vcmp.gt.f32.partialorder %v2858, 0.0
        %vm2875 = vcmp.gt.f32.partialorder %v2859, 0.0
        %vm2876 = vcmp.gt.f32.partialorder %v2860, 0.0
        %vm2877 = vcmp.gt.f32.partialorder %v2861, 0.0
        %vm2878 = vcmp.gt.f32.partialorder %v2862, 0.0
        %vm2879 = vcmp.gt.f32.partialorder %v2863, 0.0
        %vm2880 = vcmp.gt.f32.partialorder %v2864, 0.0
        %vm2881 = vcmp.gt.f32.partialorder %v2865, 0.0
        %vm2882 = vcmp.gt.f32.partialorder %v2866, 0.0
        %vm2883 = vcmp.gt.f32.partialorder %v2867, 0.0
        %v2884 = vmul.f32 %v2852, 1.442695
        %v2885 = vpow.pop %v2884
        %v2886 = vmul.f32 %v2853, 1.442695
        %v2887 = vpow.pop %v2886
        %v2888 = vmul.f32 %v2854, 1.442695
        %v2889 = vpow.pop %v2888
        %v2890 = vmul.f32 %v2855, 1.442695
        %v2891 = vpow.pop %v2890
        %v2892 = vmul.f32 %v2856, 1.442695
        %v2893 = vpow.pop %v2892
        %v2894 = vmul.f32 %v2857, 1.442695
        %v2895 = vpow.pop %v2894
        %v2896 = vmul.f32 %v2858, 1.442695
        %v2897 = vpow.pop %v2896
        %v2898 = vmul.f32 %v2859, 1.442695
        %v2899 = vpow.pop %v2898
        %v2900 = vmul.f32 %v2860, 1.442695
        %v2901 = vpow.pop %v2900
        %v2902 = vmul.f32 %v2861, 1.442695
        %v2903 = vpow.pop %v2902
        %v2904 = vmul.f32 %v2862, 1.442695
        %v2905 = vpow.pop %v2904
        %v2906 = vmul.f32 %v2863, 1.442695
        %v2907 = vpow.pop %v2906
        %v2908 = vmul.f32 %v2864, 1.442695
        %v2909 = vpow.pop %v2908
        %v2910 = vmul.f32 %v2865, 1.442695
        %v2911 = vpow.pop %v2910
        %v2912 = vmul.f32 %v2866, 1.442695
        %v2913 = vpow.pop %v2912
        %v2914 = vmul.f32 %v2867, 1.442695
        %v2915 = vpow.pop %v2914
        %v2916 = vsub.f32 %v2885, 1.0
        %v2917 = vsub.f32 %v2887, 1.0
        %v2918 = vsub.f32 %v2889, 1.0
        %v2919 = vsub.f32 %v2891, 1.0
        %v2920 = vsub.f32 %v2893, 1.0
        %v2921 = vsub.f32 %v2895, 1.0
        %v2922 = vsub.f32 %v2897, 1.0
        %v2923 = vsub.f32 %v2899, 1.0
        %v2924 = vsub.f32 %v2901, 1.0
        %v2925 = vsub.f32 %v2903, 1.0
        %v2926 = vsub.f32 %v2905, 1.0
        %v2927 = vsub.f32 %v2907, 1.0
        %v2928 = vsub.f32 %v2909, 1.0
        %v2929 = vsub.f32 %v2911, 1.0
        %v2930 = vsub.f32 %v2913, 1.0
        %v2931 = vsub.f32 %v2915, 1.0
        %v2932 = vsel %vm2868, %v2852, %v2916
        %v2933 = vsel %vm2869, %v2853, %v2917
        %v2934 = vsel %vm2870, %v2854, %v2918
        %v2935 = vsel %vm2871, %v2855, %v2919
        %v2936 = vsel %vm2872, %v2856, %v2920
        %v2937 = vsel %vm2873, %v2857, %v2921
        %v2938 = vsel %vm2874, %v2858, %v2922
        %v2939 = vsel %vm2875, %v2859, %v2923
        %v2940 = vsel %vm2876, %v2860, %v2924
        %v2941 = vsel %vm2877, %v2861, %v2925
        %v2942 = vsel %vm2878, %v2862, %v2926
        %v2943 = vsel %vm2879, %v2863, %v2927
        %v2944 = vsel %vm2880, %v2864, %v2928
        %v2945 = vsel %vm2881, %v2865, %v2929
        %v2946 = vsel %vm2882, %v2866, %v2930
        %v2947 = vsel %vm2883, %v2867, %v2931
        %vm2948 = vcmask 523264
        %v2949 = vsel %vm2948, %v2932, -inf
        %v2950 = vsel %vm2948, %v2933, -inf
        %v2951 = vmax.f32 %v2949, %v2950
        %v2952 = vsel %vm2948, %v2934, -inf
        %v2953 = vsel %vm2948, %v2935, -inf
        %v2954 = vmax.f32 %v2952, %v2953
        %v2955 = vsel %vm2948, %v2936, -inf
        %v2956 = vsel %vm2948, %v2937, -inf
        %v2957 = vmax.f32 %v2955, %v2956
        %v2958 = vsel %vm2948, %v2938, -inf
        %v2959 = vsel %vm2948, %v2939, -inf
        %v2960 = vmax.f32 %v2958, %v2959
        %v2961 = vsel %vm2948, %v2940, -inf
        %v2962 = vsel %vm2948, %v2941, -inf
        %v2963 = vmax.f32 %v2961, %v2962
        %v2964 = vsel %vm2948, %v2942, -inf
        %v2965 = vsel %vm2948, %v2943, -inf
        %v2966 = vmax.f32 %v2964, %v2965
        %v2967 = vsel %vm2948, %v2944, -inf
        %v2968 = vsel %vm2948, %v2945, -inf
        %v2969 = vmax.f32 %v2967, %v2968
        %v2970 = vsel %vm2948, %v2946, -inf
        %v2971 = vsel %vm2948, %v2947, -inf
        %v2972 = vmax.f32 %v2970, %v2971
        %v2973 = vld [vmem:[%s7] sm:$0xff]
        %v2974 = vld [vmem:[%s7 + $0x8] sm:$0xff]
        %v2975 = vld [vmem:[%s7 + $0x10] sm:$0xff]
        %v2976 = vld [vmem:[%s7 + $0x18] sm:$0xff]
        %v2977 = vld [vmem:[%s7 + $0x20] sm:$0xff]
        %v2978 = vld [vmem:[%s7 + $0x28] sm:$0xff]
        %v2979 = vld [vmem:[%s7 + $0x30] sm:$0xff]
        %v2980 = vld [vmem:[%s7 + $0x38] sm:$0xff]
        %v2981 = vld [vmem:[%s7 + $0x40] sm:$0xff]
        %v2982 = vld [vmem:[%s7 + $0x48] sm:$0xff]
        %v2983 = vld [vmem:[%s7 + $0x50] sm:$0xff]
        %v2984 = vld [vmem:[%s7 + $0x58] sm:$0xff]
        %v2985 = vld [vmem:[%s7 + $0x60] sm:$0xff]
        %v2986 = vld [vmem:[%s7 + $0x68] sm:$0xff]
        %v2987 = vld [vmem:[%s7 + $0x70] sm:$0xff]
        %v2988 = vld [vmem:[%s7 + $0x78] sm:$0xff]
        %v2989 = vld [vmem:[%s7 + $0x80] sm:$0xff]
        %v2990 = vld [vmem:[%s7 + $0x88] sm:$0xff]
        %v2991 = vld [vmem:[%s7 + $0x90] sm:$0xff]
        %v2992 = vld [vmem:[%s7 + $0x98] sm:$0xff]
        %v2993 = vld [vmem:[%s7 + $0xa0] sm:$0xff]
        %v2994 = vld [vmem:[%s7 + $0xa8] sm:$0xff]
        %v2995 = vld [vmem:[%s7 + $0xb0] sm:$0xff]
        %v2996 = vld [vmem:[%s7 + $0xb8] sm:$0xff]
        %v2997 = vld [vmem:[%s7 + $0xc0] sm:$0xff]
        %v2998 = vld [vmem:[%s7 + $0xc8] sm:$0xff]
        %v2999 = vld [vmem:[%s7 + $0xd0] sm:$0xff]
        %v3000 = vld [vmem:[%s7 + $0xd8] sm:$0xff]
        %v3001 = vld [vmem:[%s7 + $0xe0] sm:$0xff]
        %v3002 = vld [vmem:[%s7 + $0xe8] sm:$0xff]
        %v3003 = vld [vmem:[%s7 + $0xf0] sm:$0xff]
        %v3004 = vld [vmem:[%s7 + $0xf8] sm:$0xff]
        %v3005 = vld [vmem:[%s7 + $0x100] sm:$0xff]
        %v3006 = vld [vmem:[%s7 + $0x108] sm:$0xff]
        %v3007 = vld [vmem:[%s7 + $0x110] sm:$0xff]
        %v3008 = vld [vmem:[%s7 + $0x118] sm:$0xff]
        %v3009 = vld [vmem:[%s7 + $0x120] sm:$0xff]
        %v3010 = vld [vmem:[%s7 + $0x128] sm:$0xff]
        %v3011 = vld [vmem:[%s7 + $0x130] sm:$0xff]
        %v3012 = vld [vmem:[%s7 + $0x138] sm:$0xff]
        %v3013 = vld [vmem:[%s7 + $0x140] sm:$0xff]
        %v3014 = vld [vmem:[%s7 + $0x148] sm:$0xff]
        %v3015 = vld [vmem:[%s7 + $0x150] sm:$0xff]
        %v3016 = vld [vmem:[%s7 + $0x158] sm:$0xff]
        %v3017 = vld [vmem:[%s7 + $0x160] sm:$0xff]
        %v3018 = vld [vmem:[%s7 + $0x168] sm:$0xff]
        %v3019 = vld [vmem:[%s7 + $0x170] sm:$0xff]
        %v3020 = vld [vmem:[%s7 + $0x178] sm:$0xff]
        %v3021 = vld [vmem:[%s7 + $0x180] sm:$0xff]
        %v3022 = vld [vmem:[%s7 + $0x188] sm:$0xff]
        %v3023 = vld [vmem:[%s7 + $0x190] sm:$0xff]
        %v3024 = vld [vmem:[%s7 + $0x198] sm:$0xff]
        %v3025 = vld [vmem:[%s7 + $0x1a0] sm:$0xff]
        %v3026 = vld [vmem:[%s7 + $0x1a8] sm:$0xff]
        %v3027 = vld [vmem:[%s7 + $0x1b0] sm:$0xff]
        %v3028 = vld [vmem:[%s7 + $0x1b8] sm:$0xff]
        %v3029 = vld [vmem:[%s7 + $0x1c0] sm:$0xff]
        %v3030 = vld [vmem:[%s7 + $0x1c8] sm:$0xff]
        %v3031 = vld [vmem:[%s7 + $0x1d0] sm:$0xff]
        %v3032 = vld [vmem:[%s7 + $0x1d8] sm:$0xff]
        %v3033 = vld [vmem:[%s7 + $0x1e0] sm:$0xff]
        %v3034 = vld [vmem:[%s7 + $0x1e8] sm:$0xff]
        %v3035 = vld [vmem:[%s7 + $0x1f0] sm:$0xff]
        %v3036 = vld [vmem:[%s7 + $0x1f8] sm:$0xff]
        %v3038 = vsel %vm2948, %v2951, 0
        %3040 = vmatprep.subr.mxu0 0.0
        %3041 = vmatpush1.msra.mxu0 %v2973
        %3042 = vmatprep.subr.mxu0 0.0
        %3043 = vmatpush1.msra.mxu0 %v2974
        %3044 = vmatprep.subr.mxu0 0.0
        %3045 = vmatpush1.msra.mxu0 %v2975
        %3046 = vmatprep.subr.mxu0 0.0
        %3047 = vmatpush1.msra.mxu0 %v2976
        %3048 = vmatprep.subr.mxu0 0.0
        %3049 = vmatpush1.msra.mxu0 %v2977
        %3050 = vmatprep.subr.mxu0 0.0
        %3051 = vmatpush1.msra.mxu0 %v2978
        %3052 = vmatprep.subr.mxu0 0.0
        %3053 = vmatpush1.msra.mxu0 %v2979
        %3054 = vmatprep.subr.mxu0 0.0
        %3055 = vmatpush1.msra.mxu0 %v2980
        %3056 = vmatprep.subr.mxu0 0.0
        %3057 = vmatpush1.msra.mxu0 0.0
        %3058 = vmatprep.subr.mxu0 0.0
        %3059 = vmatpush1.msra.mxu0 0.0
        %3060 = vmatprep.subr.mxu0 0.0
        %3061 = vmatpush1.msra.mxu0 0.0
        %3062 = vmatprep.subr.mxu0 0.0
        %3063 = vmatpush1.msra.mxu0 0.0
        %3064 = vmatprep.subr.mxu0 0.0
        %3065 = vmatpush1.msra.mxu0 0.0
        %3066 = vmatprep.subr.mxu0 0.0
        %3067 = vmatpush1.msra.mxu0 0.0
        %3068 = vmatprep.subr.mxu0 0.0
        %3069 = vmatpush1.msra.mxu0 0.0
        %3070 = vmatprep.subr.mxu0 0.0
        %3071 = vmatpush1.msra.mxu0 0.0
        %3072 = vmatprep.subr.mxu0 0.0
        %3073 = vmatpush1.msra.mxu0 0.0
        %3074 = vmatprep.subr.mxu0 0.0
        %3075 = vmatpush1.msra.mxu0 0.0
        %3076 = vmatprep.subr.mxu0 0.0
        %3077 = vmatpush1.msra.mxu0 0.0
        %3078 = vmatprep.subr.mxu0 0.0
        %3079 = vmatpush1.msra.mxu0 0.0
        %3080 = vmatprep.subr.mxu0 0.0
        %3081 = vmatpush1.msra.mxu0 0.0
        %3082 = vmatprep.subr.mxu0 0.0
        %3083 = vmatpush1.msra.mxu0 0.0
        %3084 = vmatprep.subr.mxu0 0.0
        %3085 = vmatpush1.msra.mxu0 0.0
        %3086 = vmatprep.subr.mxu0 0.0
        %3087 = vmatpush1.msra.mxu0 0.0
        %3088 = vmatprep.subr.mxu0 0.0
        %3089 = vmatpush1.msra.mxu0 0.0
        %3090 = vmatprep.subr.mxu0 0.0
        %3091 = vmatpush1.msra.mxu0 0.0
        %3092 = vmatprep.subr.mxu0 0.0
        %3093 = vmatpush1.msra.mxu0 0.0
        %3094 = vmatprep.subr.mxu0 0.0
        %3095 = vmatpush1.msra.mxu0 0.0
        %3096 = vmatprep.subr.mxu0 0.0
        %3097 = vmatpush1.msra.mxu0 0.0
        %3098 = vmatprep.subr.mxu0 0.0
        %3099 = vmatpush1.msra.mxu0 0.0
        %3100 = vmatprep.subr.mxu0 0.0
        %3101 = vmatpush1.msra.mxu0 0.0
        %3102 = vmatprep.subr.mxu0 0.0
        %3103 = vmatpush1.msra.mxu0 0.0
        %3104 = vmatprep.mubr.f32.mxu0 0.0
        %3105 = vmatmul.mubr.f32.gmra.mrb[0].mxu0 %v3038
        %v3106 = vpop.f32.mrb[0].mxu0
        %v3107 = vadd.f32 0.0, %v3106
        %v3108 = vpop.f32.mrb[0].mxu0
        %3109 = vdwg.mxu0
        %v3111 = vsel %vm2948, %v2954, 0
        %3113 = vmatprep.subr.mxu0 0.0
        %3114 = vmatpush1.msra.mxu0 %v2981
        %3115 = vmatprep.subr.mxu0 0.0
        %3116 = vmatpush1.msra.mxu0 %v2982
        %3117 = vmatprep.subr.mxu0 0.0
        %3118 = vmatpush1.msra.mxu0 %v2983
        %3119 = vmatprep.subr.mxu0 0.0
        %3120 = vmatpush1.msra.mxu0 %v2984
        %3121 = vmatprep.subr.mxu0 0.0
        %3122 = vmatpush1.msra.mxu0 %v2985
        %3123 = vmatprep.subr.mxu0 0.0
        %3124 = vmatpush1.msra.mxu0 %v2986
        %3125 = vmatprep.subr.mxu0 0.0
        %3126 = vmatpush1.msra.mxu0 %v2987
        %3127 = vmatprep.subr.mxu0 0.0
        %3128 = vmatpush1.msra.mxu0 %v2988
        %3129 = vmatprep.subr.mxu0 0.0
        %3130 = vmatpush1.msra.mxu0 0.0
        %3131 = vmatprep.subr.mxu0 0.0
        %3132 = vmatpush1.msra.mxu0 0.0
        %3133 = vmatprep.subr.mxu0 0.0
        %3134 = vmatpush1.msra.mxu0 0.0
        %3135 = vmatprep.subr.mxu0 0.0
        %3136 = vmatpush1.msra.mxu0 0.0
        %3137 = vmatprep.subr.mxu0 0.0
        %3138 = vmatpush1.msra.mxu0 0.0
        %3139 = vmatprep.subr.mxu0 0.0
        %3140 = vmatpush1.msra.mxu0 0.0
        %3141 = vmatprep.subr.mxu0 0.0
        %3142 = vmatpush1.msra.mxu0 0.0
        %3143 = vmatprep.subr.mxu0 0.0
        %3144 = vmatpush1.msra.mxu0 0.0
        %3145 = vmatprep.subr.mxu0 0.0
        %3146 = vmatpush1.msra.mxu0 0.0
        %3147 = vmatprep.subr.mxu0 0.0
        %3148 = vmatpush1.msra.mxu0 0.0
        %3149 = vmatprep.subr.mxu0 0.0
        %3150 = vmatpush1.msra.mxu0 0.0
        %3151 = vmatprep.subr.mxu0 0.0
        %3152 = vmatpush1.msra.mxu0 0.0
        %3153 = vmatprep.subr.mxu0 0.0
        %3154 = vmatpush1.msra.mxu0 0.0
        %3155 = vmatprep.subr.mxu0 0.0
        %3156 = vmatpush1.msra.mxu0 0.0
        %3157 = vmatprep.subr.mxu0 0.0
        %3158 = vmatpush1.msra.mxu0 0.0
        %3159 = vmatprep.subr.mxu0 0.0
        %3160 = vmatpush1.msra.mxu0 0.0
        %3161 = vmatprep.subr.mxu0 0.0
        %3162 = vmatpush1.msra.mxu0 0.0
        %3163 = vmatprep.subr.mxu0 0.0
        %3164 = vmatpush1.msra.mxu0 0.0
        %3165 = vmatprep.subr.mxu0 0.0
        %3166 = vmatpush1.msra.mxu0 0.0
        %3167 = vmatprep.subr.mxu0 0.0
        %3168 = vmatpush1.msra.mxu0 0.0
        %3169 = vmatprep.subr.mxu0 0.0
        %3170 = vmatpush1.msra.mxu0 0.0
        %3171 = vmatprep.subr.mxu0 0.0
        %3172 = vmatpush1.msra.mxu0 0.0
        %3173 = vmatprep.subr.mxu0 0.0
        %3174 = vmatpush1.msra.mxu0 0.0
        %3175 = vmatprep.subr.mxu0 0.0
        %3176 = vmatpush1.msra.mxu0 0.0
        %3177 = vmatprep.mubr.f32.mxu0 0.0
        %3178 = vmatmul.mubr.f32.gmra.mrb[0].mxu0 %v3111
        %v3179 = vpop.f32.mrb[0].mxu0
        %v3180 = vadd.f32 0.0, %v3179
        %v3181 = vpop.f32.mrb[0].mxu0
        %3182 = vdwg.mxu0
        %v3184 = vsel %vm2948, %v2957, 0
        %3186 = vmatprep.subr.mxu0 0.0
        %3187 = vmatpush1.msra.mxu0 %v2989
        %3188 = vmatprep.subr.mxu0 0.0
        %3189 = vmatpush1.msra.mxu0 %v2990
        %3190 = vmatprep.subr.mxu0 0.0
        %3191 = vmatpush1.msra.mxu0 %v2991
        %3192 = vmatprep.subr.mxu0 0.0
        %3193 = vmatpush1.msra.mxu0 %v2992
        %3194 = vmatprep.subr.mxu0 0.0
        %3195 = vmatpush1.msra.mxu0 %v2993
        %3196 = vmatprep.subr.mxu0 0.0
        %3197 = vmatpush1.msra.mxu0 %v2994
        %3198 = vmatprep.subr.mxu0 0.0
        %3199 = vmatpush1.msra.mxu0 %v2995
        %3200 = vmatprep.subr.mxu0 0.0
        %3201 = vmatpush1.msra.mxu0 %v2996
        %3202 = vmatprep.subr.mxu0 0.0
        %3203 = vmatpush1.msra.mxu0 0.0
        %3204 = vmatprep.subr.mxu0 0.0
        %3205 = vmatpush1.msra.mxu0 0.0
        %3206 = vmatprep.subr.mxu0 0.0
        %3207 = vmatpush1.msra.mxu0 0.0
        %3208 = vmatprep.subr.mxu0 0.0
        %3209 = vmatpush1.msra.mxu0 0.0
        %3210 = vmatprep.subr.mxu0 0.0
        %3211 = vmatpush1.msra.mxu0 0.0
        %3212 = vmatprep.subr.mxu0 0.0
        %3213 = vmatpush1.msra.mxu0 0.0
        %3214 = vmatprep.subr.mxu0 0.0
        %3215 = vmatpush1.msra.mxu0 0.0
        %3216 = vmatprep.subr.mxu0 0.0
        %3217 = vmatpush1.msra.mxu0 0.0
        %3218 = vmatprep.subr.mxu0 0.0
        %3219 = vmatpush1.msra.mxu0 0.0
        %3220 = vmatprep.subr.mxu0 0.0
        %3221 = vmatpush1.msra.mxu0 0.0
        %3222 = vmatprep.subr.mxu0 0.0
        %3223 = vmatpush1.msra.mxu0 0.0
        %3224 = vmatprep.subr.mxu0 0.0
        %3225 = vmatpush1.msra.mxu0 0.0
        %3226 = vmatprep.subr.mxu0 0.0
        %3227 = vmatpush1.msra.mxu0 0.0
        %3228 = vmatprep.subr.mxu0 0.0
        %3229 = vmatpush1.msra.mxu0 0.0
        %3230 = vmatprep.subr.mxu0 0.0
        %3231 = vmatpush1.msra.mxu0 0.0
        %3232 = vmatprep.subr.mxu0 0.0
        %3233 = vmatpush1.msra.mxu0 0.0
        %3234 = vmatprep.subr.mxu0 0.0
        %3235 = vmatpush1.msra.mxu0 0.0
        %3236 = vmatprep.subr.mxu0 0.0
        %3237 = vmatpush1.msra.mxu0 0.0
        %3238 = vmatprep.subr.mxu0 0.0
        %3239 = vmatpush1.msra.mxu0 0.0
        %3240 = vmatprep.subr.mxu0 0.0
        %3241 = vmatpush1.msra.mxu0 0.0
        %3242 = vmatprep.subr.mxu0 0.0
        %3243 = vmatpush1.msra.mxu0 0.0
        %3244 = vmatprep.subr.mxu0 0.0
        %3245 = vmatpush1.msra.mxu0 0.0
        %3246 = vmatprep.subr.mxu0 0.0
        %3247 = vmatpush1.msra.mxu0 0.0
        %3248 = vmatprep.subr.mxu0 0.0
        %3249 = vmatpush1.msra.mxu0 0.0
        %3250 = vmatprep.mubr.f32.mxu0 0.0
        %3251 = vmatmul.mubr.f32.gmra.mrb[0].mxu0 %v3184
        %v3252 = vpop.f32.mrb[0].mxu0
        %v3253 = vadd.f32 0.0, %v3252
        %v3254 = vpop.f32.mrb[0].mxu0
        %3255 = vdwg.mxu0
        %v3257 = vsel %vm2948, %v2960, 0
        %3259 = vmatprep.subr.mxu0 0.0
        %3260 = vmatpush1.msra.mxu0 %v2997
        %3261 = vmatprep.subr.mxu0 0.0
        %3262 = vmatpush1.msra.mxu0 %v2998
        %3263 = vmatprep.subr.mxu0 0.0
        %3264 = vmatpush1.msra.mxu0 %v2999
        %3265 = vmatprep.subr.mxu0 0.0
        %3266 = vmatpush1.msra.mxu0 %v3000
        %3267 = vmatprep.subr.mxu0 0.0
        %3268 = vmatpush1.msra.mxu0 %v3001
        %3269 = vmatprep.subr.mxu0 0.0
        %3270 = vmatpush1.msra.mxu0 %v3002
        %3271 = vmatprep.subr.mxu0 0.0
        %3272 = vmatpush1.msra.mxu0 %v3003
        %3273 = vmatprep.subr.mxu0 0.0
        %3274 = vmatpush1.msra.mxu0 %v3004
        %3275 = vmatprep.subr.mxu0 0.0
        %3276 = vmatpush1.msra.mxu0 0.0
        %3277 = vmatprep.subr.mxu0 0.0
        %3278 = vmatpush1.msra.mxu0 0.0
        %3279 = vmatprep.subr.mxu0 0.0
        %3280 = vmatpush1.msra.mxu0 0.0
        %3281 = vmatprep.subr.mxu0 0.0
        %3282 = vmatpush1.msra.mxu0 0.0
        %3283 = vmatprep.subr.mxu0 0.0
        %3284 = vmatpush1.msra.mxu0 0.0
        %3285 = vmatprep.subr.mxu0 0.0
        %3286 = vmatpush1.msra.mxu0 0.0
        %3287 = vmatprep.subr.mxu0 0.0
        %3288 = vmatpush1.msra.mxu0 0.0
        %3289 = vmatprep.subr.mxu0 0.0
        %3290 = vmatpush1.msra.mxu0 0.0
        %3291 = vmatprep.subr.mxu0 0.0
        %3292 = vmatpush1.msra.mxu0 0.0
        %3293 = vmatprep.subr.mxu0 0.0
        %3294 = vmatpush1.msra.mxu0 0.0
        %3295 = vmatprep.subr.mxu0 0.0
        %3296 = vmatpush1.msra.mxu0 0.0
        %3297 = vmatprep.subr.mxu0 0.0
        %3298 = vmatpush1.msra.mxu0 0.0
        %3299 = vmatprep.subr.mxu0 0.0
        %3300 = vmatpush1.msra.mxu0 0.0
        %3301 = vmatprep.subr.mxu0 0.0
        %3302 = vmatpush1.msra.mxu0 0.0
        %3303 = vmatprep.subr.mxu0 0.0
        %3304 = vmatpush1.msra.mxu0 0.0
        %3305 = vmatprep.subr.mxu0 0.0
        %3306 = vmatpush1.msra.mxu0 0.0
        %3307 = vmatprep.subr.mxu0 0.0
        %3308 = vmatpush1.msra.mxu0 0.0
        %3309 = vmatprep.subr.mxu0 0.0
        %3310 = vmatpush1.msra.mxu0 0.0
        %3311 = vmatprep.subr.mxu0 0.0
        %3312 = vmatpush1.msra.mxu0 0.0
        %3313 = vmatprep.subr.mxu0 0.0
        %3314 = vmatpush1.msra.mxu0 0.0
        %3315 = vmatprep.subr.mxu0 0.0
        %3316 = vmatpush1.msra.mxu0 0.0
        %3317 = vmatprep.subr.mxu0 0.0
        %3318 = vmatpush1.msra.mxu0 0.0
        %3319 = vmatprep.subr.mxu0 0.0
        %3320 = vmatpush1.msra.mxu0 0.0
        %3321 = vmatprep.subr.mxu0 0.0
        %3322 = vmatpush1.msra.mxu0 0.0
        %3323 = vmatprep.mubr.f32.mxu0 0.0
        %3324 = vmatmul.mubr.f32.gmra.mrb[0].mxu0 %v3257
        %v3325 = vpop.f32.mrb[0].mxu0
        %v3326 = vadd.f32 0.0, %v3325
        %v3327 = vpop.f32.mrb[0].mxu0
        %3328 = vdwg.mxu0
        %v3330 = vsel %vm2948, %v2963, 0
        %3332 = vmatprep.subr.mxu0 0.0
        %3333 = vmatpush1.msra.mxu0 %v3005
        %3334 = vmatprep.subr.mxu0 0.0
        %3335 = vmatpush1.msra.mxu0 %v3006
        %3336 = vmatprep.subr.mxu0 0.0
        %3337 = vmatpush1.msra.mxu0 %v3007
        %3338 = vmatprep.subr.mxu0 0.0
        %3339 = vmatpush1.msra.mxu0 %v3008
        %3340 = vmatprep.subr.mxu0 0.0
        %3341 = vmatpush1.msra.mxu0 %v3009
        %3342 = vmatprep.subr.mxu0 0.0
        %3343 = vmatpush1.msra.mxu0 %v3010
        %3344 = vmatprep.subr.mxu0 0.0
        %3345 = vmatpush1.msra.mxu0 %v3011
        %3346 = vmatprep.subr.mxu0 0.0
        %3347 = vmatpush1.msra.mxu0 %v3012
        %3348 = vmatprep.subr.mxu0 0.0
        %3349 = vmatpush1.msra.mxu0 0.0
        %3350 = vmatprep.subr.mxu0 0.0
        %3351 = vmatpush1.msra.mxu0 0.0
        %3352 = vmatprep.subr.mxu0 0.0
        %3353 = vmatpush1.msra.mxu0 0.0
        %3354 = vmatprep.subr.mxu0 0.0
        %3355 = vmatpush1.msra.mxu0 0.0
        %3356 = vmatprep.subr.mxu0 0.0
        %3357 = vmatpush1.msra.mxu0 0.0
        %3358 = vmatprep.subr.mxu0 0.0
        %3359 = vmatpush1.msra.mxu0 0.0
        %3360 = vmatprep.subr.mxu0 0.0
        %3361 = vmatpush1.msra.mxu0 0.0
        %3362 = vmatprep.subr.mxu0 0.0
        %3363 = vmatpush1.msra.mxu0 0.0
        %3364 = vmatprep.subr.mxu0 0.0
        %3365 = vmatpush1.msra.mxu0 0.0
        %3366 = vmatprep.subr.mxu0 0.0
        %3367 = vmatpush1.msra.mxu0 0.0
        %3368 = vmatprep.subr.mxu0 0.0
        %3369 = vmatpush1.msra.mxu0 0.0
        %3370 = vmatprep.subr.mxu0 0.0
        %3371 = vmatpush1.msra.mxu0 0.0
        %3372 = vmatprep.subr.mxu0 0.0
        %3373 = vmatpush1.msra.mxu0 0.0
        %3374 = vmatprep.subr.mxu0 0.0
        %3375 = vmatpush1.msra.mxu0 0.0
        %3376 = vmatprep.subr.mxu0 0.0
        %3377 = vmatpush1.msra.mxu0 0.0
        %3378 = vmatprep.subr.mxu0 0.0
        %3379 = vmatpush1.msra.mxu0 0.0
        %3380 = vmatprep.subr.mxu0 0.0
        %3381 = vmatpush1.msra.mxu0 0.0
        %3382 = vmatprep.subr.mxu0 0.0
        %3383 = vmatpush1.msra.mxu0 0.0
        %3384 = vmatprep.subr.mxu0 0.0
        %3385 = vmatpush1.msra.mxu0 0.0
        %3386 = vmatprep.subr.mxu0 0.0
        %3387 = vmatpush1.msra.mxu0 0.0
        %3388 = vmatprep.subr.mxu0 0.0
        %3389 = vmatpush1.msra.mxu0 0.0
        %3390 = vmatprep.subr.mxu0 0.0
        %3391 = vmatpush1.msra.mxu0 0.0
        %3392 = vmatprep.subr.mxu0 0.0
        %3393 = vmatpush1.msra.mxu0 0.0
        %3394 = vmatprep.subr.mxu0 0.0
        %3395 = vmatpush1.msra.mxu0 0.0
        %3396 = vmatprep.mubr.f32.mxu0 0.0
        %3397 = vmatmul.mubr.f32.gmra.mrb[0].mxu0 %v3330
        %v3398 = vpop.f32.mrb[0].mxu0
        %v3399 = vadd.f32 0.0, %v3398
        %v3400 = vpop.f32.mrb[0].mxu0
        %3401 = vdwg.mxu0
        %v3403 = vsel %vm2948, %v2966, 0
        %3405 = vmatprep.subr.mxu0 0.0
        %3406 = vmatpush1.msra.mxu0 %v3013
        %3407 = vmatprep.subr.mxu0 0.0
        %3408 = vmatpush1.msra.mxu0 %v3014
        %3409 = vmatprep.subr.mxu0 0.0
        %3410 = vmatpush1.msra.mxu0 %v3015
        %3411 = vmatprep.subr.mxu0 0.0
        %3412 = vmatpush1.msra.mxu0 %v3016
        %3413 = vmatprep.subr.mxu0 0.0
        %3414 = vmatpush1.msra.mxu0 %v3017
        %3415 = vmatprep.subr.mxu0 0.0
        %3416 = vmatpush1.msra.mxu0 %v3018
        %3417 = vmatprep.subr.mxu0 0.0
        %3418 = vmatpush1.msra.mxu0 %v3019
        %3419 = vmatprep.subr.mxu0 0.0
        %3420 = vmatpush1.msra.mxu0 %v3020
        %3421 = vmatprep.subr.mxu0 0.0
        %3422 = vmatpush1.msra.mxu0 0.0
        %3423 = vmatprep.subr.mxu0 0.0
        %3424 = vmatpush1.msra.mxu0 0.0
        %3425 = vmatprep.subr.mxu0 0.0
        %3426 = vmatpush1.msra.mxu0 0.0
        %3427 = vmatprep.subr.mxu0 0.0
        %3428 = vmatpush1.msra.mxu0 0.0
        %3429 = vmatprep.subr.mxu0 0.0
        %3430 = vmatpush1.msra.mxu0 0.0
        %3431 = vmatprep.subr.mxu0 0.0
        %3432 = vmatpush1.msra.mxu0 0.0
        %3433 = vmatprep.subr.mxu0 0.0
        %3434 = vmatpush1.msra.mxu0 0.0
        %3435 = vmatprep.subr.mxu0 0.0
        %3436 = vmatpush1.msra.mxu0 0.0
        %3437 = vmatprep.subr.mxu0 0.0
        %3438 = vmatpush1.msra.mxu0 0.0
        %3439 = vmatprep.subr.mxu0 0.0
        %3440 = vmatpush1.msra.mxu0 0.0
        %3441 = vmatprep.subr.mxu0 0.0
        %3442 = vmatpush1.msra.mxu0 0.0
        %3443 = vmatprep.subr.mxu0 0.0
        %3444 = vmatpush1.msra.mxu0 0.0
        %3445 = vmatprep.subr.mxu0 0.0
        %3446 = vmatpush1.msra.mxu0 0.0
        %3447 = vmatprep.subr.mxu0 0.0
        %3448 = vmatpush1.msra.mxu0 0.0
        %3449 = vmatprep.subr.mxu0 0.0
        %3450 = vmatpush1.msra.mxu0 0.0
        %3451 = vmatprep.subr.mxu0 0.0
        %3452 = vmatpush1.msra.mxu0 0.0
        %3453 = vmatprep.subr.mxu0 0.0
        %3454 = vmatpush1.msra.mxu0 0.0
        %3455 = vmatprep.subr.mxu0 0.0
        %3456 = vmatpush1.msra.mxu0 0.0
        %3457 = vmatprep.subr.mxu0 0.0
        %3458 = vmatpush1.msra.mxu0 0.0
        %3459 = vmatprep.subr.mxu0 0.0
        %3460 = vmatpush1.msra.mxu0 0.0
        %3461 = vmatprep.subr.mxu0 0.0
        %3462 = vmatpush1.msra.mxu0 0.0
        %3463 = vmatprep.subr.mxu0 0.0
        %3464 = vmatpush1.msra.mxu0 0.0
        %3465 = vmatprep.subr.mxu0 0.0
        %3466 = vmatpush1.msra.mxu0 0.0
        %3467 = vmatprep.subr.mxu0 0.0
        %3468 = vmatpush1.msra.mxu0 0.0
        %3469 = vmatprep.mubr.f32.mxu0 0.0
        %3470 = vmatmul.mubr.f32.gmra.mrb[0].mxu0 %v3403
        %v3471 = vpop.f32.mrb[0].mxu0
        %v3472 = vadd.f32 0.0, %v3471
        %v3473 = vpop.f32.mrb[0].mxu0
        %3474 = vdwg.mxu0
        %v3476 = vsel %vm2948, %v2969, 0
        %3478 = vmatprep.subr.mxu0 0.0
        %3479 = vmatpush1.msra.mxu0 %v3021
        %3480 = vmatprep.subr.mxu0 0.0
        %3481 = vmatpush1.msra.mxu0 %v3022
        %3482 = vmatprep.subr.mxu0 0.0
        %3483 = vmatpush1.msra.mxu0 %v3023
        %3484 = vmatprep.subr.mxu0 0.0
        %3485 = vmatpush1.msra.mxu0 %v3024
        %3486 = vmatprep.subr.mxu0 0.0
        %3487 = vmatpush1.msra.mxu0 %v3025
        %3488 = vmatprep.subr.mxu0 0.0
        %3489 = vmatpush1.msra.mxu0 %v3026
        %3490 = vmatprep.subr.mxu0 0.0
        %3491 = vmatpush1.msra.mxu0 %v3027
        %3492 = vmatprep.subr.mxu0 0.0
        %3493 = vmatpush1.msra.mxu0 %v3028
        %3494 = vmatprep.subr.mxu0 0.0
        %3495 = vmatpush1.msra.mxu0 0.0
        %3496 = vmatprep.subr.mxu0 0.0
        %3497 = vmatpush1.msra.mxu0 0.0
        %3498 = vmatprep.subr.mxu0 0.0
        %3499 = vmatpush1.msra.mxu0 0.0
        %3500 = vmatprep.subr.mxu0 0.0
        %3501 = vmatpush1.msra.mxu0 0.0
        %3502 = vmatprep.subr.mxu0 0.0
        %3503 = vmatpush1.msra.mxu0 0.0
        %3504 = vmatprep.subr.mxu0 0.0
        %3505 = vmatpush1.msra.mxu0 0.0
        %3506 = vmatprep.subr.mxu0 0.0
        %3507 = vmatpush1.msra.mxu0 0.0
        %3508 = vmatprep.subr.mxu0 0.0
        %3509 = vmatpush1.msra.mxu0 0.0
        %3510 = vmatprep.subr.mxu0 0.0
        %3511 = vmatpush1.msra.mxu0 0.0
        %3512 = vmatprep.subr.mxu0 0.0
        %3513 = vmatpush1.msra.mxu0 0.0
        %3514 = vmatprep.subr.mxu0 0.0
        %3515 = vmatpush1.msra.mxu0 0.0
        %3516 = vmatprep.subr.mxu0 0.0
        %3517 = vmatpush1.msra.mxu0 0.0
        %3518 = vmatprep.subr.mxu0 0.0
        %3519 = vmatpush1.msra.mxu0 0.0
        %3520 = vmatprep.subr.mxu0 0.0
        %3521 = vmatpush1.msra.mxu0 0.0
        %3522 = vmatprep.subr.mxu0 0.0
        %3523 = vmatpush1.msra.mxu0 0.0
        %3524 = vmatprep.subr.mxu0 0.0
        %3525 = vmatpush1.msra.mxu0 0.0
        %3526 = vmatprep.subr.mxu0 0.0
        %3527 = vmatpush1.msra.mxu0 0.0
        %3528 = vmatprep.subr.mxu0 0.0
        %3529 = vmatpush1.msra.mxu0 0.0
        %3530 = vmatprep.subr.mxu0 0.0
        %3531 = vmatpush1.msra.mxu0 0.0
        %3532 = vmatprep.subr.mxu0 0.0
        %3533 = vmatpush1.msra.mxu0 0.0
        %3534 = vmatprep.subr.mxu0 0.0
        %3535 = vmatpush1.msra.mxu0 0.0
        %3536 = vmatprep.subr.mxu0 0.0
        %3537 = vmatpush1.msra.mxu0 0.0
        %3538 = vmatprep.subr.mxu0 0.0
        %3539 = vmatpush1.msra.mxu0 0.0
        %3540 = vmatprep.subr.mxu0 0.0
        %3541 = vmatpush1.msra.mxu0 0.0
        %3542 = vmatprep.mubr.f32.mxu0 0.0
        %3543 = vmatmul.mubr.f32.gmra.mrb[0].mxu0 %v3476
        %v3544 = vpop.f32.mrb[0].mxu0
        %v3545 = vadd.f32 0.0, %v3544
        %v3546 = vpop.f32.mrb[0].mxu0
        %3547 = vdwg.mxu0
        %v3549 = vsel %vm2948, %v2972, 0
        %3551 = vmatprep.subr.mxu0 0.0
        %3552 = vmatpush1.msra.mxu0 %v3029
        %3553 = vmatprep.subr.mxu0 0.0
        %3554 = vmatpush1.msra.mxu0 %v3030
        %3555 = vmatprep.subr.mxu0 0.0
        %3556 = vmatpush1.msra.mxu0 %v3031
        %3557 = vmatprep.subr.mxu0 0.0
        %3558 = vmatpush1.msra.mxu0 %v3032
        %3559 = vmatprep.subr.mxu0 0.0
        %3560 = vmatpush1.msra.mxu0 %v3033
        %3561 = vmatprep.subr.mxu0 0.0
        %3562 = vmatpush1.msra.mxu0 %v3034
        %3563 = vmatprep.subr.mxu0 0.0
        %3564 = vmatpush1.msra.mxu0 %v3035
        %3565 = vmatprep.subr.mxu0 0.0
        %3566 = vmatpush1.msra.mxu0 %v3036
        %3567 = vmatprep.subr.mxu0 0.0
        %3568 = vmatpush1.msra.mxu0 0.0
        %3569 = vmatprep.subr.mxu0 0.0
        %3570 = vmatpush1.msra.mxu0 0.0
        %3571 = vmatprep.subr.mxu0 0.0
        %3572 = vmatpush1.msra.mxu0 0.0
        %3573 = vmatprep.subr.mxu0 0.0
        %3574 = vmatpush1.msra.mxu0 0.0
        %3575 = vmatprep.subr.mxu0 0.0
        %3576 = vmatpush1.msra.mxu0 0.0
        %3577 = vmatprep.subr.mxu0 0.0
        %3578 = vmatpush1.msra.mxu0 0.0
        %3579 = vmatprep.subr.mxu0 0.0
        %3580 = vmatpush1.msra.mxu0 0.0
        %3581 = vmatprep.subr.mxu0 0.0
        %3582 = vmatpush1.msra.mxu0 0.0
        %3583 = vmatprep.subr.mxu0 0.0
        %3584 = vmatpush1.msra.mxu0 0.0
        %3585 = vmatprep.subr.mxu0 0.0
        %3586 = vmatpush1.msra.mxu0 0.0
        %3587 = vmatprep.subr.mxu0 0.0
        %3588 = vmatpush1.msra.mxu0 0.0
        %3589 = vmatprep.subr.mxu0 0.0
        %3590 = vmatpush1.msra.mxu0 0.0
        %3591 = vmatprep.subr.mxu0 0.0
        %3592 = vmatpush1.msra.mxu0 0.0
        %3593 = vmatprep.subr.mxu0 0.0
        %3594 = vmatpush1.msra.mxu0 0.0
        %3595 = vmatprep.subr.mxu0 0.0
        %3596 = vmatpush1.msra.mxu0 0.0
        %3597 = vmatprep.subr.mxu0 0.0
        %3598 = vmatpush1.msra.mxu0 0.0
        %3599 = vmatprep.subr.mxu0 0.0
        %3600 = vmatpush1.msra.mxu0 0.0
        %3601 = vmatprep.subr.mxu0 0.0
        %3602 = vmatpush1.msra.mxu0 0.0
        %3603 = vmatprep.subr.mxu0 0.0
        %3604 = vmatpush1.msra.mxu0 0.0
        %3605 = vmatprep.subr.mxu0 0.0
        %3606 = vmatpush1.msra.mxu0 0.0
        %3607 = vmatprep.subr.mxu0 0.0
        %3608 = vmatpush1.msra.mxu0 0.0
        %3609 = vmatprep.subr.mxu0 0.0
        %3610 = vmatpush1.msra.mxu0 0.0
        %3611 = vmatprep.subr.mxu0 0.0
        %3612 = vmatpush1.msra.mxu0 0.0
        %3613 = vmatprep.subr.mxu0 0.0
        %3614 = vmatpush1.msra.mxu0 0.0
        %3615 = vmatprep.mubr.f32.mxu0 0.0
        %3616 = vmatmul.mubr.f32.gmra.mrb[0].mxu0 %v3549
        %v3617 = vpop.f32.mrb[0].mxu0
        %v3618 = vadd.f32 0.0, %v3617
        %v3619 = vpop.f32.mrb[0].mxu0
        %3620 = vdwg.mxu0
        %vm3621 = vcmask 31744
        %v3622 = vsel %vm3621, %v3107, 0.0
        %v3623 = vsel %vm3621, %v3180, 0.0
        %v3624 = vadd.f32 %v3622, %v3623
        %v3625 = vsel %vm3621, %v3253, 0.0
        %v3626 = vadd.f32 %v3624, %v3625
        %v3627 = vsel %vm3621, %v3326, 0.0
        %v3628 = vadd.f32 %v3626, %v3627
        %v3629 = vsel %vm3621, %v3399, 0.0
        %v3630 = vadd.f32 %v3628, %v3629
        %v3631 = vsel %vm3621, %v3472, 0.0
        %v3632 = vadd.f32 %v3630, %v3631
        %v3633 = vsel %vm3621, %v3545, 0.0
        %v3634 = vadd.f32 %v3632, %v3633
        %v3635 = vsel %vm3621, %v3618, 0.0
        %v3636 = vadd.f32 %v3634, %v3635
        %v3637 = vld [vmem:[%s8] sm:$0x1]
        %v3639 = vlaneseq
        %v3640 = vshrl.u32 %v3639, 7
        %v3641 = vsub.s32 0, %v3640
        %v3642 = vrot.slane %v3637, %v3641
        %v3644 = vadd.f32 %v3636, %v3642
        %v3645 = vsel %vm3621, %v3644, -inf
        %3646 = vmax.xlane.f32.xlu0 %v3645
        %v3647 = vpop.xlane.xlu0 %3646
        %v3648 = vsub.f32 %v3644, %v3647
        %v3649 = vmul.f32 %v3648, 1.442695
        %v3650 = vpow.pop %v3649
        %v3651 = vsel %vm3621, %v3650, 0.0
        %3652 = vadd.xlane.f32.xlu0 %v3651
        %v3653 = vpop.xlane.xlu0 %3652
        %v3654 = vlog2.pop %v3653
        %v3655 = vmul.f32 %v3654, 0.6931472
        %v3656 = vsub.f32 %v3648, %v3655
        %3657 = vst.msk [vmem:[%s504] sm:$0xff] %vm3621, %v3656
        %p3658 = scmp.lt.s32.totalorder %s20, 1
        %s3659 = scalar_select %p3658, %s20, 1
        %s3660 = smul.addr %s3659, 8
        %s3661 = scalar_lea.vmem %s9, %s3660
        // Predicated region
        $region95: #{tpu_custom_call.1} parent=89 // pred_check
          %p3662 = pneg %p232
        $region96: #{tpu_custom_call.1} parent=89 // pred_check_branch
          %3664 = sbr.rel (%p3662) target = $region98
        $region97: #{tpu_custom_call.1} parent=89 // pred_region
          _
        $region98: #{tpu_custom_call.1} parent=89 // pred_fallthru
          _
      $region90: #{tpu_custom_call.1} parent=5 // pred_fallthru
        _
      %p3665 = scmp.le.s32.totalorder 2, %s15
      // Predicated region
      $region99: #{tpu_custom_call.1} parent=5 // pred_check
        %p3666 = pneg %p3665
      $region100: #{tpu_custom_call.1} parent=5 // pred_check_branch
        %3668 = sbr.rel (%p3666) target = $region102
      $region101: #{tpu_custom_call.1} parent=5 // pred_region
        %s3669 = ssub.s32 %s15, 2
        // Predicated region
        $region103: #{tpu_custom_call.1} parent=101 // pred_check
          %p3670 = pneg %p238
        $region104: #{tpu_custom_call.1} parent=101 // pred_check_branch
          %3672 = sbr.rel (%p3670) target = $region106
        $region105: #{tpu_custom_call.1} parent=101 // pred_region
          %p3673 = scmp.lt.s32.totalorder %s21, 1
          %s3674 = scalar_select %p3673, %s21, 1
          %s3675 = smul.addr %s3674, 8
          %s3676 = scalar_lea.vmem %s9, %s3675
        $region106: #{tpu_custom_call.1} parent=101 // pred_fallthru
          _
      $region102: #{tpu_custom_call.1} parent=5 // pred_fallthru
        _
    $region6: #{tpu_custom_call.1} parent=1 // loop_footer
      %s19 = sadd.s32 1, %s15
    $region7: #{tpu_custom_call.1} parent=1 // loop_footer_branch
      %14 = sbr.rel target = $region3
    $region8: #{tpu_custom_call.1} parent=1 // loop_exit
      _

</llo_original>
